<compile_context>
chip_gen: v7x
topology: tpu7x:2x2x1
jax: 0.10.0
libtpu: 0.0.40
codegen_flags: <defaults>
</compile_context>

<pallas_src>
import functools

import jax
import jax.numpy as jnp
from jax.experimental import pallas as pl
from jax.experimental.pallas import tpu as pltpu

GRID_SIZE = 5
SPLINE_ORDER = 3
GRID_RANGE = (-1.0, 1.0)
N_BASES = GRID_SIZE + SPLINE_ORDER            # 8 spline bases per input feature
N_FEATS = 1 + N_BASES                         # + the silu "base" branch
N_KNOTS = GRID_SIZE + 2 * SPLINE_ORDER + 1    # 12 uniform knots
LANE = 128
SUBLANE = 8


def _round_up(v, m):
    return (v + m - 1) // m * m


def _grid_knots():
    """Uniform knot vector, identical for every input feature (efficient-kan init)."""
    h = (GRID_RANGE[1] - GRID_RANGE[0]) / GRID_SIZE
    return tuple(float(GRID_RANGE[0] + (i - SPLINE_ORDER) * h) for i in range(N_KNOTS))


def _feature_dtype():
    """bf16 feature construction on bf16-native VPUs (v6e / v7x); f32 elsewhere (v5e)."""
    try:
        kind = jax.devices()[0].device_kind.lower()
    except Exception:
        return jnp.float32
    if any(tag in kind for tag in ("v6", "v7", "7x", "trillium", "ironwood")):
        return jnp.bfloat16
    return jnp.float32


def _kan_features(x, dtype):
    """(TB, In) -> (TB, N_FEATS*In) : [silu(x) | 6*B_0(x) | ... | 6*B_7(x)].

    Uniform-knot Cox-de Boor:
        u_j = (x - t_j) / h                     (knot constants folded at trace time)
        B_{j,0} = step(u_j) - step(u_{j+1})     (half-open interval [t_j, t_{j+1}))
        B_{j,k} "=" u_j * B_{j,k-1} - u_{j+k+1} * B_{j+1,k-1}
    The 1/k factors (an overall 1/6 for cubic splines) are deferred and folded
    into the spline block of the packed weights at init.
    """
    knots = _grid_knots()
    inv_h = GRID_SIZE / (GRID_RANGE[1] - GRID_RANGE[0])
    x = x.astype(dtype)
    xs = x * inv_h                                               # 1 mul
    u = [xs - (knots[j] * inv_h) for j in range(N_KNOTS)]        # 12 subs (const folds)
    s = [(uj >= 0).astype(dtype) for uj in u]                    # 12 cmp + cast
    bases = [s[j] - s[j + 1] for j in range(N_KNOTS - 1)]        # 11 order-0 bases
    for k in range(1, SPLINE_ORDER + 1):                         # 3 ops / step on VPU
        bases = [u[j] * bases[j] - u[j + k + 1] * bases[j + 1]
                 for j in range(len(bases) - 1)]
    sx = jax.nn.silu(x)                                          # EUP sigmoid + 1 mul
    # Every segment width is a multiple of 128 (weight packing pads In), so each
    # concat boundary is lane-aligned -> plain vreg moves, no XLU relayout.
    return jnp.concatenate([sx] + bases, axis=-1)


def _fused_kq_kernel(x_ref, *rest, n_layers, feat_dtype):
    """All KANLinear sub-layers chained in VMEM; one MXU dot per layer.

    x_ref : (TB, In0_pad) f32 activation tile
    rest  : n_layers packed bf16 weight refs of shape (N_FEATS*In_pad, Out_pad),
            followed by the (TB, Out_pad) f32 output ref.
    """
    w_refs = rest[:n_layers]
    o_ref = rest[n_layers]
    x = x_ref[...]
    for w_ref in w_refs:
        feats = _kan_features(x, feat_dtype)                    # VPU (bf16 on v6e/v7x)
        x = jnp.dot(feats.astype(jnp.bfloat16), w_ref[...],    # bf16 MXU, f32 acc
                    preferred_element_type=jnp.float32)
    o_ref[...] = x                                              # lane-dense (Out_pad%128==0)


def kq_network_forward(net, state, *, batch_tile=None):
    """KQNetwork.forward(state): one fused Pallas kernel over all KANLinear layers."""
    weights = net["weights"]
    out_dim = net["out_dim"]
    feat_dtype = _feature_dtype()

    x = state.astype(jnp.float32)
    B, in0 = x.shape
    n_layers = len(weights)
    in0_pad = weights[0].shape[0] // N_FEATS
    out_pad = weights[-1].shape[1]

    # Lane-align the input features to the padded width baked into the packed weights.
    if in0_pad != in0:
        x = jnp.pad(x, ((0, 0), (0, in0_pad - in0)))

    # Batch tile: guarantee >= 2 grid steps whenever B allows so the "parallel"
    # axis can shard across v7x's two TensorCores; up to 256 rows on v6e/v7x.
    if batch_tile is None:
        batch_tile = 256 if (feat_dtype == jnp.bfloat16 and B >= 512) else 128
    tb = min(batch_tile, _round_up(pl.cdiv(B, 2), SUBLANE))
    bp = _round_up(B, tb)
    if bp != B:
        x = jnp.pad(x, ((0, bp - B), (0, 0)))

    # VMEM budget from the actual footprint (portable down to v7x's 64 MiB VMEM):
    # weights (x2 in case the single-buffer request falls back to double buffering),
    # double-buffered activation in/out tiles, and the worst-case live set of
    # feature-construction temporaries.
    feat_bytes = jnp.dtype(feat_dtype).itemsize
    max_fin_pad = max(w.shape[0] // N_FEATS for w in weights)
    max_fout_pad = max(w.shape[1] for w in weights)
    weight_bytes = sum(w.size * w.dtype.itemsize for w in weights)
    io_bytes = 2 * tb * (in0_pad + out_pad) * 4
    temp_bytes = 48 * tb * max_fin_pad * feat_bytes + tb * max_fout_pad * 4
    vmem_limit = int(1.25 * (2 * weight_bytes + io_bytes + temp_bytes)) + (8 << 20)
    vmem_limit = min(max(vmem_limit, 16 << 20), 56 << 20)

    kernel = functools.partial(_fused_kq_kernel, n_layers=n_layers,
                               feat_dtype=feat_dtype)

    def build(single_buffer_weights):
        in_specs = [pl.BlockSpec((tb, in0_pad), lambda i: (i, 0))]
        for w in weights:
            kw = ({"pipeline_mode": pl.Buffered(1)}   # constant block -> 1 buffer
                  if single_buffer_weights else {})
            in_specs.append(pl.BlockSpec(w.shape, lambda i: (0, 0), **kw))
        return pl.pallas_call(
            kernel,
            out_shape=jax.ShapeDtypeStruct((bp, out_pad), jnp.float32),
            grid=(bp // tb,),
            in_specs=in_specs,
            out_specs=pl.BlockSpec((tb, out_pad), lambda i: (i, 0)),
            compiler_params=pltpu.CompilerParams(
                dimension_semantics=("parallel",),    # batch tiles -> v7x 2-TC split
                vmem_limit_bytes=vmem_limit,
            ),
        )

    try:
        # Weights never change across grid steps (index_map is constant); request
        # a single VMEM buffer each to halve their resident footprint.
        out = build(single_buffer_weights=True)(x, *weights)
    except Exception:
        # Fallback for JAX versions that reject pipeline_mode=pl.Buffered(1).
        out = build(single_buffer_weights=False)(x, *weights)

    return out[:B, :out_dim]


def init_kq_network_params(key, input_dims, n_actions, hidden_layers=None):
    """Deterministic init mirroring KQNetwork.__init__.

    Weights are pre-packed for the fused kernel as bf16 (N_FEATS*fin_pad, fout_pad)
    matrices (x @ W layout) with both dims padded to multiples of 128 (zero
    rows/cols), and the deferred 1/6 Cox-de Boor normalization folded into the
    spline blocks.
    """
    hidden_layers = hidden_layers or [256, 256]
    layer_dims = [input_dims] + list(hidden_layers) + [n_actions]
    sublayer_dims = []
    # NOTE: mirrors the reference loop exactly.  With the default hidden_layers
    # [256, 256] this loop never emits a final 256 -> n_actions sublayer
    # (apparent quirk of the original module); with an odd number of hidden
    # layers (as in the test below) the output width is n_actions as expected.
    for i in range(0, len(layer_dims) - 2, 2):
        a, b, c = layer_dims[i], layer_dims[i + 1], layer_dims[i + 2]
        # KANLayer([a, b, c]) == KANLinear(a->b) followed by KANLinear(b->c)
        sublayer_dims += [(a, b), (b, c)]

    weights = []
    for (fin, fout) in sublayer_dims:
        key, kb, ks = jax.random.split(key, 3)
        wb = jax.random.normal(kb, (fin, fout), jnp.float32) / jnp.sqrt(fin)
        ws = (0.1 / jnp.sqrt(fin)) * jax.random.normal(
            ks, (N_BASES, fin, fout), jnp.float32)
        fin_pad = _round_up(fin, LANE)
        fout_pad = _round_up(fout, LANE)
        packed = jnp.zeros((N_FEATS, fin_pad, fout_pad), jnp.float32)
        packed = packed.at[0, :fin, :fout].set(wb)
        # Kernel emits UNNORMALIZED cubic bases (6x too large); fold 1/6 here.
        packed = packed.at[1:, :fin, :fout].set(ws * (1.0 / 6.0))
        weights.append(
            packed.reshape(N_FEATS * fin_pad, fout_pad).astype(jnp.bfloat16))

    return {
        "weights": weights,
        "in_dim": input_dims,
        "out_dim": sublayer_dims[-1][1],
    }


if __name__ == "__main__":
    key = jax.random.PRNGKey(0)
    kparam, kx = jax.random.split(key)

    # Small config: input_dims=16, hidden_layers=[32], n_actions=4
    # -> layer_dims [16, 32, 4] -> one KANLayer([16, 32, 4])
    # -> two KANLinear sublayers (16->32, 32->4); output is (batch, n_actions).
    input_dims, n_actions, hidden_layers, batch = 16, 4, [32], 8

    net = init_kq_network_params(kparam, input_dims, n_actions, hidden_layers)
    state = jax.random.normal(kx, (batch, input_dims), jnp.float32)

    out = kq_network_forward(net, state)
    jax.block_until_ready(out)
    assert out.shape == (batch, n_actions), out.shape
    assert out.dtype == jnp.float32
    assert bool(jnp.all(jnp.isfinite(out)))
    print("KERNEL_OK")
</pallas_src>

<mosaic_0001>
module attributes {stable_mosaic.version = 11 : i64} {
  func.func @_fused_kq_kernel(%arg0: i32, %arg1: memref<8x128xf32, #tpu.memory_space<vmem>>, %arg2: memref<1152x128xbf16, #tpu.memory_space<vmem>>, %arg3: memref<1152x128xbf16, #tpu.memory_space<vmem>>, %arg4: memref<8x128xf32, #tpu.memory_space<vmem>>) attributes {dimension_semantics = [#tpu.dimension_semantics<parallel>], iteration_bounds = array<i64: 1>, scalar_prefetch = 0 : i64, scratch_operands = 0 : i64, tpu.core_type = #tpu.core_type<tc>, window_params = [{transform_indices = @transform_0, window_bounds = array<i64: 8, 128>}, {pipeline_mode = #tpu.pipeline_mode<synchronous>, transform_indices = @transform_1, window_bounds = array<i64: 1152, 128>}, {pipeline_mode = #tpu.pipeline_mode<synchronous>, transform_indices = @transform_2, window_bounds = array<i64: 1152, 128>}, {transform_indices = @transform_3, window_bounds = array<i64: 8, 128>}]} {
    %c0 = arith.constant 0 : index
    %c0_0 = arith.constant 0 : index
    %0 = vector.load %arg1[%c0, %c0_0] : memref<8x128xf32, #tpu.memory_space<vmem>>, vector<8x128xf32>
    %cst = arith.constant 2.500000e+00 : f32
    %1 = vector.broadcast %cst : f32 to vector<8x128xf32>
    %2 = arith.mulf %0, %1 : vector<8x128xf32>
    %cst_1 = arith.constant -5.500000e+00 : f32
    %3 = vector.broadcast %cst_1 : f32 to vector<8x128xf32>
    %4 = arith.subf %2, %3 : vector<8x128xf32>
    %cst_2 = arith.constant -4.500000e+00 : f32
    %5 = vector.broadcast %cst_2 : f32 to vector<8x128xf32>
    %6 = arith.subf %2, %5 : vector<8x128xf32>
    %cst_3 = arith.constant -3.500000e+00 : f32
    %7 = vector.broadcast %cst_3 : f32 to vector<8x128xf32>
    %8 = arith.subf %2, %7 : vector<8x128xf32>
    %cst_4 = arith.constant -2.500000e+00 : f32
    %9 = vector.broadcast %cst_4 : f32 to vector<8x128xf32>
    %10 = arith.subf %2, %9 : vector<8x128xf32>
    %cst_5 = arith.constant -1.500000e+00 : f32
    %11 = vector.broadcast %cst_5 : f32 to vector<8x128xf32>
    %12 = arith.subf %2, %11 : vector<8x128xf32>
    %cst_6 = arith.constant -5.000000e-01 : f32
    %13 = vector.broadcast %cst_6 : f32 to vector<8x128xf32>
    %14 = arith.subf %2, %13 : vector<8x128xf32>
    %cst_7 = arith.constant 5.000000e-01 : f32
    %15 = vector.broadcast %cst_7 : f32 to vector<8x128xf32>
    %16 = arith.subf %2, %15 : vector<8x128xf32>
    %cst_8 = arith.constant 1.500000e+00 : f32
    %17 = vector.broadcast %cst_8 : f32 to vector<8x128xf32>
    %18 = arith.subf %2, %17 : vector<8x128xf32>
    %cst_9 = arith.constant 2.500000e+00 : f32
    %19 = vector.broadcast %cst_9 : f32 to vector<8x128xf32>
    %20 = arith.subf %2, %19 : vector<8x128xf32>
    %cst_10 = arith.constant 3.500000e+00 : f32
    %21 = vector.broadcast %cst_10 : f32 to vector<8x128xf32>
    %22 = arith.subf %2, %21 : vector<8x128xf32>
    %cst_11 = arith.constant 4.500000e+00 : f32
    %23 = vector.broadcast %cst_11 : f32 to vector<8x128xf32>
    %24 = arith.subf %2, %23 : vector<8x128xf32>
    %cst_12 = arith.constant 5.500000e+00 : f32
    %25 = vector.broadcast %cst_12 : f32 to vector<8x128xf32>
    %26 = arith.subf %2, %25 : vector<8x128xf32>
    %cst_13 = arith.constant 0.000000e+00 : f32
    %27 = vector.broadcast %cst_13 : f32 to vector<8x128xf32>
    %28 = arith.cmpf oge, %4, %27 : vector<8x128xf32>
    %29 = arith.extui %28 : vector<8x128xi1> to vector<8x128xi32>
    %30 = arith.sitofp %29 : vector<8x128xi32> to vector<8x128xf32>
    %cst_14 = arith.constant 0.000000e+00 : f32
    %31 = vector.broadcast %cst_14 : f32 to vector<8x128xf32>
    %32 = arith.cmpf oge, %6, %31 : vector<8x128xf32>
    %33 = arith.extui %32 : vector<8x128xi1> to vector<8x128xi32>
    %34 = arith.sitofp %33 : vector<8x128xi32> to vector<8x128xf32>
    %cst_15 = arith.constant 0.000000e+00 : f32
    %35 = vector.broadcast %cst_15 : f32 to vector<8x128xf32>
    %36 = arith.cmpf oge, %8, %35 : vector<8x128xf32>
    %37 = arith.extui %36 : vector<8x128xi1> to vector<8x128xi32>
    %38 = arith.sitofp %37 : vector<8x128xi32> to vector<8x128xf32>
    %cst_16 = arith.constant 0.000000e+00 : f32
    %39 = vector.broadcast %cst_16 : f32 to vector<8x128xf32>
    %40 = arith.cmpf oge, %10, %39 : vector<8x128xf32>
    %41 = arith.extui %40 : vector<8x128xi1> to vector<8x128xi32>
    %42 = arith.sitofp %41 : vector<8x128xi32> to vector<8x128xf32>
    %cst_17 = arith.constant 0.000000e+00 : f32
    %43 = vector.broadcast %cst_17 : f32 to vector<8x128xf32>
    %44 = arith.cmpf oge, %12, %43 : vector<8x128xf32>
    %45 = arith.extui %44 : vector<8x128xi1> to vector<8x128xi32>
    %46 = arith.sitofp %45 : vector<8x128xi32> to vector<8x128xf32>
    %cst_18 = arith.constant 0.000000e+00 : f32
    %47 = vector.broadcast %cst_18 : f32 to vector<8x128xf32>
    %48 = arith.cmpf oge, %14, %47 : vector<8x128xf32>
    %49 = arith.extui %48 : vector<8x128xi1> to vector<8x128xi32>
    %50 = arith.sitofp %49 : vector<8x128xi32> to vector<8x128xf32>
    %cst_19 = arith.constant 0.000000e+00 : f32
    %51 = vector.broadcast %cst_19 : f32 to vector<8x128xf32>
    %52 = arith.cmpf oge, %16, %51 : vector<8x128xf32>
    %53 = arith.extui %52 : vector<8x128xi1> to vector<8x128xi32>
    %54 = arith.sitofp %53 : vector<8x128xi32> to vector<8x128xf32>
    %cst_20 = arith.constant 0.000000e+00 : f32
    %55 = vector.broadcast %cst_20 : f32 to vector<8x128xf32>
    %56 = arith.cmpf oge, %18, %55 : vector<8x128xf32>
    %57 = arith.extui %56 : vector<8x128xi1> to vector<8x128xi32>
    %58 = arith.sitofp %57 : vector<8x128xi32> to vector<8x128xf32>
    %cst_21 = arith.constant 0.000000e+00 : f32
    %59 = vector.broadcast %cst_21 : f32 to vector<8x128xf32>
    %60 = arith.cmpf oge, %20, %59 : vector<8x128xf32>
    %61 = arith.extui %60 : vector<8x128xi1> to vector<8x128xi32>
    %62 = arith.sitofp %61 : vector<8x128xi32> to vector<8x128xf32>
    %cst_22 = arith.constant 0.000000e+00 : f32
    %63 = vector.broadcast %cst_22 : f32 to vector<8x128xf32>
    %64 = arith.cmpf oge, %22, %63 : vector<8x128xf32>
    %65 = arith.extui %64 : vector<8x128xi1> to vector<8x128xi32>
    %66 = arith.sitofp %65 : vector<8x128xi32> to vector<8x128xf32>
    %cst_23 = arith.constant 0.000000e+00 : f32
    %67 = vector.broadcast %cst_23 : f32 to vector<8x128xf32>
    %68 = arith.cmpf oge, %24, %67 : vector<8x128xf32>
    %69 = arith.extui %68 : vector<8x128xi1> to vector<8x128xi32>
    %70 = arith.sitofp %69 : vector<8x128xi32> to vector<8x128xf32>
    %cst_24 = arith.constant 0.000000e+00 : f32
    %71 = vector.broadcast %cst_24 : f32 to vector<8x128xf32>
    %72 = arith.cmpf oge, %26, %71 : vector<8x128xf32>
    %73 = arith.extui %72 : vector<8x128xi1> to vector<8x128xi32>
    %74 = arith.sitofp %73 : vector<8x128xi32> to vector<8x128xf32>
    %75 = arith.subf %30, %34 : vector<8x128xf32>
    %76 = arith.subf %34, %38 : vector<8x128xf32>
    %77 = arith.subf %38, %42 : vector<8x128xf32>
    %78 = arith.subf %42, %46 : vector<8x128xf32>
    %79 = arith.subf %46, %50 : vector<8x128xf32>
    %80 = arith.subf %50, %54 : vector<8x128xf32>
    %81 = arith.subf %54, %58 : vector<8x128xf32>
    %82 = arith.subf %58, %62 : vector<8x128xf32>
    %83 = arith.subf %62, %66 : vector<8x128xf32>
    %84 = arith.subf %66, %70 : vector<8x128xf32>
    %85 = arith.subf %70, %74 : vector<8x128xf32>
    %86 = arith.mulf %4, %75 : vector<8x128xf32>
    %87 = arith.mulf %8, %76 : vector<8x128xf32>
    %88 = arith.subf %86, %87 : vector<8x128xf32>
    %89 = arith.mulf %6, %76 : vector<8x128xf32>
    %90 = arith.mulf %10, %77 : vector<8x128xf32>
    %91 = arith.subf %89, %90 : vector<8x128xf32>
    %92 = arith.mulf %8, %77 : vector<8x128xf32>
    %93 = arith.mulf %12, %78 : vector<8x128xf32>
    %94 = arith.subf %92, %93 : vector<8x128xf32>
    %95 = arith.mulf %10, %78 : vector<8x128xf32>
    %96 = arith.mulf %14, %79 : vector<8x128xf32>
    %97 = arith.subf %95, %96 : vector<8x128xf32>
    %98 = arith.mulf %12, %79 : vector<8x128xf32>
    %99 = arith.mulf %16, %80 : vector<8x128xf32>
    %100 = arith.subf %98, %99 : vector<8x128xf32>
    %101 = arith.mulf %14, %80 : vector<8x128xf32>
    %102 = arith.mulf %18, %81 : vector<8x128xf32>
    %103 = arith.subf %101, %102 : vector<8x128xf32>
    %104 = arith.mulf %16, %81 : vector<8x128xf32>
    %105 = arith.mulf %20, %82 : vector<8x128xf32>
    %106 = arith.subf %104, %105 : vector<8x128xf32>
    %107 = arith.mulf %18, %82 : vector<8x128xf32>
    %108 = arith.mulf %22, %83 : vector<8x128xf32>
    %109 = arith.subf %107, %108 : vector<8x128xf32>
    %110 = arith.mulf %20, %83 : vector<8x128xf32>
    %111 = arith.mulf %24, %84 : vector<8x128xf32>
    %112 = arith.subf %110, %111 : vector<8x128xf32>
    %113 = arith.mulf %22, %84 : vector<8x128xf32>
    %114 = arith.mulf %26, %85 : vector<8x128xf32>
    %115 = arith.subf %113, %114 : vector<8x128xf32>
    %116 = arith.mulf %4, %88 : vector<8x128xf32>
    %117 = arith.mulf %10, %91 : vector<8x128xf32>
    %118 = arith.subf %116, %117 : vector<8x128xf32>
    %119 = arith.mulf %6, %91 : vector<8x128xf32>
    %120 = arith.mulf %12, %94 : vector<8x128xf32>
    %121 = arith.subf %119, %120 : vector<8x128xf32>
    %122 = arith.mulf %8, %94 : vector<8x128xf32>
    %123 = arith.mulf %14, %97 : vector<8x128xf32>
    %124 = arith.subf %122, %123 : vector<8x128xf32>
    %125 = arith.mulf %10, %97 : vector<8x128xf32>
    %126 = arith.mulf %16, %100 : vector<8x128xf32>
    %127 = arith.subf %125, %126 : vector<8x128xf32>
    %128 = arith.mulf %12, %100 : vector<8x128xf32>
    %129 = arith.mulf %18, %103 : vector<8x128xf32>
    %130 = arith.subf %128, %129 : vector<8x128xf32>
    %131 = arith.mulf %14, %103 : vector<8x128xf32>
    %132 = arith.mulf %20, %106 : vector<8x128xf32>
    %133 = arith.subf %131, %132 : vector<8x128xf32>
    %134 = arith.mulf %16, %106 : vector<8x128xf32>
    %135 = arith.mulf %22, %109 : vector<8x128xf32>
    %136 = arith.subf %134, %135 : vector<8x128xf32>
    %137 = arith.mulf %18, %109 : vector<8x128xf32>
    %138 = arith.mulf %24, %112 : vector<8x128xf32>
    %139 = arith.subf %137, %138 : vector<8x128xf32>
    %140 = arith.mulf %20, %112 : vector<8x128xf32>
    %141 = arith.mulf %26, %115 : vector<8x128xf32>
    %142 = arith.subf %140, %141 : vector<8x128xf32>
    %143 = arith.mulf %4, %118 : vector<8x128xf32>
    %144 = arith.mulf %12, %121 : vector<8x128xf32>
    %145 = arith.subf %143, %144 : vector<8x128xf32>
    %146 = arith.mulf %6, %121 : vector<8x128xf32>
    %147 = arith.mulf %14, %124 : vector<8x128xf32>
    %148 = arith.subf %146, %147 : vector<8x128xf32>
    %149 = arith.mulf %8, %124 : vector<8x128xf32>
    %150 = arith.mulf %16, %127 : vector<8x128xf32>
    %151 = arith.subf %149, %150 : vector<8x128xf32>
    %152 = arith.mulf %10, %127 : vector<8x128xf32>
    %153 = arith.mulf %18, %130 : vector<8x128xf32>
    %154 = arith.subf %152, %153 : vector<8x128xf32>
    %155 = arith.mulf %12, %130 : vector<8x128xf32>
    %156 = arith.mulf %20, %133 : vector<8x128xf32>
    %157 = arith.subf %155, %156 : vector<8x128xf32>
    %158 = arith.mulf %14, %133 : vector<8x128xf32>
    %159 = arith.mulf %22, %136 : vector<8x128xf32>
    %160 = arith.subf %158, %159 : vector<8x128xf32>
    %161 = arith.mulf %16, %136 : vector<8x128xf32>
    %162 = arith.mulf %24, %139 : vector<8x128xf32>
    %163 = arith.subf %161, %162 : vector<8x128xf32>
    %164 = arith.mulf %18, %139 : vector<8x128xf32>
    %165 = arith.mulf %26, %142 : vector<8x128xf32>
    %166 = arith.subf %164, %165 : vector<8x128xf32>
    %167 = arith.negf %0 : vector<8x128xf32>
    %168 = math.exp %167 : vector<8x128xf32>
    %cst_25 = arith.constant 1.000000e+00 : f32
    %169 = vector.broadcast %cst_25 : f32 to vector<8x128xf32>
    %170 = arith.addf %169, %168 : vector<8x128xf32>
    %171 = arith.divf %169, %170 : vector<8x128xf32>
    %172 = arith.mulf %0, %171 : vector<8x128xf32>
    %173 = tpu.concatenate %172, %145, %148, %151, %154, %157, %160, %163, %166 in 1 : vector<8x128xf32>, vector<8x128xf32>, vector<8x128xf32>, vector<8x128xf32>, vector<8x128xf32>, vector<8x128xf32>, vector<8x128xf32>, vector<8x128xf32>, vector<8x128xf32> -> vector<8x1152xf32>
    %174 = arith.truncf %173 : vector<8x1152xf32> to vector<8x1152xbf16>
    %c0_26 = arith.constant 0 : index
    %c0_27 = arith.constant 0 : index
    %175 = vector.load %arg2[%c0_26, %c0_27] : memref<1152x128xbf16, #tpu.memory_space<vmem>>, vector<1152x128xbf16>
    %cst_28 = arith.constant dense<0.000000e+00> : vector<8x128xf32>
    %176 = tpu.matmul %174, %175, %cst_28 {dimension_numbers = #tpu.dot_dimension_numbers<[1], [0], [0], [1], [0, 0, 1, 1], [], []>} : vector<8x1152xbf16>, vector<1152x128xbf16>, vector<8x128xf32> -> vector<8x128xf32>
    %cst_29 = arith.constant 2.500000e+00 : f32
    %177 = vector.broadcast %cst_29 : f32 to vector<8x128xf32>
    %178 = arith.mulf %176, %177 : vector<8x128xf32>
    %cst_30 = arith.constant -5.500000e+00 : f32
    %179 = vector.broadcast %cst_30 : f32 to vector<8x128xf32>
    %180 = arith.subf %178, %179 : vector<8x128xf32>
    %cst_31 = arith.constant -4.500000e+00 : f32
    %181 = vector.broadcast %cst_31 : f32 to vector<8x128xf32>
    %182 = arith.subf %178, %181 : vector<8x128xf32>
    %cst_32 = arith.constant -3.500000e+00 : f32
    %183 = vector.broadcast %cst_32 : f32 to vector<8x128xf32>
    %184 = arith.subf %178, %183 : vector<8x128xf32>
    %cst_33 = arith.constant -2.500000e+00 : f32
    %185 = vector.broadcast %cst_33 : f32 to vector<8x128xf32>
    %186 = arith.subf %178, %185 : vector<8x128xf32>
    %cst_34 = arith.constant -1.500000e+00 : f32
    %187 = vector.broadcast %cst_34 : f32 to vector<8x128xf32>
    %188 = arith.subf %178, %187 : vector<8x128xf32>
    %cst_35 = arith.constant -5.000000e-01 : f32
    %189 = vector.broadcast %cst_35 : f32 to vector<8x128xf32>
    %190 = arith.subf %178, %189 : vector<8x128xf32>
    %cst_36 = arith.constant 5.000000e-01 : f32
    %191 = vector.broadcast %cst_36 : f32 to vector<8x128xf32>
    %192 = arith.subf %178, %191 : vector<8x128xf32>
    %cst_37 = arith.constant 1.500000e+00 : f32
    %193 = vector.broadcast %cst_37 : f32 to vector<8x128xf32>
    %194 = arith.subf %178, %193 : vector<8x128xf32>
    %cst_38 = arith.constant 2.500000e+00 : f32
    %195 = vector.broadcast %cst_38 : f32 to vector<8x128xf32>
    %196 = arith.subf %178, %195 : vector<8x128xf32>
    %cst_39 = arith.constant 3.500000e+00 : f32
    %197 = vector.broadcast %cst_39 : f32 to vector<8x128xf32>
    %198 = arith.subf %178, %197 : vector<8x128xf32>
    %cst_40 = arith.constant 4.500000e+00 : f32
    %199 = vector.broadcast %cst_40 : f32 to vector<8x128xf32>
    %200 = arith.subf %178, %199 : vector<8x128xf32>
    %cst_41 = arith.constant 5.500000e+00 : f32
    %201 = vector.broadcast %cst_41 : f32 to vector<8x128xf32>
    %202 = arith.subf %178, %201 : vector<8x128xf32>
    %cst_42 = arith.constant 0.000000e+00 : f32
    %203 = vector.broadcast %cst_42 : f32 to vector<8x128xf32>
    %204 = arith.cmpf oge, %180, %203 : vector<8x128xf32>
    %205 = arith.extui %204 : vector<8x128xi1> to vector<8x128xi32>
    %206 = arith.sitofp %205 : vector<8x128xi32> to vector<8x128xf32>
    %cst_43 = arith.constant 0.000000e+00 : f32
    %207 = vector.broadcast %cst_43 : f32 to vector<8x128xf32>
    %208 = arith.cmpf oge, %182, %207 : vector<8x128xf32>
    %209 = arith.extui %208 : vector<8x128xi1> to vector<8x128xi32>
    %210 = arith.sitofp %209 : vector<8x128xi32> to vector<8x128xf32>
    %cst_44 = arith.constant 0.000000e+00 : f32
    %211 = vector.broadcast %cst_44 : f32 to vector<8x128xf32>
    %212 = arith.cmpf oge, %184, %211 : vector<8x128xf32>
    %213 = arith.extui %212 : vector<8x128xi1> to vector<8x128xi32>
    %214 = arith.sitofp %213 : vector<8x128xi32> to vector<8x128xf32>
    %cst_45 = arith.constant 0.000000e+00 : f32
    %215 = vector.broadcast %cst_45 : f32 to vector<8x128xf32>
    %216 = arith.cmpf oge, %186, %215 : vector<8x128xf32>
    %217 = arith.extui %216 : vector<8x128xi1> to vector<8x128xi32>
    %218 = arith.sitofp %217 : vector<8x128xi32> to vector<8x128xf32>
    %cst_46 = arith.constant 0.000000e+00 : f32
    %219 = vector.broadcast %cst_46 : f32 to vector<8x128xf32>
    %220 = arith.cmpf oge, %188, %219 : vector<8x128xf32>
    %221 = arith.extui %220 : vector<8x128xi1> to vector<8x128xi32>
    %222 = arith.sitofp %221 : vector<8x128xi32> to vector<8x128xf32>
    %cst_47 = arith.constant 0.000000e+00 : f32
    %223 = vector.broadcast %cst_47 : f32 to vector<8x128xf32>
    %224 = arith.cmpf oge, %190, %223 : vector<8x128xf32>
    %225 = arith.extui %224 : vector<8x128xi1> to vector<8x128xi32>
    %226 = arith.sitofp %225 : vector<8x128xi32> to vector<8x128xf32>
    %cst_48 = arith.constant 0.000000e+00 : f32
    %227 = vector.broadcast %cst_48 : f32 to vector<8x128xf32>
    %228 = arith.cmpf oge, %192, %227 : vector<8x128xf32>
    %229 = arith.extui %228 : vector<8x128xi1> to vector<8x128xi32>
    %230 = arith.sitofp %229 : vector<8x128xi32> to vector<8x128xf32>
    %cst_49 = arith.constant 0.000000e+00 : f32
    %231 = vector.broadcast %cst_49 : f32 to vector<8x128xf32>
    %232 = arith.cmpf oge, %194, %231 : vector<8x128xf32>
    %233 = arith.extui %232 : vector<8x128xi1> to vector<8x128xi32>
    %234 = arith.sitofp %233 : vector<8x128xi32> to vector<8x128xf32>
    %cst_50 = arith.constant 0.000000e+00 : f32
    %235 = vector.broadcast %cst_50 : f32 to vector<8x128xf32>
    %236 = arith.cmpf oge, %196, %235 : vector<8x128xf32>
    %237 = arith.extui %236 : vector<8x128xi1> to vector<8x128xi32>
    %238 = arith.sitofp %237 : vector<8x128xi32> to vector<8x128xf32>
    %cst_51 = arith.constant 0.000000e+00 : f32
    %239 = vector.broadcast %cst_51 : f32 to vector<8x128xf32>
    %240 = arith.cmpf oge, %198, %239 : vector<8x128xf32>
    %241 = arith.extui %240 : vector<8x128xi1> to vector<8x128xi32>
    %242 = arith.sitofp %241 : vector<8x128xi32> to vector<8x128xf32>
    %cst_52 = arith.constant 0.000000e+00 : f32
    %243 = vector.broadcast %cst_52 : f32 to vector<8x128xf32>
    %244 = arith.cmpf oge, %200, %243 : vector<8x128xf32>
    %245 = arith.extui %244 : vector<8x128xi1> to vector<8x128xi32>
    %246 = arith.sitofp %245 : vector<8x128xi32> to vector<8x128xf32>
    %cst_53 = arith.constant 0.000000e+00 : f32
    %247 = vector.broadcast %cst_53 : f32 to vector<8x128xf32>
    %248 = arith.cmpf oge, %202, %247 : vector<8x128xf32>
    %249 = arith.extui %248 : vector<8x128xi1> to vector<8x128xi32>
    %250 = arith.sitofp %249 : vector<8x128xi32> to vector<8x128xf32>
    %251 = arith.subf %206, %210 : vector<8x128xf32>
    %252 = arith.subf %210, %214 : vector<8x128xf32>
    %253 = arith.subf %214, %218 : vector<8x128xf32>
    %254 = arith.subf %218, %222 : vector<8x128xf32>
    %255 = arith.subf %222, %226 : vector<8x128xf32>
    %256 = arith.subf %226, %230 : vector<8x128xf32>
    %257 = arith.subf %230, %234 : vector<8x128xf32>
    %258 = arith.subf %234, %238 : vector<8x128xf32>
    %259 = arith.subf %238, %242 : vector<8x128xf32>
    %260 = arith.subf %242, %246 : vector<8x128xf32>
    %261 = arith.subf %246, %250 : vector<8x128xf32>
    %262 = arith.mulf %180, %251 : vector<8x128xf32>
    %263 = arith.mulf %184, %252 : vector<8x128xf32>
    %264 = arith.subf %262, %263 : vector<8x128xf32>
    %265 = arith.mulf %182, %252 : vector<8x128xf32>
    %266 = arith.mulf %186, %253 : vector<8x128xf32>
    %267 = arith.subf %265, %266 : vector<8x128xf32>
    %268 = arith.mulf %184, %253 : vector<8x128xf32>
    %269 = arith.mulf %188, %254 : vector<8x128xf32>
    %270 = arith.subf %268, %269 : vector<8x128xf32>
    %271 = arith.mulf %186, %254 : vector<8x128xf32>
    %272 = arith.mulf %190, %255 : vector<8x128xf32>
    %273 = arith.subf %271, %272 : vector<8x128xf32>
    %274 = arith.mulf %188, %255 : vector<8x128xf32>
    %275 = arith.mulf %192, %256 : vector<8x128xf32>
    %276 = arith.subf %274, %275 : vector<8x128xf32>
    %277 = arith.mulf %190, %256 : vector<8x128xf32>
    %278 = arith.mulf %194, %257 : vector<8x128xf32>
    %279 = arith.subf %277, %278 : vector<8x128xf32>
    %280 = arith.mulf %192, %257 : vector<8x128xf32>
    %281 = arith.mulf %196, %258 : vector<8x128xf32>
    %282 = arith.subf %280, %281 : vector<8x128xf32>
    %283 = arith.mulf %194, %258 : vector<8x128xf32>
    %284 = arith.mulf %198, %259 : vector<8x128xf32>
    %285 = arith.subf %283, %284 : vector<8x128xf32>
    %286 = arith.mulf %196, %259 : vector<8x128xf32>
    %287 = arith.mulf %200, %260 : vector<8x128xf32>
    %288 = arith.subf %286, %287 : vector<8x128xf32>
    %289 = arith.mulf %198, %260 : vector<8x128xf32>
    %290 = arith.mulf %202, %261 : vector<8x128xf32>
    %291 = arith.subf %289, %290 : vector<8x128xf32>
    %292 = arith.mulf %180, %264 : vector<8x128xf32>
    %293 = arith.mulf %186, %267 : vector<8x128xf32>
    %294 = arith.subf %292, %293 : vector<8x128xf32>
    %295 = arith.mulf %182, %267 : vector<8x128xf32>
    %296 = arith.mulf %188, %270 : vector<8x128xf32>
    %297 = arith.subf %295, %296 : vector<8x128xf32>
    %298 = arith.mulf %184, %270 : vector<8x128xf32>
    %299 = arith.mulf %190, %273 : vector<8x128xf32>
    %300 = arith.subf %298, %299 : vector<8x128xf32>
    %301 = arith.mulf %186, %273 : vector<8x128xf32>
    %302 = arith.mulf %192, %276 : vector<8x128xf32>
    %303 = arith.subf %301, %302 : vector<8x128xf32>
    %304 = arith.mulf %188, %276 : vector<8x128xf32>
    %305 = arith.mulf %194, %279 : vector<8x128xf32>
    %306 = arith.subf %304, %305 : vector<8x128xf32>
    %307 = arith.mulf %190, %279 : vector<8x128xf32>
    %308 = arith.mulf %196, %282 : vector<8x128xf32>
    %309 = arith.subf %307, %308 : vector<8x128xf32>
    %310 = arith.mulf %192, %282 : vector<8x128xf32>
    %311 = arith.mulf %198, %285 : vector<8x128xf32>
    %312 = arith.subf %310, %311 : vector<8x128xf32>
    %313 = arith.mulf %194, %285 : vector<8x128xf32>
    %314 = arith.mulf %200, %288 : vector<8x128xf32>
    %315 = arith.subf %313, %314 : vector<8x128xf32>
    %316 = arith.mulf %196, %288 : vector<8x128xf32>
    %317 = arith.mulf %202, %291 : vector<8x128xf32>
    %318 = arith.subf %316, %317 : vector<8x128xf32>
    %319 = arith.mulf %180, %294 : vector<8x128xf32>
    %320 = arith.mulf %188, %297 : vector<8x128xf32>
    %321 = arith.subf %319, %320 : vector<8x128xf32>
    %322 = arith.mulf %182, %297 : vector<8x128xf32>
    %323 = arith.mulf %190, %300 : vector<8x128xf32>
    %324 = arith.subf %322, %323 : vector<8x128xf32>
    %325 = arith.mulf %184, %300 : vector<8x128xf32>
    %326 = arith.mulf %192, %303 : vector<8x128xf32>
    %327 = arith.subf %325, %326 : vector<8x128xf32>
    %328 = arith.mulf %186, %303 : vector<8x128xf32>
    %329 = arith.mulf %194, %306 : vector<8x128xf32>
    %330 = arith.subf %328, %329 : vector<8x128xf32>
    %331 = arith.mulf %188, %306 : vector<8x128xf32>
    %332 = arith.mulf %196, %309 : vector<8x128xf32>
    %333 = arith.subf %331, %332 : vector<8x128xf32>
    %334 = arith.mulf %190, %309 : vector<8x128xf32>
    %335 = arith.mulf %198, %312 : vector<8x128xf32>
    %336 = arith.subf %334, %335 : vector<8x128xf32>
    %337 = arith.mulf %192, %312 : vector<8x128xf32>
    %338 = arith.mulf %200, %315 : vector<8x128xf32>
    %339 = arith.subf %337, %338 : vector<8x128xf32>
    %340 = arith.mulf %194, %315 : vector<8x128xf32>
    %341 = arith.mulf %202, %318 : vector<8x128xf32>
    %342 = arith.subf %340, %341 : vector<8x128xf32>
    %343 = arith.negf %176 : vector<8x128xf32>
    %344 = math.exp %343 : vector<8x128xf32>
    %cst_54 = arith.constant 1.000000e+00 : f32
    %345 = vector.broadcast %cst_54 : f32 to vector<8x128xf32>
    %346 = arith.addf %345, %344 : vector<8x128xf32>
    %347 = arith.divf %345, %346 : vector<8x128xf32>
    %348 = arith.mulf %176, %347 : vector<8x128xf32>
    %349 = tpu.concatenate %348, %321, %324, %327, %330, %333, %336, %339, %342 in 1 : vector<8x128xf32>, vector<8x128xf32>, vector<8x128xf32>, vector<8x128xf32>, vector<8x128xf32>, vector<8x128xf32>, vector<8x128xf32>, vector<8x128xf32>, vector<8x128xf32> -> vector<8x1152xf32>
    %350 = arith.truncf %349 : vector<8x1152xf32> to vector<8x1152xbf16>
    %c0_55 = arith.constant 0 : index
    %c0_56 = arith.constant 0 : index
    %351 = vector.load %arg3[%c0_55, %c0_56] : memref<1152x128xbf16, #tpu.memory_space<vmem>>, vector<1152x128xbf16>
    %cst_57 = arith.constant dense<0.000000e+00> : vector<8x128xf32>
    %352 = tpu.matmul %350, %351, %cst_57 {dimension_numbers = #tpu.dot_dimension_numbers<[1], [0], [0], [1], [0, 0, 1, 1], [], []>} : vector<8x1152xbf16>, vector<1152x128xbf16>, vector<8x128xf32> -> vector<8x128xf32>
    %c0_58 = arith.constant 0 : index
    %c0_59 = arith.constant 0 : index
    %353 = vector.load %arg4[%c0_58, %c0_59] : memref<8x128xf32, #tpu.memory_space<vmem>>, vector<8x128xf32>
    tpu.vector_store %arg4[%c0_58, %c0_59], %352 {strides = array<i32>} : memref<8x128xf32, #tpu.memory_space<vmem>>, vector<8x128xf32>,
    return
  }
  func.func @transform_0(%arg0: i32) -> (i32, i32) {
    %c0_i32 = arith.constant 0 : i32
    %c0_i32_0 = arith.constant 0 : i32
    return %arg0, %c0_i32 : i32, i32
  }
  func.func @transform_1(%arg0: i32) -> (i32, i32) {
    %c0_i32 = arith.constant 0 : i32
    %c0_i32_0 = arith.constant 0 : i32
    %c0_i32_1 = arith.constant 0 : i32
    return %c0_i32, %c0_i32_0 : i32, i32
  }
  func.func @transform_2(%arg0: i32) -> (i32, i32) {
    %c0_i32 = arith.constant 0 : i32
    %c0_i32_0 = arith.constant 0 : i32
    %c0_i32_1 = arith.constant 0 : i32
    return %c0_i32, %c0_i32_0 : i32, i32
  }
  func.func @transform_3(%arg0: i32) -> (i32, i32) {
    %c0_i32 = arith.constant 0 : i32
    %c0_i32_0 = arith.constant 0 : i32
    return %arg0, %c0_i32 : i32, i32
  }
}

module attributes {stable_mosaic.version = 11 : i64} {
  func.func @_fused_kq_kernel(%arg0: i32, %arg1: memref<8x128xf32, #tpu.memory_space<vmem>>, %arg2: memref<1152x128xbf16, #tpu.memory_space<vmem>>, %arg3: memref<1152x128xbf16, #tpu.memory_space<vmem>>, %arg4: memref<8x128xf32, #tpu.memory_space<vmem>>) attributes {dimension_semantics = [#tpu.dimension_semantics<parallel>], iteration_bounds = array<i64: 1>, scalar_prefetch = 0 : i64, scratch_operands = 0 : i64, tpu.core_type = #tpu.core_type<tc>, window_params = [{transform_indices = @transform_0, window_bounds = array<i64: 8, 128>}, {pipeline_mode = #tpu.pipeline_mode<synchronous>, transform_indices = @transform_1, window_bounds = array<i64: 1152, 128>}, {pipeline_mode = #tpu.pipeline_mode<synchronous>, transform_indices = @transform_2, window_bounds = array<i64: 1152, 128>}, {transform_indices = @transform_3, window_bounds = array<i64: 8, 128>}]} {
    %c0 = arith.constant 0 : index
    %c0_0 = arith.constant 0 : index
    %0 = vector.load %arg1[%c0, %c0_0] : memref<8x128xf32, #tpu.memory_space<vmem>>, vector<8x128xf32>
    %cst = arith.constant 2.500000e+00 : f32
    %1 = vector.broadcast %cst : f32 to vector<8x128xf32>
    %2 = arith.mulf %0, %1 : vector<8x128xf32>
    %cst_1 = arith.constant -5.500000e+00 : f32
    %3 = vector.broadcast %cst_1 : f32 to vector<8x128xf32>
    %4 = arith.subf %2, %3 : vector<8x128xf32>
    %cst_2 = arith.constant -4.500000e+00 : f32
    %5 = vector.broadcast %cst_2 : f32 to vector<8x128xf32>
    %6 = arith.subf %2, %5 : vector<8x128xf32>
    %cst_3 = arith.constant -3.500000e+00 : f32
    %7 = vector.broadcast %cst_3 : f32 to vector<8x128xf32>
    %8 = arith.subf %2, %7 : vector<8x128xf32>
    %cst_4 = arith.constant -2.500000e+00 : f32
    %9 = vector.broadcast %cst_4 : f32 to vector<8x128xf32>
    %10 = arith.subf %2, %9 : vector<8x128xf32>
    %cst_5 = arith.constant -1.500000e+00 : f32
    %11 = vector.broadcast %cst_5 : f32 to vector<8x128xf32>
    %12 = arith.subf %2, %11 : vector<8x128xf32>
    %cst_6 = arith.constant -5.000000e-01 : f32
    %13 = vector.broadcast %cst_6 : f32 to vector<8x128xf32>
    %14 = arith.subf %2, %13 : vector<8x128xf32>
    %cst_7 = arith.constant 5.000000e-01 : f32
    %15 = vector.broadcast %cst_7 : f32 to vector<8x128xf32>
    %16 = arith.subf %2, %15 : vector<8x128xf32>
    %cst_8 = arith.constant 1.500000e+00 : f32
    %17 = vector.broadcast %cst_8 : f32 to vector<8x128xf32>
    %18 = arith.subf %2, %17 : vector<8x128xf32>
    %cst_9 = arith.constant 2.500000e+00 : f32
    %19 = vector.broadcast %cst_9 : f32 to vector<8x128xf32>
    %20 = arith.subf %2, %19 : vector<8x128xf32>
    %cst_10 = arith.constant 3.500000e+00 : f32
    %21 = vector.broadcast %cst_10 : f32 to vector<8x128xf32>
    %22 = arith.subf %2, %21 : vector<8x128xf32>
    %cst_11 = arith.constant 4.500000e+00 : f32
    %23 = vector.broadcast %cst_11 : f32 to vector<8x128xf32>
    %24 = arith.subf %2, %23 : vector<8x128xf32>
    %cst_12 = arith.constant 5.500000e+00 : f32
    %25 = vector.broadcast %cst_12 : f32 to vector<8x128xf32>
    %26 = arith.subf %2, %25 : vector<8x128xf32>
    %cst_13 = arith.constant 0.000000e+00 : f32
    %27 = vector.broadcast %cst_13 : f32 to vector<8x128xf32>
    %28 = arith.cmpf oge, %4, %27 : vector<8x128xf32>
    %29 = arith.extui %28 : vector<8x128xi1> to vector<8x128xi32>
    %30 = arith.sitofp %29 : vector<8x128xi32> to vector<8x128xf32>
    %cst_14 = arith.constant 0.000000e+00 : f32
    %31 = vector.broadcast %cst_14 : f32 to vector<8x128xf32>
    %32 = arith.cmpf oge, %6, %31 : vector<8x128xf32>
    %33 = arith.extui %32 : vector<8x128xi1> to vector<8x128xi32>
    %34 = arith.sitofp %33 : vector<8x128xi32> to vector<8x128xf32>
    %cst_15 = arith.constant 0.000000e+00 : f32
    %35 = vector.broadcast %cst_15 : f32 to vector<8x128xf32>
    %36 = arith.cmpf oge, %8, %35 : vector<8x128xf32>
    %37 = arith.extui %36 : vector<8x128xi1> to vector<8x128xi32>
    %38 = arith.sitofp %37 : vector<8x128xi32> to vector<8x128xf32>
    %cst_16 = arith.constant 0.000000e+00 : f32
    %39 = vector.broadcast %cst_16 : f32 to vector<8x128xf32>
    %40 = arith.cmpf oge, %10, %39 : vector<8x128xf32>
    %41 = arith.extui %40 : vector<8x128xi1> to vector<8x128xi32>
    %42 = arith.sitofp %41 : vector<8x128xi32> to vector<8x128xf32>
    %cst_17 = arith.constant 0.000000e+00 : f32
    %43 = vector.broadcast %cst_17 : f32 to vector<8x128xf32>
    %44 = arith.cmpf oge, %12, %43 : vector<8x128xf32>
    %45 = arith.extui %44 : vector<8x128xi1> to vector<8x128xi32>
    %46 = arith.sitofp %45 : vector<8x128xi32> to vector<8x128xf32>
    %cst_18 = arith.constant 0.000000e+00 : f32
    %47 = vector.broadcast %cst_18 : f32 to vector<8x128xf32>
    %48 = arith.cmpf oge, %14, %47 : vector<8x128xf32>
    %49 = arith.extui %48 : vector<8x128xi1> to vector<8x128xi32>
    %50 = arith.sitofp %49 : vector<8x128xi32> to vector<8x128xf32>
    %cst_19 = arith.constant 0.000000e+00 : f32
    %51 = vector.broadcast %cst_19 : f32 to vector<8x128xf32>
    %52 = arith.cmpf oge, %16, %51 : vector<8x128xf32>
    %53 = arith.extui %52 : vector<8x128xi1> to vector<8x128xi32>
    %54 = arith.sitofp %53 : vector<8x128xi32> to vector<8x128xf32>
    %cst_20 = arith.constant 0.000000e+00 : f32
    %55 = vector.broadcast %cst_20 : f32 to vector<8x128xf32>
    %56 = arith.cmpf oge, %18, %55 : vector<8x128xf32>
    %57 = arith.extui %56 : vector<8x128xi1> to vector<8x128xi32>
    %58 = arith.sitofp %57 : vector<8x128xi32> to vector<8x128xf32>
    %cst_21 = arith.constant 0.000000e+00 : f32
    %59 = vector.broadcast %cst_21 : f32 to vector<8x128xf32>
    %60 = arith.cmpf oge, %20, %59 : vector<8x128xf32>
    %61 = arith.extui %60 : vector<8x128xi1> to vector<8x128xi32>
    %62 = arith.sitofp %61 : vector<8x128xi32> to vector<8x128xf32>
    %cst_22 = arith.constant 0.000000e+00 : f32
    %63 = vector.broadcast %cst_22 : f32 to vector<8x128xf32>
    %64 = arith.cmpf oge, %22, %63 : vector<8x128xf32>
    %65 = arith.extui %64 : vector<8x128xi1> to vector<8x128xi32>
    %66 = arith.sitofp %65 : vector<8x128xi32> to vector<8x128xf32>
    %cst_23 = arith.constant 0.000000e+00 : f32
    %67 = vector.broadcast %cst_23 : f32 to vector<8x128xf32>
    %68 = arith.cmpf oge, %24, %67 : vector<8x128xf32>
    %69 = arith.extui %68 : vector<8x128xi1> to vector<8x128xi32>
    %70 = arith.sitofp %69 : vector<8x128xi32> to vector<8x128xf32>
    %cst_24 = arith.constant 0.000000e+00 : f32
    %71 = vector.broadcast %cst_24 : f32 to vector<8x128xf32>
    %72 = arith.cmpf oge, %26, %71 : vector<8x128xf32>
    %73 = arith.extui %72 : vector<8x128xi1> to vector<8x128xi32>
    %74 = arith.sitofp %73 : vector<8x128xi32> to vector<8x128xf32>
    %75 = arith.subf %30, %34 : vector<8x128xf32>
    %76 = arith.subf %34, %38 : vector<8x128xf32>
    %77 = arith.subf %38, %42 : vector<8x128xf32>
    %78 = arith.subf %42, %46 : vector<8x128xf32>
    %79 = arith.subf %46, %50 : vector<8x128xf32>
    %80 = arith.subf %50, %54 : vector<8x128xf32>
    %81 = arith.subf %54, %58 : vector<8x128xf32>
    %82 = arith.subf %58, %62 : vector<8x128xf32>
    %83 = arith.subf %62, %66 : vector<8x128xf32>
    %84 = arith.subf %66, %70 : vector<8x128xf32>
    %85 = arith.subf %70, %74 : vector<8x128xf32>
    %86 = arith.mulf %4, %75 : vector<8x128xf32>
    %87 = arith.mulf %8, %76 : vector<8x128xf32>
    %88 = arith.subf %86, %87 : vector<8x128xf32>
    %89 = arith.mulf %6, %76 : vector<8x128xf32>
    %90 = arith.mulf %10, %77 : vector<8x128xf32>
    %91 = arith.subf %89, %90 : vector<8x128xf32>
    %92 = arith.mulf %8, %77 : vector<8x128xf32>
    %93 = arith.mulf %12, %78 : vector<8x128xf32>
    %94 = arith.subf %92, %93 : vector<8x128xf32>
    %95 = arith.mulf %10, %78 : vector<8x128xf32>
    %96 = arith.mulf %14, %79 : vector<8x128xf32>
    %97 = arith.subf %95, %96 : vector<8x128xf32>
    %98 = arith.mulf %12, %79 : vector<8x128xf32>
    %99 = arith.mulf %16, %80 : vector<8x128xf32>
    %100 = arith.subf %98, %99 : vector<8x128xf32>
    %101 = arith.mulf %14, %80 : vector<8x128xf32>
    %102 = arith.mulf %18, %81 : vector<8x128xf32>
    %103 = arith.subf %101, %102 : vector<8x128xf32>
    %104 = arith.mulf %16, %81 : vector<8x128xf32>
    %105 = arith.mulf %20, %82 : vector<8x128xf32>
    %106 = arith.subf %104, %105 : vector<8x128xf32>
    %107 = arith.mulf %18, %82 : vector<8x128xf32>
    %108 = arith.mulf %22, %83 : vector<8x128xf32>
    %109 = arith.subf %107, %108 : vector<8x128xf32>
    %110 = arith.mulf %20, %83 : vector<8x128xf32>
    %111 = arith.mulf %24, %84 : vector<8x128xf32>
    %112 = arith.subf %110, %111 : vector<8x128xf32>
    %113 = arith.mulf %22, %84 : vector<8x128xf32>
    %114 = arith.mulf %26, %85 : vector<8x128xf32>
    %115 = arith.subf %113, %114 : vector<8x128xf32>
    %116 = arith.mulf %4, %88 : vector<8x128xf32>
    %117 = arith.mulf %10, %91 : vector<8x128xf32>
    %118 = arith.subf %116, %117 : vector<8x128xf32>
    %119 = arith.mulf %6, %91 : vector<8x128xf32>
    %120 = arith.mulf %12, %94 : vector<8x128xf32>
    %121 = arith.subf %119, %120 : vector<8x128xf32>
    %122 = arith.mulf %8, %94 : vector<8x128xf32>
    %123 = arith.mulf %14, %97 : vector<8x128xf32>
    %124 = arith.subf %122, %123 : vector<8x128xf32>
    %125 = arith.mulf %10, %97 : vector<8x128xf32>
    %126 = arith.mulf %16, %100 : vector<8x128xf32>
    %127 = arith.subf %125, %126 : vector<8x128xf32>
    %128 = arith.mulf %12, %100 : vector<8x128xf32>
    %129 = arith.mulf %18, %103 : vector<8x128xf32>
    %130 = arith.subf %128, %129 : vector<8x128xf32>
    %131 = arith.mulf %14, %103 : vector<8x128xf32>
    %132 = arith.mulf %20, %106 : vector<8x128xf32>
    %133 = arith.subf %131, %132 : vector<8x128xf32>
    %134 = arith.mulf %16, %106 : vector<8x128xf32>
    %135 = arith.mulf %22, %109 : vector<8x128xf32>
    %136 = arith.subf %134, %135 : vector<8x128xf32>
    %137 = arith.mulf %18, %109 : vector<8x128xf32>
    %138 = arith.mulf %24, %112 : vector<8x128xf32>
    %139 = arith.subf %137, %138 : vector<8x128xf32>
    %140 = arith.mulf %20, %112 : vector<8x128xf32>
    %141 = arith.mulf %26, %115 : vector<8x128xf32>
    %142 = arith.subf %140, %141 : vector<8x128xf32>
    %143 = arith.mulf %4, %118 : vector<8x128xf32>
    %144 = arith.mulf %12, %121 : vector<8x128xf32>
    %145 = arith.subf %143, %144 : vector<8x128xf32>
    %146 = arith.mulf %6, %121 : vector<8x128xf32>
    %147 = arith.mulf %14, %124 : vector<8x128xf32>
    %148 = arith.subf %146, %147 : vector<8x128xf32>
    %149 = arith.mulf %8, %124 : vector<8x128xf32>
    %150 = arith.mulf %16, %127 : vector<8x128xf32>
    %151 = arith.subf %149, %150 : vector<8x128xf32>
    %152 = arith.mulf %10, %127 : vector<8x128xf32>
    %153 = arith.mulf %18, %130 : vector<8x128xf32>
    %154 = arith.subf %152, %153 : vector<8x128xf32>
    %155 = arith.mulf %12, %130 : vector<8x128xf32>
    %156 = arith.mulf %20, %133 : vector<8x128xf32>
    %157 = arith.subf %155, %156 : vector<8x128xf32>
    %158 = arith.mulf %14, %133 : vector<8x128xf32>
    %159 = arith.mulf %22, %136 : vector<8x128xf32>
    %160 = arith.subf %158, %159 : vector<8x128xf32>
    %161 = arith.mulf %16, %136 : vector<8x128xf32>
    %162 = arith.mulf %24, %139 : vector<8x128xf32>
    %163 = arith.subf %161, %162 : vector<8x128xf32>
    %164 = arith.mulf %18, %139 : vector<8x128xf32>
    %165 = arith.mulf %26, %142 : vector<8x128xf32>
    %166 = arith.subf %164, %165 : vector<8x128xf32>
    %167 = arith.negf %0 : vector<8x128xf32>
    %168 = math.exp %167 : vector<8x128xf32>
    %cst_25 = arith.constant 1.000000e+00 : f32
    %169 = vector.broadcast %cst_25 : f32 to vector<8x128xf32>
    %170 = arith.addf %169, %168 : vector<8x128xf32>
    %171 = arith.divf %169, %170 : vector<8x128xf32>
    %172 = arith.mulf %0, %171 : vector<8x128xf32>
    %173 = tpu.concatenate %172, %145, %148, %151, %154, %157, %160, %163, %166 in 1 : vector<8x128xf32>, vector<8x128xf32>, vector<8x128xf32>, vector<8x128xf32>, vector<8x128xf32>, vector<8x128xf32>, vector<8x128xf32>, vector<8x128xf32>, vector<8x128xf32> -> vector<8x1152xf32>
    %174 = arith.truncf %173 : vector<8x1152xf32> to vector<8x1152xbf16>
    %c0_26 = arith.constant 0 : index
    %c0_27 = arith.constant 0 : index
    %175 = vector.load %arg2[%c0_26, %c0_27] : memref<1152x128xbf16, #tpu.memory_space<vmem>>, vector<1152x128xbf16>
    %cst_28 = arith.constant dense<0.000000e+00> : vector<8x128xf32>
    %176 = tpu.matmul %174, %175, %cst_28 {dimension_numbers = #tpu.dot_dimension_numbers<[1], [0], [0], [1], [0, 0, 1, 1], [], []>} : vector<8x1152xbf16>, vector<1152x128xbf16>, vector<8x128xf32> -> vector<8x128xf32>
    %cst_29 = arith.constant 2.500000e+00 : f32
    %177 = vector.broadcast %cst_29 : f32 to vector<8x128xf32>
    %178 = arith.mulf %176, %177 : vector<8x128xf32>
    %cst_30 = arith.constant -5.500000e+00 : f32
    %179 = vector.broadcast %cst_30 : f32 to vector<8x128xf32>
    %180 = arith.subf %178, %179 : vector<8x128xf32>
    %cst_31 = arith.constant -4.500000e+00 : f32
    %181 = vector.broadcast %cst_31 : f32 to vector<8x128xf32>
    %182 = arith.subf %178, %181 : vector<8x128xf32>
    %cst_32 = arith.constant -3.500000e+00 : f32
    %183 = vector.broadcast %cst_32 : f32 to vector<8x128xf32>
    %184 = arith.subf %178, %183 : vector<8x128xf32>
    %cst_33 = arith.constant -2.500000e+00 : f32
    %185 = vector.broadcast %cst_33 : f32 to vector<8x128xf32>
    %186 = arith.subf %178, %185 : vector<8x128xf32>
    %cst_34 = arith.constant -1.500000e+00 : f32
    %187 = vector.broadcast %cst_34 : f32 to vector<8x128xf32>
    %188 = arith.subf %178, %187 : vector<8x128xf32>
    %cst_35 = arith.constant -5.000000e-01 : f32
    %189 = vector.broadcast %cst_35 : f32 to vector<8x128xf32>
    %190 = arith.subf %178, %189 : vector<8x128xf32>
    %cst_36 = arith.constant 5.000000e-01 : f32
    %191 = vector.broadcast %cst_36 : f32 to vector<8x128xf32>
    %192 = arith.subf %178, %191 : vector<8x128xf32>
    %cst_37 = arith.constant 1.500000e+00 : f32
    %193 = vector.broadcast %cst_37 : f32 to vector<8x128xf32>
    %194 = arith.subf %178, %193 : vector<8x128xf32>
    %cst_38 = arith.constant 2.500000e+00 : f32
    %195 = vector.broadcast %cst_38 : f32 to vector<8x128xf32>
    %196 = arith.subf %178, %195 : vector<8x128xf32>
    %cst_39 = arith.constant 3.500000e+00 : f32
    %197 = vector.broadcast %cst_39 : f32 to vector<8x128xf32>
    %198 = arith.subf %178, %197 : vector<8x128xf32>
    %cst_40 = arith.constant 4.500000e+00 : f32
    %199 = vector.broadcast %cst_40 : f32 to vector<8x128xf32>
    %200 = arith.subf %178, %199 : vector<8x128xf32>
    %cst_41 = arith.constant 5.500000e+00 : f32
    %201 = vector.broadcast %cst_41 : f32 to vector<8x128xf32>
    %202 = arith.subf %178, %201 : vector<8x128xf32>
    %cst_42 = arith.constant 0.000000e+00 : f32
    %203 = vector.broadcast %cst_42 : f32 to vector<8x128xf32>
    %204 = arith.cmpf oge, %180, %203 : vector<8x128xf32>
    %205 = arith.extui %204 : vector<8x128xi1> to vector<8x128xi32>
    %206 = arith.sitofp %205 : vector<8x128xi32> to vector<8x128xf32>
    %cst_43 = arith.constant 0.000000e+00 : f32
    %207 = vector.broadcast %cst_43 : f32 to vector<8x128xf32>
    %208 = arith.cmpf oge, %182, %207 : vector<8x128xf32>
    %209 = arith.extui %208 : vector<8x128xi1> to vector<8x128xi32>
    %210 = arith.sitofp %209 : vector<8x128xi32> to vector<8x128xf32>
    %cst_44 = arith.constant 0.000000e+00 : f32
    %211 = vector.broadcast %cst_44 : f32 to vector<8x128xf32>
    %212 = arith.cmpf oge, %184, %211 : vector<8x128xf32>
    %213 = arith.extui %212 : vector<8x128xi1> to vector<8x128xi32>
    %214 = arith.sitofp %213 : vector<8x128xi32> to vector<8x128xf32>
    %cst_45 = arith.constant 0.000000e+00 : f32
    %215 = vector.broadcast %cst_45 : f32 to vector<8x128xf32>
    %216 = arith.cmpf oge, %186, %215 : vector<8x128xf32>
    %217 = arith.extui %216 : vector<8x128xi1> to vector<8x128xi32>
    %218 = arith.sitofp %217 : vector<8x128xi32> to vector<8x128xf32>
    %cst_46 = arith.constant 0.000000e+00 : f32
    %219 = vector.broadcast %cst_46 : f32 to vector<8x128xf32>
    %220 = arith.cmpf oge, %188, %219 : vector<8x128xf32>
    %221 = arith.extui %220 : vector<8x128xi1> to vector<8x128xi32>
    %222 = arith.sitofp %221 : vector<8x128xi32> to vector<8x128xf32>
    %cst_47 = arith.constant 0.000000e+00 : f32
    %223 = vector.broadcast %cst_47 : f32 to vector<8x128xf32>
    %224 = arith.cmpf oge, %190, %223 : vector<8x128xf32>
    %225 = arith.extui %224 : vector<8x128xi1> to vector<8x128xi32>
    %226 = arith.sitofp %225 : vector<8x128xi32> to vector<8x128xf32>
    %cst_48 = arith.constant 0.000000e+00 : f32
    %227 = vector.broadcast %cst_48 : f32 to vector<8x128xf32>
    %228 = arith.cmpf oge, %192, %227 : vector<8x128xf32>
    %229 = arith.extui %228 : vector<8x128xi1> to vector<8x128xi32>
    %230 = arith.sitofp %229 : vector<8x128xi32> to vector<8x128xf32>
    %cst_49 = arith.constant 0.000000e+00 : f32
    %231 = vector.broadcast %cst_49 : f32 to vector<8x128xf32>
    %232 = arith.cmpf oge, %194, %231 : vector<8x128xf32>
    %233 = arith.extui %232 : vector<8x128xi1> to vector<8x128xi32>
    %234 = arith.sitofp %233 : vector<8x128xi32> to vector<8x128xf32>
    %cst_50 = arith.constant 0.000000e+00 : f32
    %235 = vector.broadcast %cst_50 : f32 to vector<8x128xf32>
    %236 = arith.cmpf oge, %196, %235 : vector<8x128xf32>
    %237 = arith.extui %236 : vector<8x128xi1> to vector<8x128xi32>
    %238 = arith.sitofp %237 : vector<8x128xi32> to vector<8x128xf32>
    %cst_51 = arith.constant 0.000000e+00 : f32
    %239 = vector.broadcast %cst_51 : f32 to vector<8x128xf32>
    %240 = arith.cmpf oge, %198, %239 : vector<8x128xf32>
    %241 = arith.extui %240 : vector<8x128xi1> to vector<8x128xi32>
    %242 = arith.sitofp %241 : vector<8x128xi32> to vector<8x128xf32>
    %cst_52 = arith.constant 0.000000e+00 : f32
    %243 = vector.broadcast %cst_52 : f32 to vector<8x128xf32>
    %244 = arith.cmpf oge, %200, %243 : vector<8x128xf32>
    %245 = arith.extui %244 : vector<8x128xi1> to vector<8x128xi32>
    %246 = arith.sitofp %245 : vector<8x128xi32> to vector<8x128xf32>
    %cst_53 = arith.constant 0.000000e+00 : f32
    %247 = vector.broadcast %cst_53 : f32 to vector<8x128xf32>
    %248 = arith.cmpf oge, %202, %247 : vector<8x128xf32>
    %249 = arith.extui %248 : vector<8x128xi1> to vector<8x128xi32>
    %250 = arith.sitofp %249 : vector<8x128xi32> to vector<8x128xf32>
    %251 = arith.subf %206, %210 : vector<8x128xf32>
    %252 = arith.subf %210, %214 : vector<8x128xf32>
    %253 = arith.subf %214, %218 : vector<8x128xf32>
    %254 = arith.subf %218, %222 : vector<8x128xf32>
    %255 = arith.subf %222, %226 : vector<8x128xf32>
    %256 = arith.subf %226, %230 : vector<8x128xf32>
    %257 = arith.subf %230, %234 : vector<8x128xf32>
    %258 = arith.subf %234, %238 : vector<8x128xf32>
    %259 = arith.subf %238, %242 : vector<8x128xf32>
    %260 = arith.subf %242, %246 : vector<8x128xf32>
    %261 = arith.subf %246, %250 : vector<8x128xf32>
    %262 = arith.mulf %180, %251 : vector<8x128xf32>
    %263 = arith.mulf %184, %252 : vector<8x128xf32>
    %264 = arith.subf %262, %263 : vector<8x128xf32>
    %265 = arith.mulf %182, %252 : vector<8x128xf32>
    %266 = arith.mulf %186, %253 : vector<8x128xf32>
    %267 = arith.subf %265, %266 : vector<8x128xf32>
    %268 = arith.mulf %184, %253 : vector<8x128xf32>
    %269 = arith.mulf %188, %254 : vector<8x128xf32>
    %270 = arith.subf %268, %269 : vector<8x128xf32>
    %271 = arith.mulf %186, %254 : vector<8x128xf32>
    %272 = arith.mulf %190, %255 : vector<8x128xf32>
    %273 = arith.subf %271, %272 : vector<8x128xf32>
    %274 = arith.mulf %188, %255 : vector<8x128xf32>
    %275 = arith.mulf %192, %256 : vector<8x128xf32>
    %276 = arith.subf %274, %275 : vector<8x128xf32>
    %277 = arith.mulf %190, %256 : vector<8x128xf32>
    %278 = arith.mulf %194, %257 : vector<8x128xf32>
    %279 = arith.subf %277, %278 : vector<8x128xf32>
    %280 = arith.mulf %192, %257 : vector<8x128xf32>
    %281 = arith.mulf %196, %258 : vector<8x128xf32>
    %282 = arith.subf %280, %281 : vector<8x128xf32>
    %283 = arith.mulf %194, %258 : vector<8x128xf32>
    %284 = arith.mulf %198, %259 : vector<8x128xf32>
    %285 = arith.subf %283, %284 : vector<8x128xf32>
    %286 = arith.mulf %196, %259 : vector<8x128xf32>
    %287 = arith.mulf %200, %260 : vector<8x128xf32>
    %288 = arith.subf %286, %287 : vector<8x128xf32>
    %289 = arith.mulf %198, %260 : vector<8x128xf32>
    %290 = arith.mulf %202, %261 : vector<8x128xf32>
    %291 = arith.subf %289, %290 : vector<8x128xf32>
    %292 = arith.mulf %180, %264 : vector<8x128xf32>
    %293 = arith.mulf %186, %267 : vector<8x128xf32>
    %294 = arith.subf %292, %293 : vector<8x128xf32>
    %295 = arith.mulf %182, %267 : vector<8x128xf32>
    %296 = arith.mulf %188, %270 : vector<8x128xf32>
    %297 = arith.subf %295, %296 : vector<8x128xf32>
    %298 = arith.mulf %184, %270 : vector<8x128xf32>
    %299 = arith.mulf %190, %273 : vector<8x128xf32>
    %300 = arith.subf %298, %299 : vector<8x128xf32>
    %301 = arith.mulf %186, %273 : vector<8x128xf32>
    %302 = arith.mulf %192, %276 : vector<8x128xf32>
    %303 = arith.subf %301, %302 : vector<8x128xf32>
    %304 = arith.mulf %188, %276 : vector<8x128xf32>
    %305 = arith.mulf %194, %279 : vector<8x128xf32>
    %306 = arith.subf %304, %305 : vector<8x128xf32>
    %307 = arith.mulf %190, %279 : vector<8x128xf32>
    %308 = arith.mulf %196, %282 : vector<8x128xf32>
    %309 = arith.subf %307, %308 : vector<8x128xf32>
    %310 = arith.mulf %192, %282 : vector<8x128xf32>
    %311 = arith.mulf %198, %285 : vector<8x128xf32>
    %312 = arith.subf %310, %311 : vector<8x128xf32>
    %313 = arith.mulf %194, %285 : vector<8x128xf32>
    %314 = arith.mulf %200, %288 : vector<8x128xf32>
    %315 = arith.subf %313, %314 : vector<8x128xf32>
    %316 = arith.mulf %196, %288 : vector<8x128xf32>
    %317 = arith.mulf %202, %291 : vector<8x128xf32>
    %318 = arith.subf %316, %317 : vector<8x128xf32>
    %319 = arith.mulf %180, %294 : vector<8x128xf32>
    %320 = arith.mulf %188, %297 : vector<8x128xf32>
    %321 = arith.subf %319, %320 : vector<8x128xf32>
    %322 = arith.mulf %182, %297 : vector<8x128xf32>
    %323 = arith.mulf %190, %300 : vector<8x128xf32>
    %324 = arith.subf %322, %323 : vector<8x128xf32>
    %325 = arith.mulf %184, %300 : vector<8x128xf32>
    %326 = arith.mulf %192, %303 : vector<8x128xf32>
    %327 = arith.subf %325, %326 : vector<8x128xf32>
    %328 = arith.mulf %186, %303 : vector<8x128xf32>
    %329 = arith.mulf %194, %306 : vector<8x128xf32>
    %330 = arith.subf %328, %329 : vector<8x128xf32>
    %331 = arith.mulf %188, %306 : vector<8x128xf32>
    %332 = arith.mulf %196, %309 : vector<8x128xf32>
    %333 = arith.subf %331, %332 : vector<8x128xf32>
    %334 = arith.mulf %190, %309 : vector<8x128xf32>
    %335 = arith.mulf %198, %312 : vector<8x128xf32>
    %336 = arith.subf %334, %335 : vector<8x128xf32>
    %337 = arith.mulf %192, %312 : vector<8x128xf32>
    %338 = arith.mulf %200, %315 : vector<8x128xf32>
    %339 = arith.subf %337, %338 : vector<8x128xf32>
    %340 = arith.mulf %194, %315 : vector<8x128xf32>
    %341 = arith.mulf %202, %318 : vector<8x128xf32>
    %342 = arith.subf %340, %341 : vector<8x128xf32>
    %343 = arith.negf %176 : vector<8x128xf32>
    %344 = math.exp %343 : vector<8x128xf32>
    %cst_54 = arith.constant 1.000000e+00 : f32
    %345 = vector.broadcast %cst_54 : f32 to vector<8x128xf32>
    %346 = arith.addf %345, %344 : vector<8x128xf32>
    %347 = arith.divf %345, %346 : vector<8x128xf32>
    %348 = arith.mulf %176, %347 : vector<8x128xf32>
    %349 = tpu.concatenate %348, %321, %324, %327, %330, %333, %336, %339, %342 in 1 : vector<8x128xf32>, vector<8x128xf32>, vector<8x128xf32>, vector<8x128xf32>, vector<8x128xf32>, vector<8x128xf32>, vector<8x128xf32>, vector<8x128xf32>, vector<8x128xf32> -> vector<8x1152xf32>
    %350 = arith.truncf %349 : vector<8x1152xf32> to vector<8x1152xbf16>
    %c0_55 = arith.constant 0 : index
    %c0_56 = arith.constant 0 : index
    %351 = vector.load %arg3[%c0_55, %c0_56] : memref<1152x128xbf16, #tpu.memory_space<vmem>>, vector<1152x128xbf16>
    %cst_57 = arith.constant dense<0.000000e+00> : vector<8x128xf32>
    %352 = tpu.matmul %350, %351, %cst_57 {dimension_numbers = #tpu.dot_dimension_numbers<[1], [0], [0], [1], [0, 0, 1, 1], [], []>} : vector<8x1152xbf16>, vector<1152x128xbf16>, vector<8x128xf32> -> vector<8x128xf32>
    %c0_58 = arith.constant 0 : index
    %c0_59 = arith.constant 0 : index
    %353 = vector.load %arg4[%c0_58, %c0_59] : memref<8x128xf32, #tpu.memory_space<vmem>>, vector<8x128xf32>
    tpu.vector_store %arg4[%c0_58, %c0_59], %352 {strides = array<i32>} : memref<8x128xf32, #tpu.memory_space<vmem>>, vector<8x128xf32>,
    return
  }
  func.func @transform_0(%arg0: i32) -> (i32, i32) {
    %c0_i32 = arith.constant 0 : i32
    %c0_i32_0 = arith.constant 0 : i32
    return %arg0, %c0_i32 : i32, i32
  }
  func.func @transform_1(%arg0: i32) -> (i32, i32) {
    %c0_i32 = arith.constant 0 : i32
    %c0_i32_0 = arith.constant 0 : i32
    %c0_i32_1 = arith.constant 0 : i32
    return %c0_i32, %c0_i32_0 : i32, i32
  }
  func.func @transform_2(%arg0: i32) -> (i32, i32) {
    %c0_i32 = arith.constant 0 : i32
    %c0_i32_0 = arith.constant 0 : i32
    %c0_i32_1 = arith.constant 0 : i32
    return %c0_i32, %c0_i32_0 : i32, i32
  }
  func.func @transform_3(%arg0: i32) -> (i32, i32) {
    %c0_i32 = arith.constant 0 : i32
    %c0_i32_0 = arith.constant 0 : i32
    return %arg0, %c0_i32 : i32, i32
  }
}

</mosaic_0001>

<llo_original>
// kernel: tpu_custom_call.1
$region0: #{tpu_custom_call.1}
  #allocation0 [shape = 'u32[]', space=smem, size = 0x4, offset = 0x4, fixed_abs, tag = 'smem constant byte address 0x4 - core index']
  #allocation1 [shape = 'u32[144,128]{1,0:T(1,128)}', space=vmem, size = 0x12000, scoped, tag = 'internal scratch']
  %s0 = inlined_call_operand.hbm [shape: f32[8,128], index: 0, kind: input, shape index: {}]
  %s1 = inlined_call_operand.hbm [shape: bf16[1152,128], index: 1, kind: input, shape index: {}]
  %s2 = inlined_call_operand.hbm [shape: bf16[1152,128], index: 2, kind: input, shape index: {}]
  %s3 = inlined_call_operand.hbm [shape: f32[8,128], index: 3, kind: output, shape index: {}]
  %s4 = sld [smem:[#allocation0]]
  $region34: #{tpu_custom_call.1} parent=0
    _
  %s6 = ssub.s32 1, %s4
  %s7 = scalar_select 0, %s6, %s4
  $region1: #{tpu_custom_call.1} parent=0
    #allocation2 [shape = 'u8[4096]{0}', space=vmem, size = 0x1000, scoped, tag = 'input window, operand 0, single buffered']
    #allocation3 [shape = 's32[1]{0}', space=sflag, size = 0x4, scoped, tag = 'scoped memory for tpu_custom_call.1']
    #allocation4 [shape = 's32[1]{0}', space=sflag, size = 0x4, scoped, tag = 'scoped memory for tpu_custom_call.1']
    #allocation5 [shape = 'u8[294912]{0}', space=vmem, size = 0x48000, scoped, tag = 'input window, operand 1, single buffered']
    #allocation6 [shape = 's32[1]{0}', space=sflag, size = 0x4, scoped, tag = 'scoped memory for tpu_custom_call.1']
    #allocation7 [shape = 'u8[294912]{0}', space=vmem, size = 0x48000, scoped, tag = 'input window, operand 2, single buffered']
    #allocation8 [shape = 'u8[4096]{0}', space=vmem, size = 0x1000, scoped, tag = 'output window, operand 0, single buffered']
    %8 = vsyncpa [#allocation3], 0
    %9 = vsyncpa [#allocation6], 0
    %10 = vsyncpa [#allocation4], 0
    // Predicated region
    $region2: #{tpu_custom_call.1} parent=1 // pred_check
      _
    $region3: #{tpu_custom_call.1} parent=1 // pred_check_branch
      %12 = sbr.rel (0) target = $region5
    $region4: #{tpu_custom_call.1} parent=1 // pred_region
      %s14 = ssub.s32 128, 128
      %15 = vsyncadd [#allocation3], %s14
      %s17 = sshll.u32 [#allocation2], 4
      %s18 = int_to_ptr.vmem [resolvable:$true] %s17
      %20 = dma.hbm_to_vmem [thread:$0]  %s0, 128, %s18, [#allocation3]
    $region5: #{tpu_custom_call.1} parent=1 // pred_fallthru
      _
    // Predicated region
    $region6: #{tpu_custom_call.1} parent=1 // pred_check
      _
    $region7: #{tpu_custom_call.1} parent=1 // pred_check_branch
      %22 = sbr.rel (0) target = $region9
    $region8: #{tpu_custom_call.1} parent=1 // pred_region
      %s24 = ssub.s32 9216, 9216
      %25 = vsyncadd [#allocation6], %s24
      %s26 = sshll.u32 [#allocation5], 4
      %s27 = int_to_ptr.vmem [resolvable:$true] %s26
      %32 = dma.hbm_to_vmem [thread:$0]  %s1, 9216, %s27, [#allocation6], 64, 64, 4
    $region9: #{tpu_custom_call.1} parent=1 // pred_fallthru
      _
    // Predicated region
    $region10: #{tpu_custom_call.1} parent=1 // pred_check
      _
    $region11: #{tpu_custom_call.1} parent=1 // pred_check_branch
      %34 = sbr.rel (0) target = $region13
    $region12: #{tpu_custom_call.1} parent=1 // pred_region
      %s36 = ssub.s32 9216, 9216
      %37 = vsyncadd [#allocation6], %s36
      %s38 = sshll.u32 [#allocation7], 4
      %s39 = int_to_ptr.vmem [resolvable:$true] %s38
      %44 = dma.hbm_to_vmem [thread:$0]  %s2, 9216, %s39, [#allocation6], 64, 64, 4
    $region13: #{tpu_custom_call.1} parent=1 // pred_fallthru
      _
    // Predicated region
    $region14: #{tpu_custom_call.1} parent=1 // pred_check
      _
    $region15: #{tpu_custom_call.1} parent=1 // pred_check_branch
      %46 = sbr.rel (0) target = $region17
    $region16: #{tpu_custom_call.1} parent=1 // pred_region
      %47 = dma.done [#allocation3], 128
    $region17: #{tpu_custom_call.1} parent=1 // pred_fallthru
      _
    // Predicated region
    $region18: #{tpu_custom_call.1} parent=1 // pred_check
      _
    $region19: #{tpu_custom_call.1} parent=1 // pred_check_branch
      %49 = sbr.rel (0) target = $region21
    $region20: #{tpu_custom_call.1} parent=1 // pred_region
      %50 = dma.done [#allocation6], 9216
    $region21: #{tpu_custom_call.1} parent=1 // pred_fallthru
      _
    // Predicated region
    $region22: #{tpu_custom_call.1} parent=1 // pred_check
      _
    $region23: #{tpu_custom_call.1} parent=1 // pred_check_branch
      %52 = sbr.rel (0) target = $region25
    $region24: #{tpu_custom_call.1} parent=1 // pred_region
      %53 = dma.done [#allocation6], 9216
    $region25: #{tpu_custom_call.1} parent=1 // pred_fallthru
      _
    %v55 = vld [vmem:[#allocation2] sm:$0xff]
    %v56 = vmul.f32 %v55, 2.5
    %v57 = vsub.f32 %v56, -5.5
    %v58 = vsub.f32 %v56, -4.5
    %v59 = vsub.f32 %v56, -3.5
    %v60 = vsub.f32 %v56, -2.5
    %v61 = vsub.f32 %v56, -1.5
    %v62 = vsub.f32 %v56, -0.5
    %v63 = vsub.f32 %v56, 0.5
    %v64 = vsub.f32 %v56, 1.5
    %v65 = vsub.f32 %v56, 2.5
    %v66 = vsub.f32 %v56, 3.5
    %v67 = vsub.f32 %v56, 4.5
    %v68 = vsub.f32 %v56, 5.5
    %vm69 = vcmp.ge.f32.partialorder %v57, 0.0
    %v70 = vsel %vm69, 1, 0
    %v71 = vcvt.s32.f32 %v70
    %vm72 = vcmp.ge.f32.partialorder %v58, 0.0
    %v73 = vsel %vm72, 1, 0
    %v74 = vcvt.s32.f32 %v73
    %vm75 = vcmp.ge.f32.partialorder %v59, 0.0
    %v76 = vsel %vm75, 1, 0
    %v77 = vcvt.s32.f32 %v76
    %vm78 = vcmp.ge.f32.partialorder %v60, 0.0
    %v79 = vsel %vm78, 1, 0
    %v80 = vcvt.s32.f32 %v79
    %vm81 = vcmp.ge.f32.partialorder %v61, 0.0
    %v82 = vsel %vm81, 1, 0
    %v83 = vcvt.s32.f32 %v82
    %vm84 = vcmp.ge.f32.partialorder %v62, 0.0
    %v85 = vsel %vm84, 1, 0
    %v86 = vcvt.s32.f32 %v85
    %vm87 = vcmp.ge.f32.partialorder %v63, 0.0
    %v88 = vsel %vm87, 1, 0
    %v89 = vcvt.s32.f32 %v88
    %vm90 = vcmp.ge.f32.partialorder %v64, 0.0
    %v91 = vsel %vm90, 1, 0
    %v92 = vcvt.s32.f32 %v91
    %vm93 = vcmp.ge.f32.partialorder %v65, 0.0
    %v94 = vsel %vm93, 1, 0
    %v95 = vcvt.s32.f32 %v94
    %vm96 = vcmp.ge.f32.partialorder %v66, 0.0
    %v97 = vsel %vm96, 1, 0
    %v98 = vcvt.s32.f32 %v97
    %vm99 = vcmp.ge.f32.partialorder %v67, 0.0
    %v100 = vsel %vm99, 1, 0
    %v101 = vcvt.s32.f32 %v100
    %vm102 = vcmp.ge.f32.partialorder %v68, 0.0
    %v103 = vsel %vm102, 1, 0
    %v104 = vcvt.s32.f32 %v103
    %v105 = vsub.f32 %v71, %v74
    %v106 = vsub.f32 %v74, %v77
    %v107 = vsub.f32 %v77, %v80
    %v108 = vsub.f32 %v80, %v83
    %v109 = vsub.f32 %v83, %v86
    %v110 = vsub.f32 %v86, %v89
    %v111 = vsub.f32 %v89, %v92
    %v112 = vsub.f32 %v92, %v95
    %v113 = vsub.f32 %v95, %v98
    %v114 = vsub.f32 %v98, %v101
    %v115 = vsub.f32 %v101, %v104
    %v116 = vmul.f32 %v57, %v105
    %v117 = vmul.f32 %v59, %v106
    %v118 = vsub.f32 %v116, %v117
    %v119 = vmul.f32 %v58, %v106
    %v120 = vmul.f32 %v60, %v107
    %v121 = vsub.f32 %v119, %v120
    %v122 = vmul.f32 %v59, %v107
    %v123 = vmul.f32 %v61, %v108
    %v124 = vsub.f32 %v122, %v123
    %v125 = vmul.f32 %v60, %v108
    %v126 = vmul.f32 %v62, %v109
    %v127 = vsub.f32 %v125, %v126
    %v128 = vmul.f32 %v61, %v109
    %v129 = vmul.f32 %v63, %v110
    %v130 = vsub.f32 %v128, %v129
    %v131 = vmul.f32 %v62, %v110
    %v132 = vmul.f32 %v64, %v111
    %v133 = vsub.f32 %v131, %v132
    %v134 = vmul.f32 %v63, %v111
    %v135 = vmul.f32 %v65, %v112
    %v136 = vsub.f32 %v134, %v135
    %v137 = vmul.f32 %v64, %v112
    %v138 = vmul.f32 %v66, %v113
    %v139 = vsub.f32 %v137, %v138
    %v140 = vmul.f32 %v65, %v113
    %v141 = vmul.f32 %v67, %v114
    %v142 = vsub.f32 %v140, %v141
    %v143 = vmul.f32 %v66, %v114
    %v144 = vmul.f32 %v68, %v115
    %v145 = vsub.f32 %v143, %v144
    %v146 = vmul.f32 %v57, %v118
    %v147 = vmul.f32 %v60, %v121
    %v148 = vsub.f32 %v146, %v147
    %v149 = vmul.f32 %v58, %v121
    %v150 = vmul.f32 %v61, %v124
    %v151 = vsub.f32 %v149, %v150
    %v152 = vmul.f32 %v59, %v124
    %v153 = vmul.f32 %v62, %v127
    %v154 = vsub.f32 %v152, %v153
    %v155 = vmul.f32 %v60, %v127
    %v156 = vmul.f32 %v63, %v130
    %v157 = vsub.f32 %v155, %v156
    %v158 = vmul.f32 %v61, %v130
    %v159 = vmul.f32 %v64, %v133
    %v160 = vsub.f32 %v158, %v159
    %v161 = vmul.f32 %v62, %v133
    %v162 = vmul.f32 %v65, %v136
    %v163 = vsub.f32 %v161, %v162
    %v164 = vmul.f32 %v63, %v136
    %v165 = vmul.f32 %v66, %v139
    %v166 = vsub.f32 %v164, %v165
    %v167 = vmul.f32 %v64, %v139
    %v168 = vmul.f32 %v67, %v142
    %v169 = vsub.f32 %v167, %v168
    %v170 = vmul.f32 %v65, %v142
    %v171 = vmul.f32 %v68, %v145
    %v172 = vsub.f32 %v170, %v171
    %v173 = vmul.f32 %v57, %v148
    %v174 = vmul.f32 %v61, %v151
    %v175 = vsub.f32 %v173, %v174
    %v176 = vmul.f32 %v58, %v151
    %v177 = vmul.f32 %v62, %v154
    %v178 = vsub.f32 %v176, %v177
    %v179 = vmul.f32 %v59, %v154
    %v180 = vmul.f32 %v63, %v157
    %v181 = vsub.f32 %v179, %v180
    %v182 = vmul.f32 %v60, %v157
    %v183 = vmul.f32 %v64, %v160
    %v184 = vsub.f32 %v182, %v183
    %v185 = vmul.f32 %v61, %v160
    %v186 = vmul.f32 %v65, %v163
    %v187 = vsub.f32 %v185, %v186
    %v188 = vmul.f32 %v62, %v163
    %v189 = vmul.f32 %v66, %v166
    %v190 = vsub.f32 %v188, %v189
    %v191 = vmul.f32 %v63, %v166
    %v192 = vmul.f32 %v67, %v169
    %v193 = vsub.f32 %v191, %v192
    %v194 = vmul.f32 %v64, %v169
    %v195 = vmul.f32 %v68, %v172
    %v196 = vsub.f32 %v194, %v195
    %v197 = vxor.u32 %v55, 2147483648
    %v198 = vmul.f32 %v197, 1.442695
    %v199 = vpow.pop %v198
    %v200 = vadd.f32 %v199, 1.0
    %v201 = vrcp.pop %v200
    %v202 = vmul.f32 1.0, %v201
    %v203 = vmul.f32 %v55, %v202
    %v204 = vpack.c.bf16 %v203, %v203
    %v205 = vpack.c.bf16 %v175, %v175
    %v206 = vpack.c.bf16 %v178, %v178
    %v207 = vpack.c.bf16 %v181, %v181
    %v208 = vpack.c.bf16 %v184, %v184
    %v209 = vpack.c.bf16 %v187, %v187
    %v210 = vpack.c.bf16 %v190, %v190
    %v211 = vpack.c.bf16 %v193, %v193
    %v212 = vpack.c.bf16 %v196, %v196
    %v213 = vld [vmem:[#allocation5] sm:$0xf]
    %v214 = vld [vmem:[#allocation5 + $0x4] sm:$0xf]
    %v215 = vld [vmem:[#allocation5 + $0x8] sm:$0xf]
    %v216 = vld [vmem:[#allocation5 + $0xc] sm:$0xf]
    %v217 = vld [vmem:[#allocation5 + $0x10] sm:$0xf]
    %v218 = vld [vmem:[#allocation5 + $0x14] sm:$0xf]
    %v219 = vld [vmem:[#allocation5 + $0x18] sm:$0xf]
    %v220 = vld [vmem:[#allocation5 + $0x1c] sm:$0xf]
    %v221 = vld [vmem:[#allocation5 + $0x20] sm:$0xf]
    %v222 = vld [vmem:[#allocation5 + $0x24] sm:$0xf]
    %v223 = vld [vmem:[#allocation5 + $0x28] sm:$0xf]
    %v224 = vld [vmem:[#allocation5 + $0x2c] sm:$0xf]
    %v225 = vld [vmem:[#allocation5 + $0x30] sm:$0xf]
    %v226 = vld [vmem:[#allocation5 + $0x34] sm:$0xf]
    %v227 = vld [vmem:[#allocation5 + $0x38] sm:$0xf]
    %v228 = vld [vmem:[#allocation5 + $0x3c] sm:$0xf]
    %v229 = vld [vmem:[#allocation5 + $0x40] sm:$0xf]
    %v230 = vld [vmem:[#allocation5 + $0x44] sm:$0xf]
    %v231 = vld [vmem:[#allocation5 + $0x48] sm:$0xf]
    %v232 = vld [vmem:[#allocation5 + $0x4c] sm:$0xf]
    %v233 = vld [vmem:[#allocation5 + $0x50] sm:$0xf]
    %v234 = vld [vmem:[#allocation5 + $0x54] sm:$0xf]
    %v235 = vld [vmem:[#allocation5 + $0x58] sm:$0xf]
    %v236 = vld [vmem:[#allocation5 + $0x5c] sm:$0xf]
    %v237 = vld [vmem:[#allocation5 + $0x60] sm:$0xf]
    %v238 = vld [vmem:[#allocation5 + $0x64] sm:$0xf]
    %v239 = vld [vmem:[#allocation5 + $0x68] sm:$0xf]
    %v240 = vld [vmem:[#allocation5 + $0x6c] sm:$0xf]
    %v241 = vld [vmem:[#allocation5 + $0x70] sm:$0xf]
    %v242 = vld [vmem:[#allocation5 + $0x74] sm:$0xf]
    %v243 = vld [vmem:[#allocation5 + $0x78] sm:$0xf]
    %v244 = vld [vmem:[#allocation5 + $0x7c] sm:$0xf]
    %v245 = vld [vmem:[#allocation5 + $0x80] sm:$0xf]
    %v246 = vld [vmem:[#allocation5 + $0x84] sm:$0xf]
    %v247 = vld [vmem:[#allocation5 + $0x88] sm:$0xf]
    %v248 = vld [vmem:[#allocation5 + $0x8c] sm:$0xf]
    %v249 = vld [vmem:[#allocation5 + $0x90] sm:$0xf]
    %v250 = vld [vmem:[#allocation5 + $0x94] sm:$0xf]
    %v251 = vld [vmem:[#allocation5 + $0x98] sm:$0xf]
    %v252 = vld [vmem:[#allocation5 + $0x9c] sm:$0xf]
    %v253 = vld [vmem:[#allocation5 + $0xa0] sm:$0xf]
    %v254 = vld [vmem:[#allocation5 + $0xa4] sm:$0xf]
    %v255 = vld [vmem:[#allocation5 + $0xa8] sm:$0xf]
    %v256 = vld [vmem:[#allocation5 + $0xac] sm:$0xf]
    %v257 = vld [vmem:[#allocation5 + $0xb0] sm:$0xf]
    %v258 = vld [vmem:[#allocation5 + $0xb4] sm:$0xf]
    %v259 = vld [vmem:[#allocation5 + $0xb8] sm:$0xf]
    %v260 = vld [vmem:[#allocation5 + $0xbc] sm:$0xf]
    %v261 = vld [vmem:[#allocation5 + $0xc0] sm:$0xf]
    %v262 = vld [vmem:[#allocation5 + $0xc4] sm:$0xf]
    %v263 = vld [vmem:[#allocation5 + $0xc8] sm:$0xf]
    %v264 = vld [vmem:[#allocation5 + $0xcc] sm:$0xf]
    %v265 = vld [vmem:[#allocation5 + $0xd0] sm:$0xf]
    %v266 = vld [vmem:[#allocation5 + $0xd4] sm:$0xf]
    %v267 = vld [vmem:[#allocation5 + $0xd8] sm:$0xf]
    %v268 = vld [vmem:[#allocation5 + $0xdc] sm:$0xf]
    %v269 = vld [vmem:[#allocation5 + $0xe0] sm:$0xf]
    %v270 = vld [vmem:[#allocation5 + $0xe4] sm:$0xf]
    %v271 = vld [vmem:[#allocation5 + $0xe8] sm:$0xf]
    %v272 = vld [vmem:[#allocation5 + $0xec] sm:$0xf]
    %v273 = vld [vmem:[#allocation5 + $0xf0] sm:$0xf]
    %v274 = vld [vmem:[#allocation5 + $0xf4] sm:$0xf]
    %v275 = vld [vmem:[#allocation5 + $0xf8] sm:$0xf]
    %v276 = vld [vmem:[#allocation5 + $0xfc] sm:$0xf]
    %v277 = vld [vmem:[#allocation5 + $0x100] sm:$0xf]
    %v278 = vld [vmem:[#allocation5 + $0x104] sm:$0xf]
    %v279 = vld [vmem:[#allocation5 + $0x108] sm:$0xf]
    %v280 = vld [vmem:[#allocation5 + $0x10c] sm:$0xf]
    %v281 = vld [vmem:[#allocation5 + $0x110] sm:$0xf]
    %v282 = vld [vmem:[#allocation5 + $0x114] sm:$0xf]
    %v283 = vld [vmem:[#allocation5 + $0x118] sm:$0xf]
    %v284 = vld [vmem:[#allocation5 + $0x11c] sm:$0xf]
    %v285 = vld [vmem:[#allocation5 + $0x120] sm:$0xf]
    %v286 = vld [vmem:[#allocation5 + $0x124] sm:$0xf]
    %v287 = vld [vmem:[#allocation5 + $0x128] sm:$0xf]
    %v288 = vld [vmem:[#allocation5 + $0x12c] sm:$0xf]
    %v289 = vld [vmem:[#allocation5 + $0x130] sm:$0xf]
    %v290 = vld [vmem:[#allocation5 + $0x134] sm:$0xf]
    %v291 = vld [vmem:[#allocation5 + $0x138] sm:$0xf]
    %v292 = vld [vmem:[#allocation5 + $0x13c] sm:$0xf]
    %v293 = vld [vmem:[#allocation5 + $0x140] sm:$0xf]
    %v294 = vld [vmem:[#allocation5 + $0x144] sm:$0xf]
    %v295 = vld [vmem:[#allocation5 + $0x148] sm:$0xf]
    %v296 = vld [vmem:[#allocation5 + $0x14c] sm:$0xf]
    %v297 = vld [vmem:[#allocation5 + $0x150] sm:$0xf]
    %v298 = vld [vmem:[#allocation5 + $0x154] sm:$0xf]
    %v299 = vld [vmem:[#allocation5 + $0x158] sm:$0xf]
    %v300 = vld [vmem:[#allocation5 + $0x15c] sm:$0xf]
    %v301 = vld [vmem:[#allocation5 + $0x160] sm:$0xf]
    %v302 = vld [vmem:[#allocation5 + $0x164] sm:$0xf]
    %v303 = vld [vmem:[#allocation5 + $0x168] sm:$0xf]
    %v304 = vld [vmem:[#allocation5 + $0x16c] sm:$0xf]
    %v305 = vld [vmem:[#allocation5 + $0x170] sm:$0xf]
    %v306 = vld [vmem:[#allocation5 + $0x174] sm:$0xf]
    %v307 = vld [vmem:[#allocation5 + $0x178] sm:$0xf]
    %v308 = vld [vmem:[#allocation5 + $0x17c] sm:$0xf]
    %v309 = vld [vmem:[#allocation5 + $0x180] sm:$0xf]
    %v310 = vld [vmem:[#allocation5 + $0x184] sm:$0xf]
    %v311 = vld [vmem:[#allocation5 + $0x188] sm:$0xf]
    %v312 = vld [vmem:[#allocation5 + $0x18c] sm:$0xf]
    %v313 = vld [vmem:[#allocation5 + $0x190] sm:$0xf]
    %v314 = vld [vmem:[#allocation5 + $0x194] sm:$0xf]
    %v315 = vld [vmem:[#allocation5 + $0x198] sm:$0xf]
    %v316 = vld [vmem:[#allocation5 + $0x19c] sm:$0xf]
    %v317 = vld [vmem:[#allocation5 + $0x1a0] sm:$0xf]
    %v318 = vld [vmem:[#allocation5 + $0x1a4] sm:$0xf]
    %v319 = vld [vmem:[#allocation5 + $0x1a8] sm:$0xf]
    %v320 = vld [vmem:[#allocation5 + $0x1ac] sm:$0xf]
    %v321 = vld [vmem:[#allocation5 + $0x1b0] sm:$0xf]
    %v322 = vld [vmem:[#allocation5 + $0x1b4] sm:$0xf]
    %v323 = vld [vmem:[#allocation5 + $0x1b8] sm:$0xf]
    %v324 = vld [vmem:[#allocation5 + $0x1bc] sm:$0xf]
    %v325 = vld [vmem:[#allocation5 + $0x1c0] sm:$0xf]
    %v326 = vld [vmem:[#allocation5 + $0x1c4] sm:$0xf]
    %v327 = vld [vmem:[#allocation5 + $0x1c8] sm:$0xf]
    %v328 = vld [vmem:[#allocation5 + $0x1cc] sm:$0xf]
    %v329 = vld [vmem:[#allocation5 + $0x1d0] sm:$0xf]
    %v330 = vld [vmem:[#allocation5 + $0x1d4] sm:$0xf]
    %v331 = vld [vmem:[#allocation5 + $0x1d8] sm:$0xf]
    %v332 = vld [vmem:[#allocation5 + $0x1dc] sm:$0xf]
    %v333 = vld [vmem:[#allocation5 + $0x1e0] sm:$0xf]
    %v334 = vld [vmem:[#allocation5 + $0x1e4] sm:$0xf]
    %v335 = vld [vmem:[#allocation5 + $0x1e8] sm:$0xf]
    %v336 = vld [vmem:[#allocation5 + $0x1ec] sm:$0xf]
    %v337 = vld [vmem:[#allocation5 + $0x1f0] sm:$0xf]
    %v338 = vld [vmem:[#allocation5 + $0x1f4] sm:$0xf]
    %v339 = vld [vmem:[#allocation5 + $0x1f8] sm:$0xf]
    %v340 = vld [vmem:[#allocation5 + $0x1fc] sm:$0xf]
    %v341 = vld [vmem:[#allocation5 + $0x200] sm:$0xf]
    %v342 = vld [vmem:[#allocation5 + $0x204] sm:$0xf]
    %v343 = vld [vmem:[#allocation5 + $0x208] sm:$0xf]
    %v344 = vld [vmem:[#allocation5 + $0x20c] sm:$0xf]
    %v345 = vld [vmem:[#allocation5 + $0x210] sm:$0xf]
    %v346 = vld [vmem:[#allocation5 + $0x214] sm:$0xf]
    %v347 = vld [vmem:[#allocation5 + $0x218] sm:$0xf]
    %v348 = vld [vmem:[#allocation5 + $0x21c] sm:$0xf]
    %v349 = vld [vmem:[#allocation5 + $0x220] sm:$0xf]
    %v350 = vld [vmem:[#allocation5 + $0x224] sm:$0xf]
    %v351 = vld [vmem:[#allocation5 + $0x228] sm:$0xf]
    %v352 = vld [vmem:[#allocation5 + $0x22c] sm:$0xf]
    %v353 = vld [vmem:[#allocation5 + $0x230] sm:$0xf]
    %v354 = vld [vmem:[#allocation5 + $0x234] sm:$0xf]
    %v355 = vld [vmem:[#allocation5 + $0x238] sm:$0xf]
    %v356 = vld [vmem:[#allocation5 + $0x23c] sm:$0xf]
    %v501 = vunpack.c.l.b16 %v213
    %v502 = vunpack.c.l.b16 %v214
    %v503 = vunpack.c.l.b16 %v215
    %v504 = vunpack.c.l.b16 %v216
    %v505 = vunpack.c.l.b16 %v217
    %v506 = vunpack.c.l.b16 %v218
    %v507 = vunpack.c.l.b16 %v219
    %v508 = vunpack.c.l.b16 %v220
    %v509 = vunpack.c.l.b16 %v221
    %v510 = vunpack.c.l.b16 %v222
    %v511 = vunpack.c.l.b16 %v223
    %v512 = vunpack.c.l.b16 %v224
    %v513 = vunpack.c.l.b16 %v225
    %v514 = vunpack.c.l.b16 %v226
    %v515 = vunpack.c.l.b16 %v227
    %v516 = vunpack.c.l.b16 %v228
    %v517 = vunpack.c.l.b16 %v229
    %v518 = vunpack.c.l.b16 %v230
    %v519 = vunpack.c.l.b16 %v231
    %v520 = vunpack.c.l.b16 %v232
    %v521 = vunpack.c.l.b16 %v233
    %v522 = vunpack.c.l.b16 %v234
    %v523 = vunpack.c.l.b16 %v235
    %v524 = vunpack.c.l.b16 %v236
    %v525 = vunpack.c.l.b16 %v237
    %v526 = vunpack.c.l.b16 %v238
    %v527 = vunpack.c.l.b16 %v239
    %v528 = vunpack.c.l.b16 %v240
    %v529 = vunpack.c.l.b16 %v241
    %v530 = vunpack.c.l.b16 %v242
    %v531 = vunpack.c.l.b16 %v243
    %v532 = vunpack.c.l.b16 %v244
    %v533 = vunpack.c.l.b16 %v245
    %v534 = vunpack.c.l.b16 %v246
    %v535 = vunpack.c.l.b16 %v247
    %v536 = vunpack.c.l.b16 %v248
    %v537 = vunpack.c.l.b16 %v249
    %v538 = vunpack.c.l.b16 %v250
    %v539 = vunpack.c.l.b16 %v251
    %v540 = vunpack.c.l.b16 %v252
    %v541 = vunpack.c.l.b16 %v253
    %v542 = vunpack.c.l.b16 %v254
    %v543 = vunpack.c.l.b16 %v255
    %v544 = vunpack.c.l.b16 %v256
    %v545 = vunpack.c.l.b16 %v257
    %v546 = vunpack.c.l.b16 %v258
    %v547 = vunpack.c.l.b16 %v259
    %v548 = vunpack.c.l.b16 %v260
    %v549 = vunpack.c.l.b16 %v261
    %v550 = vunpack.c.l.b16 %v262
    %v551 = vunpack.c.l.b16 %v263
    %v552 = vunpack.c.l.b16 %v264
    %v553 = vunpack.c.l.b16 %v265
    %v554 = vunpack.c.l.b16 %v266
    %v555 = vunpack.c.l.b16 %v267
    %v556 = vunpack.c.l.b16 %v268
    %v557 = vunpack.c.l.b16 %v269
    %v558 = vunpack.c.l.b16 %v270
    %v559 = vunpack.c.l.b16 %v271
    %v560 = vunpack.c.l.b16 %v272
    %v561 = vunpack.c.l.b16 %v273
    %v562 = vunpack.c.l.b16 %v274
    %v563 = vunpack.c.l.b16 %v275
    %v564 = vunpack.c.l.b16 %v276
    %v565 = vunpack.c.l.b16 %v277
    %v566 = vunpack.c.l.b16 %v278
    %v567 = vunpack.c.l.b16 %v279
    %v568 = vunpack.c.l.b16 %v280
    %v569 = vunpack.c.l.b16 %v281
    %v570 = vunpack.c.l.b16 %v282
    %v571 = vunpack.c.l.b16 %v283
    %v572 = vunpack.c.l.b16 %v284
    %v573 = vunpack.c.l.b16 %v285
    %v574 = vunpack.c.l.b16 %v286
    %v575 = vunpack.c.l.b16 %v287
    %v576 = vunpack.c.l.b16 %v288
    %v577 = vunpack.c.l.b16 %v289
    %v578 = vunpack.c.l.b16 %v290
    %v579 = vunpack.c.l.b16 %v291
    %v580 = vunpack.c.l.b16 %v292
    %v581 = vunpack.c.l.b16 %v293
    %v582 = vunpack.c.l.b16 %v294
    %v583 = vunpack.c.l.b16 %v295
    %v584 = vunpack.c.l.b16 %v296
    %v585 = vunpack.c.l.b16 %v297
    %v586 = vunpack.c.l.b16 %v298
    %v587 = vunpack.c.l.b16 %v299
    %v588 = vunpack.c.l.b16 %v300
    %v589 = vunpack.c.l.b16 %v301
    %v590 = vunpack.c.l.b16 %v302
    %v591 = vunpack.c.l.b16 %v303
    %v592 = vunpack.c.l.b16 %v304
    %v593 = vunpack.c.l.b16 %v305
    %v594 = vunpack.c.l.b16 %v306
    %v595 = vunpack.c.l.b16 %v307
    %v596 = vunpack.c.l.b16 %v308
    %v597 = vunpack.c.l.b16 %v309
    %v598 = vunpack.c.l.b16 %v310
    %v599 = vunpack.c.l.b16 %v311
    %v600 = vunpack.c.l.b16 %v312
    %v601 = vunpack.c.l.b16 %v313
    %v602 = vunpack.c.l.b16 %v314
    %v603 = vunpack.c.l.b16 %v315
    %v604 = vunpack.c.l.b16 %v316
    %v605 = vunpack.c.l.b16 %v317
    %v606 = vunpack.c.l.b16 %v318
    %v607 = vunpack.c.l.b16 %v319
    %v608 = vunpack.c.l.b16 %v320
    %v609 = vunpack.c.l.b16 %v321
    %v610 = vunpack.c.l.b16 %v322
    %v611 = vunpack.c.l.b16 %v323
    %v612 = vunpack.c.l.b16 %v324
    %v613 = vunpack.c.l.b16 %v325
    %v614 = vunpack.c.l.b16 %v326
    %v615 = vunpack.c.l.b16 %v327
    %v616 = vunpack.c.l.b16 %v328
    %v617 = vunpack.c.l.b16 %v329
    %v618 = vunpack.c.l.b16 %v330
    %v619 = vunpack.c.l.b16 %v331
    %v620 = vunpack.c.l.b16 %v332
    %v621 = vunpack.c.l.b16 %v333
    %v622 = vunpack.c.l.b16 %v334
    %v623 = vunpack.c.l.b16 %v335
    %v624 = vunpack.c.l.b16 %v336
    %v625 = vunpack.c.l.b16 %v337
    %v626 = vunpack.c.l.b16 %v338
    %v627 = vunpack.c.l.b16 %v339
    %v628 = vunpack.c.l.b16 %v340
    %v629 = vunpack.c.l.b16 %v341
    %v630 = vunpack.c.l.b16 %v342
    %v631 = vunpack.c.l.b16 %v343
    %v632 = vunpack.c.l.b16 %v344
    %v633 = vunpack.c.l.b16 %v345
    %v634 = vunpack.c.l.b16 %v346
    %v635 = vunpack.c.l.b16 %v347
    %v636 = vunpack.c.l.b16 %v348
    %v637 = vunpack.c.l.b16 %v349
    %v638 = vunpack.c.l.b16 %v350
    %v639 = vunpack.c.l.b16 %v351
    %v640 = vunpack.c.l.b16 %v352
    %v641 = vunpack.c.l.b16 %v353
    %v642 = vunpack.c.l.b16 %v354
    %v643 = vunpack.c.l.b16 %v355
    %v644 = vunpack.c.l.b16 %v356
    %v645 = vpack.c.b16 %v502, %v501
    %v646 = vpack.c.b16 %v504, %v503
    %v647 = vpack.c.b16 %v506, %v505
    %v648 = vpack.c.b16 %v508, %v507
    %v649 = vpack.c.b16 %v510, %v509
    %v650 = vpack.c.b16 %v512, %v511
    %v651 = vpack.c.b16 %v514, %v513
    %v652 = vpack.c.b16 %v516, %v515
    %v653 = vpack.c.b16 %v518, %v517
    %v654 = vpack.c.b16 %v520, %v519
    %v655 = vpack.c.b16 %v522, %v521
    %v656 = vpack.c.b16 %v524, %v523
    %v657 = vpack.c.b16 %v526, %v525
    %v658 = vpack.c.b16 %v528, %v527
    %v659 = vpack.c.b16 %v530, %v529
    %v660 = vpack.c.b16 %v532, %v531
    %v661 = vpack.c.b16 %v534, %v533
    %v662 = vpack.c.b16 %v536, %v535
    %v663 = vpack.c.b16 %v538, %v537
    %v664 = vpack.c.b16 %v540, %v539
    %v665 = vpack.c.b16 %v542, %v541
    %v666 = vpack.c.b16 %v544, %v543
    %v667 = vpack.c.b16 %v546, %v545
    %v668 = vpack.c.b16 %v548, %v547
    %v669 = vpack.c.b16 %v550, %v549
    %v670 = vpack.c.b16 %v552, %v551
    %v671 = vpack.c.b16 %v554, %v553
    %v672 = vpack.c.b16 %v556, %v555
    %v673 = vpack.c.b16 %v558, %v557
    %v674 = vpack.c.b16 %v560, %v559
    %v675 = vpack.c.b16 %v562, %v561
    %v676 = vpack.c.b16 %v564, %v563
    %v677 = vpack.c.b16 %v566, %v565
    %v678 = vpack.c.b16 %v568, %v567
    %v679 = vpack.c.b16 %v570, %v569
    %v680 = vpack.c.b16 %v572, %v571
    %v681 = vpack.c.b16 %v574, %v573
    %v682 = vpack.c.b16 %v576, %v575
    %v683 = vpack.c.b16 %v578, %v577
    %v684 = vpack.c.b16 %v580, %v579
    %v685 = vpack.c.b16 %v582, %v581
    %v686 = vpack.c.b16 %v584, %v583
    %v687 = vpack.c.b16 %v586, %v585
    %v688 = vpack.c.b16 %v588, %v587
    %v689 = vpack.c.b16 %v590, %v589
    %v690 = vpack.c.b16 %v592, %v591
    %v691 = vpack.c.b16 %v594, %v593
    %v692 = vpack.c.b16 %v596, %v595
    %v693 = vpack.c.b16 %v598, %v597
    %v694 = vpack.c.b16 %v600, %v599
    %v695 = vpack.c.b16 %v602, %v601
    %v696 = vpack.c.b16 %v604, %v603
    %v697 = vpack.c.b16 %v606, %v605
    %v698 = vpack.c.b16 %v608, %v607
    %v699 = vpack.c.b16 %v610, %v609
    %v700 = vpack.c.b16 %v612, %v611
    %v701 = vpack.c.b16 %v614, %v613
    %v702 = vpack.c.b16 %v616, %v615
    %v703 = vpack.c.b16 %v618, %v617
    %v704 = vpack.c.b16 %v620, %v619
    %v705 = vpack.c.b16 %v622, %v621
    %v706 = vpack.c.b16 %v624, %v623
    %v707 = vpack.c.b16 %v626, %v625
    %v708 = vpack.c.b16 %v628, %v627
    %v709 = vpack.c.b16 %v630, %v629
    %v710 = vpack.c.b16 %v632, %v631
    %v711 = vpack.c.b16 %v634, %v633
    %v712 = vpack.c.b16 %v636, %v635
    %v713 = vpack.c.b16 %v638, %v637
    %v714 = vpack.c.b16 %v640, %v639
    %v715 = vpack.c.b16 %v642, %v641
    %v716 = vpack.c.b16 %v644, %v643
    %789 = vmatprep.subr.bf16.mxu0 0
    %790 = vmatpush1.bf16.msra.mxu0 %v645
    %791 = vmatprep.subr.bf16.mxu0 0
    %792 = vmatpush1.bf16.msra.mxu0 %v646
    %793 = vmatprep.subr.bf16.mxu0 0
    %794 = vmatpush1.bf16.msra.mxu0 %v647
    %795 = vmatprep.subr.bf16.mxu0 0
    %796 = vmatpush1.bf16.msra.mxu0 %v648
    %797 = vmatprep.subr.bf16.mxu0 0
    %798 = vmatpush1.bf16.msra.mxu0 %v649
    %799 = vmatprep.subr.bf16.mxu0 0
    %800 = vmatpush1.bf16.msra.mxu0 %v650
    %801 = vmatprep.subr.bf16.mxu0 0
    %802 = vmatpush1.bf16.msra.mxu0 %v651
    %803 = vmatprep.subr.bf16.mxu0 0
    %804 = vmatpush1.bf16.msra.mxu0 %v652
    %805 = vmatprep.subr.bf16.mxu0 0
    %806 = vmatpush1.bf16.msra.mxu0 %v653
    %807 = vmatprep.subr.bf16.mxu0 0
    %808 = vmatpush1.bf16.msra.mxu0 %v654
    %809 = vmatprep.subr.bf16.mxu0 0
    %810 = vmatpush1.bf16.msra.mxu0 %v655
    %811 = vmatprep.subr.bf16.mxu0 0
    %812 = vmatpush1.bf16.msra.mxu0 %v656
    %813 = vmatprep.subr.bf16.mxu0 0
    %814 = vmatpush1.bf16.msra.mxu0 %v657
    %815 = vmatprep.subr.bf16.mxu0 0
    %816 = vmatpush1.bf16.msra.mxu0 %v658
    %817 = vmatprep.subr.bf16.mxu0 0
    %818 = vmatpush1.bf16.msra.mxu0 %v659
    %819 = vmatprep.subr.bf16.mxu0 0
    %820 = vmatpush1.bf16.msra.mxu0 %v660
    %821 = vmatprep.mubr.bf16.mxu0 %v205
    %822 = vmatmul.mubr.bf16.gmra.mrb[0].mxu0 %v204
    %v823 = vpop.f32.mrb[0].mxu0
    %v824 = vadd.f32 0.0, %v823
    %v825 = vpop.f32.mrb[0].mxu0
    %v826 = vpop.f32.mrb[0].mxu0
    %v827 = vpop.f32.mrb[0].mxu0
    %828 = vdwg.mxu0
    %829 = vmatprep.subr.bf16.mxu0 0
    %830 = vmatpush1.bf16.msra.mxu0 %v661
    %831 = vmatprep.subr.bf16.mxu0 0
    %832 = vmatpush1.bf16.msra.mxu0 %v662
    %833 = vmatprep.subr.bf16.mxu0 0
    %834 = vmatpush1.bf16.msra.mxu0 %v663
    %835 = vmatprep.subr.bf16.mxu0 0
    %836 = vmatpush1.bf16.msra.mxu0 %v664
    %837 = vmatprep.subr.bf16.mxu0 0
    %838 = vmatpush1.bf16.msra.mxu0 %v665
    %839 = vmatprep.subr.bf16.mxu0 0
    %840 = vmatpush1.bf16.msra.mxu0 %v666
    %841 = vmatprep.subr.bf16.mxu0 0
    %842 = vmatpush1.bf16.msra.mxu0 %v667
    %843 = vmatprep.subr.bf16.mxu0 0
    %844 = vmatpush1.bf16.msra.mxu0 %v668
    %845 = vmatprep.subr.bf16.mxu0 0
    %846 = vmatpush1.bf16.msra.mxu0 %v669
    %847 = vmatprep.subr.bf16.mxu0 0
    %848 = vmatpush1.bf16.msra.mxu0 %v670
    %849 = vmatprep.subr.bf16.mxu0 0
    %850 = vmatpush1.bf16.msra.mxu0 %v671
    %851 = vmatprep.subr.bf16.mxu0 0
    %852 = vmatpush1.bf16.msra.mxu0 %v672
    %853 = vmatprep.subr.bf16.mxu0 0
    %854 = vmatpush1.bf16.msra.mxu0 %v673
    %855 = vmatprep.subr.bf16.mxu0 0
    %856 = vmatpush1.bf16.msra.mxu0 %v674
    %857 = vmatprep.subr.bf16.mxu0 0
    %858 = vmatpush1.bf16.msra.mxu0 %v675
    %859 = vmatprep.subr.bf16.mxu0 0
    %860 = vmatpush1.bf16.msra.mxu0 %v676
    %861 = vmatprep.mubr.bf16.mxu0 %v207
    %862 = vmatmul.mubr.bf16.gmra.mrb[0].mxu0 %v206
    %v863 = vpop.f32.mrb[0].mxu0
    %v864 = vadd.f32 %v824, %v863
    %v865 = vpop.f32.mrb[0].mxu0
    %v866 = vpop.f32.mrb[0].mxu0
    %v867 = vpop.f32.mrb[0].mxu0
    %868 = vdwg.mxu0
    %869 = vmatprep.subr.bf16.mxu0 0
    %870 = vmatpush1.bf16.msra.mxu0 %v677
    %871 = vmatprep.subr.bf16.mxu0 0
    %872 = vmatpush1.bf16.msra.mxu0 %v678
    %873 = vmatprep.subr.bf16.mxu0 0
    %874 = vmatpush1.bf16.msra.mxu0 %v679
    %875 = vmatprep.subr.bf16.mxu0 0
    %876 = vmatpush1.bf16.msra.mxu0 %v680
    %877 = vmatprep.subr.bf16.mxu0 0
    %878 = vmatpush1.bf16.msra.mxu0 %v681
    %879 = vmatprep.subr.bf16.mxu0 0
    %880 = vmatpush1.bf16.msra.mxu0 %v682
    %881 = vmatprep.subr.bf16.mxu0 0
    %882 = vmatpush1.bf16.msra.mxu0 %v683
    %883 = vmatprep.subr.bf16.mxu0 0
    %884 = vmatpush1.bf16.msra.mxu0 %v684
    %885 = vmatprep.subr.bf16.mxu0 0
    %886 = vmatpush1.bf16.msra.mxu0 %v685
    %887 = vmatprep.subr.bf16.mxu0 0
    %888 = vmatpush1.bf16.msra.mxu0 %v686
    %889 = vmatprep.subr.bf16.mxu0 0
    %890 = vmatpush1.bf16.msra.mxu0 %v687
    %891 = vmatprep.subr.bf16.mxu0 0
    %892 = vmatpush1.bf16.msra.mxu0 %v688
    %893 = vmatprep.subr.bf16.mxu0 0
    %894 = vmatpush1.bf16.msra.mxu0 %v689
    %895 = vmatprep.subr.bf16.mxu0 0
    %896 = vmatpush1.bf16.msra.mxu0 %v690
    %897 = vmatprep.subr.bf16.mxu0 0
    %898 = vmatpush1.bf16.msra.mxu0 %v691
    %899 = vmatprep.subr.bf16.mxu0 0
    %900 = vmatpush1.bf16.msra.mxu0 %v692
    %901 = vmatprep.mubr.bf16.mxu0 %v209
    %902 = vmatmul.mubr.bf16.gmra.mrb[0].mxu0 %v208
    %v903 = vpop.f32.mrb[0].mxu0
    %v904 = vadd.f32 %v864, %v903
    %v905 = vpop.f32.mrb[0].mxu0
    %v906 = vpop.f32.mrb[0].mxu0
    %v907 = vpop.f32.mrb[0].mxu0
    %908 = vdwg.mxu0
    %909 = vmatprep.subr.bf16.mxu0 0
    %910 = vmatpush1.bf16.msra.mxu0 %v693
    %911 = vmatprep.subr.bf16.mxu0 0
    %912 = vmatpush1.bf16.msra.mxu0 %v694
    %913 = vmatprep.subr.bf16.mxu0 0
    %914 = vmatpush1.bf16.msra.mxu0 %v695
    %915 = vmatprep.subr.bf16.mxu0 0
    %916 = vmatpush1.bf16.msra.mxu0 %v696
    %917 = vmatprep.subr.bf16.mxu0 0
    %918 = vmatpush1.bf16.msra.mxu0 %v697
    %919 = vmatprep.subr.bf16.mxu0 0
    %920 = vmatpush1.bf16.msra.mxu0 %v698
    %921 = vmatprep.subr.bf16.mxu0 0
    %922 = vmatpush1.bf16.msra.mxu0 %v699
    %923 = vmatprep.subr.bf16.mxu0 0
    %924 = vmatpush1.bf16.msra.mxu0 %v700
    %925 = vmatprep.subr.bf16.mxu0 0
    %926 = vmatpush1.bf16.msra.mxu0 %v701
    %927 = vmatprep.subr.bf16.mxu0 0
    %928 = vmatpush1.bf16.msra.mxu0 %v702
    %929 = vmatprep.subr.bf16.mxu0 0
    %930 = vmatpush1.bf16.msra.mxu0 %v703
    %931 = vmatprep.subr.bf16.mxu0 0
    %932 = vmatpush1.bf16.msra.mxu0 %v704
    %933 = vmatprep.subr.bf16.mxu0 0
    %934 = vmatpush1.bf16.msra.mxu0 %v705
    %935 = vmatprep.subr.bf16.mxu0 0
    %936 = vmatpush1.bf16.msra.mxu0 %v706
    %937 = vmatprep.subr.bf16.mxu0 0
    %938 = vmatpush1.bf16.msra.mxu0 %v707
    %939 = vmatprep.subr.bf16.mxu0 0
    %940 = vmatpush1.bf16.msra.mxu0 %v708
    %941 = vmatprep.mubr.bf16.mxu0 %v211
    %942 = vmatmul.mubr.bf16.gmra.mrb[0].mxu0 %v210
    %v943 = vpop.f32.mrb[0].mxu0
    %v944 = vadd.f32 %v904, %v943
    %v945 = vpop.f32.mrb[0].mxu0
    %v946 = vpop.f32.mrb[0].mxu0
    %v947 = vpop.f32.mrb[0].mxu0
    %948 = vdwg.mxu0
    %949 = vmatprep.subr.bf16.mxu0 0
    %950 = vmatpush1.bf16.msra.mxu0 %v709
    %951 = vmatprep.subr.bf16.mxu0 0
    %952 = vmatpush1.bf16.msra.mxu0 %v710
    %953 = vmatprep.subr.bf16.mxu0 0
    %954 = vmatpush1.bf16.msra.mxu0 %v711
    %955 = vmatprep.subr.bf16.mxu0 0
    %956 = vmatpush1.bf16.msra.mxu0 %v712
    %957 = vmatprep.subr.bf16.mxu0 0
    %958 = vmatpush1.bf16.msra.mxu0 %v713
    %959 = vmatprep.subr.bf16.mxu0 0
    %960 = vmatpush1.bf16.msra.mxu0 %v714
    %961 = vmatprep.subr.bf16.mxu0 0
    %962 = vmatpush1.bf16.msra.mxu0 %v715
    %963 = vmatprep.subr.bf16.mxu0 0
    %964 = vmatpush1.bf16.msra.mxu0 %v716
    %965 = vmatprep.subr.bf16.mxu0 0
    %966 = vmatpush1.bf16.msra.mxu0 0
    %967 = vmatprep.subr.bf16.mxu0 0
    %968 = vmatpush1.bf16.msra.mxu0 0
    %969 = vmatprep.subr.bf16.mxu0 0
    %970 = vmatpush1.bf16.msra.mxu0 0
    %971 = vmatprep.subr.bf16.mxu0 0
    %972 = vmatpush1.bf16.msra.mxu0 0
    %973 = vmatprep.subr.bf16.mxu0 0
    %974 = vmatpush1.bf16.msra.mxu0 0
    %975 = vmatprep.subr.bf16.mxu0 0
    %976 = vmatpush1.bf16.msra.mxu0 0
    %977 = vmatprep.subr.bf16.mxu0 0
    %978 = vmatpush1.bf16.msra.mxu0 0
    %979 = vmatprep.subr.bf16.mxu0 0
    %980 = vmatpush1.bf16.msra.mxu0 0
    %981 = vmatprep.mubr.bf16.mxu0 0
    %982 = vmatmul.mubr.bf16.gmra.mrb[0].mxu0 %v212
    %v983 = vpop.f32.mrb[0].mxu0
    %v984 = vadd.f32 %v944, %v983
    %v985 = vpop.f32.mrb[0].mxu0
    %v986 = vpop.f32.mrb[0].mxu0
    %v987 = vpop.f32.mrb[0].mxu0
    %988 = vdwg.mxu0
    %v989 = vmul.f32 %v984, 2.5
    %v990 = vsub.f32 %v989, -5.5
    %v991 = vsub.f32 %v989, -4.5
    %v992 = vsub.f32 %v989, -3.5
    %v993 = vsub.f32 %v989, -2.5
    %v994 = vsub.f32 %v989, -1.5
    %v995 = vsub.f32 %v989, -0.5
    %v996 = vsub.f32 %v989, 0.5
    %v997 = vsub.f32 %v989, 1.5
    %v998 = vsub.f32 %v989, 2.5
    %v999 = vsub.f32 %v989, 3.5
    %v1000 = vsub.f32 %v989, 4.5
    %v1001 = vsub.f32 %v989, 5.5
    %vm1002 = vcmp.ge.f32.partialorder %v990, 0.0
    %v1003 = vsel %vm1002, 1, 0
    %v1004 = vcvt.s32.f32 %v1003
    %vm1005 = vcmp.ge.f32.partialorder %v991, 0.0
    %v1006 = vsel %vm1005, 1, 0
    %v1007 = vcvt.s32.f32 %v1006
    %vm1008 = vcmp.ge.f32.partialorder %v992, 0.0
    %v1009 = vsel %vm1008, 1, 0
    %v1010 = vcvt.s32.f32 %v1009
    %vm1011 = vcmp.ge.f32.partialorder %v993, 0.0
    %v1012 = vsel %vm1011, 1, 0
    %v1013 = vcvt.s32.f32 %v1012
    %vm1014 = vcmp.ge.f32.partialorder %v994, 0.0
    %v1015 = vsel %vm1014, 1, 0
    %v1016 = vcvt.s32.f32 %v1015
    %vm1017 = vcmp.ge.f32.partialorder %v995, 0.0
    %v1018 = vsel %vm1017, 1, 0
    %v1019 = vcvt.s32.f32 %v1018
    %vm1020 = vcmp.ge.f32.partialorder %v996, 0.0
    %v1021 = vsel %vm1020, 1, 0
    %v1022 = vcvt.s32.f32 %v1021
    %vm1023 = vcmp.ge.f32.partialorder %v997, 0.0
    %v1024 = vsel %vm1023, 1, 0
    %v1025 = vcvt.s32.f32 %v1024
    %vm1026 = vcmp.ge.f32.partialorder %v998, 0.0
    %v1027 = vsel %vm1026, 1, 0
    %v1028 = vcvt.s32.f32 %v1027
    %vm1029 = vcmp.ge.f32.partialorder %v999, 0.0
    %v1030 = vsel %vm1029, 1, 0
    %v1031 = vcvt.s32.f32 %v1030
    %vm1032 = vcmp.ge.f32.partialorder %v1000, 0.0
    %v1033 = vsel %vm1032, 1, 0
    %v1034 = vcvt.s32.f32 %v1033
    %vm1035 = vcmp.ge.f32.partialorder %v1001, 0.0
    %v1036 = vsel %vm1035, 1, 0
    %v1037 = vcvt.s32.f32 %v1036
    %v1038 = vsub.f32 %v1004, %v1007
    %v1039 = vsub.f32 %v1007, %v1010
    %v1040 = vsub.f32 %v1010, %v1013
    %v1041 = vsub.f32 %v1013, %v1016
    %v1042 = vsub.f32 %v1016, %v1019
    %v1043 = vsub.f32 %v1019, %v1022
    %v1044 = vsub.f32 %v1022, %v1025
    %v1045 = vsub.f32 %v1025, %v1028
    %v1046 = vsub.f32 %v1028, %v1031
    %v1047 = vsub.f32 %v1031, %v1034
    %v1048 = vsub.f32 %v1034, %v1037
    %v1049 = vmul.f32 %v990, %v1038
    %v1050 = vmul.f32 %v992, %v1039
    %v1051 = vsub.f32 %v1049, %v1050
    %v1052 = vmul.f32 %v991, %v1039
    %v1053 = vmul.f32 %v993, %v1040
    %v1054 = vsub.f32 %v1052, %v1053
    %v1055 = vmul.f32 %v992, %v1040
    %v1056 = vmul.f32 %v994, %v1041
    %v1057 = vsub.f32 %v1055, %v1056
    %v1058 = vmul.f32 %v993, %v1041
    %v1059 = vmul.f32 %v995, %v1042
    %v1060 = vsub.f32 %v1058, %v1059
    %v1061 = vmul.f32 %v994, %v1042
    %v1062 = vmul.f32 %v996, %v1043
    %v1063 = vsub.f32 %v1061, %v1062
    %v1064 = vmul.f32 %v995, %v1043
    %v1065 = vmul.f32 %v997, %v1044
    %v1066 = vsub.f32 %v1064, %v1065
    %v1067 = vmul.f32 %v996, %v1044
    %v1068 = vmul.f32 %v998, %v1045
    %v1069 = vsub.f32 %v1067, %v1068
    %v1070 = vmul.f32 %v997, %v1045
    %v1071 = vmul.f32 %v999, %v1046
    %v1072 = vsub.f32 %v1070, %v1071
    %v1073 = vmul.f32 %v998, %v1046
    %v1074 = vmul.f32 %v1000, %v1047
    %v1075 = vsub.f32 %v1073, %v1074
    %v1076 = vmul.f32 %v999, %v1047
    %v1077 = vmul.f32 %v1001, %v1048
    %v1078 = vsub.f32 %v1076, %v1077
    %v1079 = vmul.f32 %v990, %v1051
    %v1080 = vmul.f32 %v993, %v1054
    %v1081 = vsub.f32 %v1079, %v1080
    %v1082 = vmul.f32 %v991, %v1054
    %v1083 = vmul.f32 %v994, %v1057
    %v1084 = vsub.f32 %v1082, %v1083
    %v1085 = vmul.f32 %v992, %v1057
    %v1086 = vmul.f32 %v995, %v1060
    %v1087 = vsub.f32 %v1085, %v1086
    %v1088 = vmul.f32 %v993, %v1060
    %v1089 = vmul.f32 %v996, %v1063
    %v1090 = vsub.f32 %v1088, %v1089
    %v1091 = vmul.f32 %v994, %v1063
    %v1092 = vmul.f32 %v997, %v1066
    %v1093 = vsub.f32 %v1091, %v1092
    %v1094 = vmul.f32 %v995, %v1066
    %v1095 = vmul.f32 %v998, %v1069
    %v1096 = vsub.f32 %v1094, %v1095
    %v1097 = vmul.f32 %v996, %v1069
    %v1098 = vmul.f32 %v999, %v1072
    %v1099 = vsub.f32 %v1097, %v1098
    %v1100 = vmul.f32 %v997, %v1072
    %v1101 = vmul.f32 %v1000, %v1075
    %v1102 = vsub.f32 %v1100, %v1101
    %v1103 = vmul.f32 %v998, %v1075
    %v1104 = vmul.f32 %v1001, %v1078
    %v1105 = vsub.f32 %v1103, %v1104
    %v1106 = vmul.f32 %v990, %v1081
    %v1107 = vmul.f32 %v994, %v1084
    %v1108 = vsub.f32 %v1106, %v1107
    %v1109 = vmul.f32 %v991, %v1084
    %v1110 = vmul.f32 %v995, %v1087
    %v1111 = vsub.f32 %v1109, %v1110
    %v1112 = vmul.f32 %v992, %v1087
    %v1113 = vmul.f32 %v996, %v1090
    %v1114 = vsub.f32 %v1112, %v1113
    %v1115 = vmul.f32 %v993, %v1090
    %v1116 = vmul.f32 %v997, %v1093
    %v1117 = vsub.f32 %v1115, %v1116
    %v1118 = vmul.f32 %v994, %v1093
    %v1119 = vmul.f32 %v998, %v1096
    %v1120 = vsub.f32 %v1118, %v1119
    %v1121 = vmul.f32 %v995, %v1096
    %v1122 = vmul.f32 %v999, %v1099
    %v1123 = vsub.f32 %v1121, %v1122
    %v1124 = vmul.f32 %v996, %v1099
    %v1125 = vmul.f32 %v1000, %v1102
    %v1126 = vsub.f32 %v1124, %v1125
    %v1127 = vmul.f32 %v997, %v1102
    %v1128 = vmul.f32 %v1001, %v1105
    %v1129 = vsub.f32 %v1127, %v1128
    %v1130 = vxor.u32 %v984, 2147483648
    %v1131 = vmul.f32 %v1130, 1.442695
    %v1132 = vpow.pop %v1131
    %v1133 = vadd.f32 %v1132, 1.0
    %v1134 = vrcp.pop %v1133
    %v1135 = vmul.f32 1.0, %v1134
    %v1136 = vmul.f32 %v984, %v1135
    %v1137 = vpack.c.bf16 %v1136, %v1136
    %v1138 = vpack.c.bf16 %v1108, %v1108
    %v1139 = vpack.c.bf16 %v1111, %v1111
    %v1140 = vpack.c.bf16 %v1114, %v1114
    %v1141 = vpack.c.bf16 %v1117, %v1117
    %v1142 = vpack.c.bf16 %v1120, %v1120
    %v1143 = vpack.c.bf16 %v1123, %v1123
    %v1144 = vpack.c.bf16 %v1126, %v1126
    %v1145 = vpack.c.bf16 %v1129, %v1129
    %v1146 = vld [vmem:[#allocation7] sm:$0xf]
    %v1147 = vld [vmem:[#allocation7 + $0x4] sm:$0xf]
    %v1148 = vld [vmem:[#allocation7 + $0x8] sm:$0xf]
    %v1149 = vld [vmem:[#allocation7 + $0xc] sm:$0xf]
    %v1150 = vld [vmem:[#allocation7 + $0x10] sm:$0xf]
    %v1151 = vld [vmem:[#allocation7 + $0x14] sm:$0xf]
    %v1152 = vld [vmem:[#allocation7 + $0x18] sm:$0xf]
    %v1153 = vld [vmem:[#allocation7 + $0x1c] sm:$0xf]
    %v1154 = vld [vmem:[#allocation7 + $0x20] sm:$0xf]
    %v1155 = vld [vmem:[#allocation7 + $0x24] sm:$0xf]
    %v1156 = vld [vmem:[#allocation7 + $0x28] sm:$0xf]
    %v1157 = vld [vmem:[#allocation7 + $0x2c] sm:$0xf]
    %v1158 = vld [vmem:[#allocation7 + $0x30] sm:$0xf]
    %v1159 = vld [vmem:[#allocation7 + $0x34] sm:$0xf]
    %v1160 = vld [vmem:[#allocation7 + $0x38] sm:$0xf]
    %v1161 = vld [vmem:[#allocation7 + $0x3c] sm:$0xf]
    %v1162 = vld [vmem:[#allocation7 + $0x40] sm:$0xf]
    %v1163 = vld [vmem:[#allocation7 + $0x44] sm:$0xf]
    %v1164 = vld [vmem:[#allocation7 + $0x48] sm:$0xf]
    %v1165 = vld [vmem:[#allocation7 + $0x4c] sm:$0xf]
    %v1166 = vld [vmem:[#allocation7 + $0x50] sm:$0xf]
    %v1167 = vld [vmem:[#allocation7 + $0x54] sm:$0xf]
    %v1168 = vld [vmem:[#allocation7 + $0x58] sm:$0xf]
    %v1169 = vld [vmem:[#allocation7 + $0x5c] sm:$0xf]
    %v1170 = vld [vmem:[#allocation7 + $0x60] sm:$0xf]
    %v1171 = vld [vmem:[#allocation7 + $0x64] sm:$0xf]
    %v1172 = vld [vmem:[#allocation7 + $0x68] sm:$0xf]
    %v1173 = vld [vmem:[#allocation7 + $0x6c] sm:$0xf]
    %v1174 = vld [vmem:[#allocation7 + $0x70] sm:$0xf]
    %v1175 = vld [vmem:[#allocation7 + $0x74] sm:$0xf]
    %v1176 = vld [vmem:[#allocation7 + $0x78] sm:$0xf]
    %v1177 = vld [vmem:[#allocation7 + $0x7c] sm:$0xf]
    %v1178 = vld [vmem:[#allocation7 + $0x80] sm:$0xf]
    %v1179 = vld [vmem:[#allocation7 + $0x84] sm:$0xf]
    %v1180 = vld [vmem:[#allocation7 + $0x88] sm:$0xf]
    %v1181 = vld [vmem:[#allocation7 + $0x8c] sm:$0xf]
    %v1182 = vld [vmem:[#allocation7 + $0x90] sm:$0xf]
    %v1183 = vld [vmem:[#allocation7 + $0x94] sm:$0xf]
    %v1184 = vld [vmem:[#allocation7 + $0x98] sm:$0xf]
    %v1185 = vld [vmem:[#allocation7 + $0x9c] sm:$0xf]
    %v1186 = vld [vmem:[#allocation7 + $0xa0] sm:$0xf]
    %v1187 = vld [vmem:[#allocation7 + $0xa4] sm:$0xf]
    %v1188 = vld [vmem:[#allocation7 + $0xa8] sm:$0xf]
    %v1189 = vld [vmem:[#allocation7 + $0xac] sm:$0xf]
    %v1190 = vld [vmem:[#allocation7 + $0xb0] sm:$0xf]
    %v1191 = vld [vmem:[#allocation7 + $0xb4] sm:$0xf]
    %v1192 = vld [vmem:[#allocation7 + $0xb8] sm:$0xf]
    %v1193 = vld [vmem:[#allocation7 + $0xbc] sm:$0xf]
    %v1194 = vld [vmem:[#allocation7 + $0xc0] sm:$0xf]
    %v1195 = vld [vmem:[#allocation7 + $0xc4] sm:$0xf]
    %v1196 = vld [vmem:[#allocation7 + $0xc8] sm:$0xf]
    %v1197 = vld [vmem:[#allocation7 + $0xcc] sm:$0xf]
    %v1198 = vld [vmem:[#allocation7 + $0xd0] sm:$0xf]
    %v1199 = vld [vmem:[#allocation7 + $0xd4] sm:$0xf]
    %v1200 = vld [vmem:[#allocation7 + $0xd8] sm:$0xf]
    %v1201 = vld [vmem:[#allocation7 + $0xdc] sm:$0xf]
    %v1202 = vld [vmem:[#allocation7 + $0xe0] sm:$0xf]
    %v1203 = vld [vmem:[#allocation7 + $0xe4] sm:$0xf]
    %v1204 = vld [vmem:[#allocation7 + $0xe8] sm:$0xf]
    %v1205 = vld [vmem:[#allocation7 + $0xec] sm:$0xf]
    %v1206 = vld [vmem:[#allocation7 + $0xf0] sm:$0xf]
    %v1207 = vld [vmem:[#allocation7 + $0xf4] sm:$0xf]
    %v1208 = vld [vmem:[#allocation7 + $0xf8] sm:$0xf]
    %v1209 = vld [vmem:[#allocation7 + $0xfc] sm:$0xf]
    %v1210 = vld [vmem:[#allocation7 + $0x100] sm:$0xf]
    %v1211 = vld [vmem:[#allocation7 + $0x104] sm:$0xf]
    %v1212 = vld [vmem:[#allocation7 + $0x108] sm:$0xf]
    %v1213 = vld [vmem:[#allocation7 + $0x10c] sm:$0xf]
    %v1214 = vld [vmem:[#allocation7 + $0x110] sm:$0xf]
    %v1215 = vld [vmem:[#allocation7 + $0x114] sm:$0xf]
    %v1216 = vld [vmem:[#allocation7 + $0x118] sm:$0xf]
    %v1217 = vld [vmem:[#allocation7 + $0x11c] sm:$0xf]
    %v1218 = vld [vmem:[#allocation7 + $0x120] sm:$0xf]
    %v1219 = vld [vmem:[#allocation7 + $0x124] sm:$0xf]
    %v1220 = vld [vmem:[#allocation7 + $0x128] sm:$0xf]
    %v1221 = vld [vmem:[#allocation7 + $0x12c] sm:$0xf]
    %v1222 = vld [vmem:[#allocation7 + $0x130] sm:$0xf]
    %v1223 = vld [vmem:[#allocation7 + $0x134] sm:$0xf]
    %v1224 = vld [vmem:[#allocation7 + $0x138] sm:$0xf]
    %v1225 = vld [vmem:[#allocation7 + $0x13c] sm:$0xf]
    %v1226 = vld [vmem:[#allocation7 + $0x140] sm:$0xf]
    %v1227 = vld [vmem:[#allocation7 + $0x144] sm:$0xf]
    %v1228 = vld [vmem:[#allocation7 + $0x148] sm:$0xf]
    %v1229 = vld [vmem:[#allocation7 + $0x14c] sm:$0xf]
    %v1230 = vld [vmem:[#allocation7 + $0x150] sm:$0xf]
    %v1231 = vld [vmem:[#allocation7 + $0x154] sm:$0xf]
    %v1232 = vld [vmem:[#allocation7 + $0x158] sm:$0xf]
    %v1233 = vld [vmem:[#allocation7 + $0x15c] sm:$0xf]
    %v1234 = vld [vmem:[#allocation7 + $0x160] sm:$0xf]
    %v1235 = vld [vmem:[#allocation7 + $0x164] sm:$0xf]
    %v1236 = vld [vmem:[#allocation7 + $0x168] sm:$0xf]
    %v1237 = vld [vmem:[#allocation7 + $0x16c] sm:$0xf]
    %v1238 = vld [vmem:[#allocation7 + $0x170] sm:$0xf]
    %v1239 = vld [vmem:[#allocation7 + $0x174] sm:$0xf]
    %v1240 = vld [vmem:[#allocation7 + $0x178] sm:$0xf]
    %v1241 = vld [vmem:[#allocation7 + $0x17c] sm:$0xf]
    %v1242 = vld [vmem:[#allocation7 + $0x180] sm:$0xf]
    %v1243 = vld [vmem:[#allocation7 + $0x184] sm:$0xf]
    %v1244 = vld [vmem:[#allocation7 + $0x188] sm:$0xf]
    %v1245 = vld [vmem:[#allocation7 + $0x18c] sm:$0xf]
    %v1246 = vld [vmem:[#allocation7 + $0x190] sm:$0xf]
    %v1247 = vld [vmem:[#allocation7 + $0x194] sm:$0xf]
    %v1248 = vld [vmem:[#allocation7 + $0x198] sm:$0xf]
    %v1249 = vld [vmem:[#allocation7 + $0x19c] sm:$0xf]
    %v1250 = vld [vmem:[#allocation7 + $0x1a0] sm:$0xf]
    %v1251 = vld [vmem:[#allocation7 + $0x1a4] sm:$0xf]
    %v1252 = vld [vmem:[#allocation7 + $0x1a8] sm:$0xf]
    %v1253 = vld [vmem:[#allocation7 + $0x1ac] sm:$0xf]
    %v1254 = vld [vmem:[#allocation7 + $0x1b0] sm:$0xf]
    %v1255 = vld [vmem:[#allocation7 + $0x1b4] sm:$0xf]
    %v1256 = vld [vmem:[#allocation7 + $0x1b8] sm:$0xf]
    %v1257 = vld [vmem:[#allocation7 + $0x1bc] sm:$0xf]
    %v1258 = vld [vmem:[#allocation7 + $0x1c0] sm:$0xf]
    %v1259 = vld [vmem:[#allocation7 + $0x1c4] sm:$0xf]
    %v1260 = vld [vmem:[#allocation7 + $0x1c8] sm:$0xf]
    %v1261 = vld [vmem:[#allocation7 + $0x1cc] sm:$0xf]
    %v1262 = vld [vmem:[#allocation7 + $0x1d0] sm:$0xf]
    %v1263 = vld [vmem:[#allocation7 + $0x1d4] sm:$0xf]
    %v1264 = vld [vmem:[#allocation7 + $0x1d8] sm:$0xf]
    %v1265 = vld [vmem:[#allocation7 + $0x1dc] sm:$0xf]
    %v1266 = vld [vmem:[#allocation7 + $0x1e0] sm:$0xf]
    %v1267 = vld [vmem:[#allocation7 + $0x1e4] sm:$0xf]
    %v1268 = vld [vmem:[#allocation7 + $0x1e8] sm:$0xf]
    %v1269 = vld [vmem:[#allocation7 + $0x1ec] sm:$0xf]
    %v1270 = vld [vmem:[#allocation7 + $0x1f0] sm:$0xf]
    %v1271 = vld [vmem:[#allocation7 + $0x1f4] sm:$0xf]
    %v1272 = vld [vmem:[#allocation7 + $0x1f8] sm:$0xf]
    %v1273 = vld [vmem:[#allocation7 + $0x1fc] sm:$0xf]
    %v1274 = vld [vmem:[#allocation7 + $0x200] sm:$0xf]
    %v1275 = vld [vmem:[#allocation7 + $0x204] sm:$0xf]
    %v1276 = vld [vmem:[#allocation7 + $0x208] sm:$0xf]
    %v1277 = vld [vmem:[#allocation7 + $0x20c] sm:$0xf]
    %v1278 = vld [vmem:[#allocation7 + $0x210] sm:$0xf]
    %v1279 = vld [vmem:[#allocation7 + $0x214] sm:$0xf]
    %v1280 = vld [vmem:[#allocation7 + $0x218] sm:$0xf]
    %v1281 = vld [vmem:[#allocation7 + $0x21c] sm:$0xf]
    %v1282 = vld [vmem:[#allocation7 + $0x220] sm:$0xf]
    %v1283 = vld [vmem:[#allocation7 + $0x224] sm:$0xf]
    %v1284 = vld [vmem:[#allocation7 + $0x228] sm:$0xf]
    %v1285 = vld [vmem:[#allocation7 + $0x22c] sm:$0xf]
    %v1286 = vld [vmem:[#allocation7 + $0x230] sm:$0xf]
    %v1287 = vld [vmem:[#allocation7 + $0x234] sm:$0xf]
    %v1288 = vld [vmem:[#allocation7 + $0x238] sm:$0xf]
    %v1289 = vld [vmem:[#allocation7 + $0x23c] sm:$0xf]
    %v1434 = vunpack.c.l.b16 %v1146
    %v1435 = vunpack.c.l.b16 %v1147
    %v1436 = vunpack.c.l.b16 %v1148
    %v1437 = vunpack.c.l.b16 %v1149
    %v1438 = vunpack.c.l.b16 %v1150
    %v1439 = vunpack.c.l.b16 %v1151
    %v1440 = vunpack.c.l.b16 %v1152
    %v1441 = vunpack.c.l.b16 %v1153
    %v1442 = vunpack.c.l.b16 %v1154
    %v1443 = vunpack.c.l.b16 %v1155
    %v1444 = vunpack.c.l.b16 %v1156
    %v1445 = vunpack.c.l.b16 %v1157
    %v1446 = vunpack.c.l.b16 %v1158
    %v1447 = vunpack.c.l.b16 %v1159
    %v1448 = vunpack.c.l.b16 %v1160
    %v1449 = vunpack.c.l.b16 %v1161
    %v1450 = vunpack.c.l.b16 %v1162
    %v1451 = vunpack.c.l.b16 %v1163
    %v1452 = vunpack.c.l.b16 %v1164
    %v1453 = vunpack.c.l.b16 %v1165
    %v1454 = vunpack.c.l.b16 %v1166
    %v1455 = vunpack.c.l.b16 %v1167
    %v1456 = vunpack.c.l.b16 %v1168
    %v1457 = vunpack.c.l.b16 %v1169
    %v1458 = vunpack.c.l.b16 %v1170
    %v1459 = vunpack.c.l.b16 %v1171
    %v1460 = vunpack.c.l.b16 %v1172
    %v1461 = vunpack.c.l.b16 %v1173
    %v1462 = vunpack.c.l.b16 %v1174
    %v1463 = vunpack.c.l.b16 %v1175
    %v1464 = vunpack.c.l.b16 %v1176
    %v1465 = vunpack.c.l.b16 %v1177
    %v1466 = vunpack.c.l.b16 %v1178
    %v1467 = vunpack.c.l.b16 %v1179
    %v1468 = vunpack.c.l.b16 %v1180
    %v1469 = vunpack.c.l.b16 %v1181
    %v1470 = vunpack.c.l.b16 %v1182
    %v1471 = vunpack.c.l.b16 %v1183
    %v1472 = vunpack.c.l.b16 %v1184
    %v1473 = vunpack.c.l.b16 %v1185
    %v1474 = vunpack.c.l.b16 %v1186
    %v1475 = vunpack.c.l.b16 %v1187
    %v1476 = vunpack.c.l.b16 %v1188
    %v1477 = vunpack.c.l.b16 %v1189
    %v1478 = vunpack.c.l.b16 %v1190
    %v1479 = vunpack.c.l.b16 %v1191
    %v1480 = vunpack.c.l.b16 %v1192
    %v1481 = vunpack.c.l.b16 %v1193
    %v1482 = vunpack.c.l.b16 %v1194
    %v1483 = vunpack.c.l.b16 %v1195
    %v1484 = vunpack.c.l.b16 %v1196
    %v1485 = vunpack.c.l.b16 %v1197
    %v1486 = vunpack.c.l.b16 %v1198
    %v1487 = vunpack.c.l.b16 %v1199
    %v1488 = vunpack.c.l.b16 %v1200
    %v1489 = vunpack.c.l.b16 %v1201
    %v1490 = vunpack.c.l.b16 %v1202
    %v1491 = vunpack.c.l.b16 %v1203
    %v1492 = vunpack.c.l.b16 %v1204
    %v1493 = vunpack.c.l.b16 %v1205
    %v1494 = vunpack.c.l.b16 %v1206
    %v1495 = vunpack.c.l.b16 %v1207
    %v1496 = vunpack.c.l.b16 %v1208
    %v1497 = vunpack.c.l.b16 %v1209
    %v1498 = vunpack.c.l.b16 %v1210
    %v1499 = vunpack.c.l.b16 %v1211
    %v1500 = vunpack.c.l.b16 %v1212
    %v1501 = vunpack.c.l.b16 %v1213
    %v1502 = vunpack.c.l.b16 %v1214
    %v1503 = vunpack.c.l.b16 %v1215
    %v1504 = vunpack.c.l.b16 %v1216
    %v1505 = vunpack.c.l.b16 %v1217
    %v1506 = vunpack.c.l.b16 %v1218
    %v1507 = vunpack.c.l.b16 %v1219
    %v1508 = vunpack.c.l.b16 %v1220
    %v1509 = vunpack.c.l.b16 %v1221
    %v1510 = vunpack.c.l.b16 %v1222
    %v1511 = vunpack.c.l.b16 %v1223
    %v1512 = vunpack.c.l.b16 %v1224
    %v1513 = vunpack.c.l.b16 %v1225
    %v1514 = vunpack.c.l.b16 %v1226
    %v1515 = vunpack.c.l.b16 %v1227
    %v1516 = vunpack.c.l.b16 %v1228
    %v1517 = vunpack.c.l.b16 %v1229
    %v1518 = vunpack.c.l.b16 %v1230
    %v1519 = vunpack.c.l.b16 %v1231
    %v1520 = vunpack.c.l.b16 %v1232
    %v1521 = vunpack.c.l.b16 %v1233
    %v1522 = vunpack.c.l.b16 %v1234
    %v1523 = vunpack.c.l.b16 %v1235
    %v1524 = vunpack.c.l.b16 %v1236
    %v1525 = vunpack.c.l.b16 %v1237
    %v1526 = vunpack.c.l.b16 %v1238
    %v1527 = vunpack.c.l.b16 %v1239
    %v1528 = vunpack.c.l.b16 %v1240
    %v1529 = vunpack.c.l.b16 %v1241
    %v1530 = vunpack.c.l.b16 %v1242
    %v1531 = vunpack.c.l.b16 %v1243
    %v1532 = vunpack.c.l.b16 %v1244
    %v1533 = vunpack.c.l.b16 %v1245
    %v1534 = vunpack.c.l.b16 %v1246
    %v1535 = vunpack.c.l.b16 %v1247
    %v1536 = vunpack.c.l.b16 %v1248
    %v1537 = vunpack.c.l.b16 %v1249
    %v1538 = vunpack.c.l.b16 %v1250
    %v1539 = vunpack.c.l.b16 %v1251
    %v1540 = vunpack.c.l.b16 %v1252
    %v1541 = vunpack.c.l.b16 %v1253
    %v1542 = vunpack.c.l.b16 %v1254
    %v1543 = vunpack.c.l.b16 %v1255
    %v1544 = vunpack.c.l.b16 %v1256
    %v1545 = vunpack.c.l.b16 %v1257
    %v1546 = vunpack.c.l.b16 %v1258
    %v1547 = vunpack.c.l.b16 %v1259
    %v1548 = vunpack.c.l.b16 %v1260
    %v1549 = vunpack.c.l.b16 %v1261
    %v1550 = vunpack.c.l.b16 %v1262
    %v1551 = vunpack.c.l.b16 %v1263
    %v1552 = vunpack.c.l.b16 %v1264
    %v1553 = vunpack.c.l.b16 %v1265
    %v1554 = vunpack.c.l.b16 %v1266
    %v1555 = vunpack.c.l.b16 %v1267
    %v1556 = vunpack.c.l.b16 %v1268
    %v1557 = vunpack.c.l.b16 %v1269
    %v1558 = vunpack.c.l.b16 %v1270
    %v1559 = vunpack.c.l.b16 %v1271
    %v1560 = vunpack.c.l.b16 %v1272
    %v1561 = vunpack.c.l.b16 %v1273
    %v1562 = vunpack.c.l.b16 %v1274
    %v1563 = vunpack.c.l.b16 %v1275
    %v1564 = vunpack.c.l.b16 %v1276
    %v1565 = vunpack.c.l.b16 %v1277
    %v1566 = vunpack.c.l.b16 %v1278
    %v1567 = vunpack.c.l.b16 %v1279
    %v1568 = vunpack.c.l.b16 %v1280
    %v1569 = vunpack.c.l.b16 %v1281
    %v1570 = vunpack.c.l.b16 %v1282
    %v1571 = vunpack.c.l.b16 %v1283
    %v1572 = vunpack.c.l.b16 %v1284
    %v1573 = vunpack.c.l.b16 %v1285
    %v1574 = vunpack.c.l.b16 %v1286
    %v1575 = vunpack.c.l.b16 %v1287
    %v1576 = vunpack.c.l.b16 %v1288
    %v1577 = vunpack.c.l.b16 %v1289
    %v1578 = vpack.c.b16 %v1435, %v1434
    %v1579 = vpack.c.b16 %v1437, %v1436
    %v1580 = vpack.c.b16 %v1439, %v1438
    %v1581 = vpack.c.b16 %v1441, %v1440
    %v1582 = vpack.c.b16 %v1443, %v1442
    %v1583 = vpack.c.b16 %v1445, %v1444
    %v1584 = vpack.c.b16 %v1447, %v1446
    %v1585 = vpack.c.b16 %v1449, %v1448
    %v1586 = vpack.c.b16 %v1451, %v1450
    %v1587 = vpack.c.b16 %v1453, %v1452
    %v1588 = vpack.c.b16 %v1455, %v1454
    %v1589 = vpack.c.b16 %v1457, %v1456
    %v1590 = vpack.c.b16 %v1459, %v1458
    %v1591 = vpack.c.b16 %v1461, %v1460
    %v1592 = vpack.c.b16 %v1463, %v1462
    %v1593 = vpack.c.b16 %v1465, %v1464
    %v1594 = vpack.c.b16 %v1467, %v1466
    %v1595 = vpack.c.b16 %v1469, %v1468
    %v1596 = vpack.c.b16 %v1471, %v1470
    %v1597 = vpack.c.b16 %v1473, %v1472
    %v1598 = vpack.c.b16 %v1475, %v1474
    %v1599 = vpack.c.b16 %v1477, %v1476
    %v1600 = vpack.c.b16 %v1479, %v1478
    %v1601 = vpack.c.b16 %v1481, %v1480
    %v1602 = vpack.c.b16 %v1483, %v1482
    %v1603 = vpack.c.b16 %v1485, %v1484
    %v1604 = vpack.c.b16 %v1487, %v1486
    %v1605 = vpack.c.b16 %v1489, %v1488
    %v1606 = vpack.c.b16 %v1491, %v1490
    %v1607 = vpack.c.b16 %v1493, %v1492
    %v1608 = vpack.c.b16 %v1495, %v1494
    %v1609 = vpack.c.b16 %v1497, %v1496
    %v1610 = vpack.c.b16 %v1499, %v1498
    %v1611 = vpack.c.b16 %v1501, %v1500
    %v1612 = vpack.c.b16 %v1503, %v1502
    %v1613 = vpack.c.b16 %v1505, %v1504
    %v1614 = vpack.c.b16 %v1507, %v1506
    %v1615 = vpack.c.b16 %v1509, %v1508
    %v1616 = vpack.c.b16 %v1511, %v1510
    %v1617 = vpack.c.b16 %v1513, %v1512
    %v1618 = vpack.c.b16 %v1515, %v1514
    %v1619 = vpack.c.b16 %v1517, %v1516
    %v1620 = vpack.c.b16 %v1519, %v1518
    %v1621 = vpack.c.b16 %v1521, %v1520
    %v1622 = vpack.c.b16 %v1523, %v1522
    %v1623 = vpack.c.b16 %v1525, %v1524
    %v1624 = vpack.c.b16 %v1527, %v1526
    %v1625 = vpack.c.b16 %v1529, %v1528
    %v1626 = vpack.c.b16 %v1531, %v1530
    %v1627 = vpack.c.b16 %v1533, %v1532
    %v1628 = vpack.c.b16 %v1535, %v1534
    %v1629 = vpack.c.b16 %v1537, %v1536
    %v1630 = vpack.c.b16 %v1539, %v1538
    %v1631 = vpack.c.b16 %v1541, %v1540
    %v1632 = vpack.c.b16 %v1543, %v1542
    %v1633 = vpack.c.b16 %v1545, %v1544
    %v1634 = vpack.c.b16 %v1547, %v1546
    %v1635 = vpack.c.b16 %v1549, %v1548
    %v1636 = vpack.c.b16 %v1551, %v1550
    %v1637 = vpack.c.b16 %v1553, %v1552
    %v1638 = vpack.c.b16 %v1555, %v1554
    %v1639 = vpack.c.b16 %v1557, %v1556
    %v1640 = vpack.c.b16 %v1559, %v1558
    %v1641 = vpack.c.b16 %v1561, %v1560
    %v1642 = vpack.c.b16 %v1563, %v1562
    %v1643 = vpack.c.b16 %v1565, %v1564
    %v1644 = vpack.c.b16 %v1567, %v1566
    %v1645 = vpack.c.b16 %v1569, %v1568
    %v1646 = vpack.c.b16 %v1571, %v1570
    %v1647 = vpack.c.b16 %v1573, %v1572
    %v1648 = vpack.c.b16 %v1575, %v1574
    %v1649 = vpack.c.b16 %v1577, %v1576
    %1722 = vmatprep.subr.bf16.mxu0 0
    %1723 = vmatpush1.bf16.msra.mxu0 %v1578
    %1724 = vmatprep.subr.bf16.mxu0 0
    %1725 = vmatpush1.bf16.msra.mxu0 %v1579
    %1726 = vmatprep.subr.bf16.mxu0 0
    %1727 = vmatpush1.bf16.msra.mxu0 %v1580
    %1728 = vmatprep.subr.bf16.mxu0 0
    %1729 = vmatpush1.bf16.msra.mxu0 %v1581
    %1730 = vmatprep.subr.bf16.mxu0 0
    %1731 = vmatpush1.bf16.msra.mxu0 %v1582
    %1732 = vmatprep.subr.bf16.mxu0 0
    %1733 = vmatpush1.bf16.msra.mxu0 %v1583
    %1734 = vmatprep.subr.bf16.mxu0 0
    %1735 = vmatpush1.bf16.msra.mxu0 %v1584
    %1736 = vmatprep.subr.bf16.mxu0 0
    %1737 = vmatpush1.bf16.msra.mxu0 %v1585
    %1738 = vmatprep.subr.bf16.mxu0 0
    %1739 = vmatpush1.bf16.msra.mxu0 %v1586
    %1740 = vmatprep.subr.bf16.mxu0 0
    %1741 = vmatpush1.bf16.msra.mxu0 %v1587
    %1742 = vmatprep.subr.bf16.mxu0 0
    %1743 = vmatpush1.bf16.msra.mxu0 %v1588
    %1744 = vmatprep.subr.bf16.mxu0 0
    %1745 = vmatpush1.bf16.msra.mxu0 %v1589
    %1746 = vmatprep.subr.bf16.mxu0 0
    %1747 = vmatpush1.bf16.msra.mxu0 %v1590
    %1748 = vmatprep.subr.bf16.mxu0 0
    %1749 = vmatpush1.bf16.msra.mxu0 %v1591
    %1750 = vmatprep.subr.bf16.mxu0 0
    %1751 = vmatpush1.bf16.msra.mxu0 %v1592
    %1752 = vmatprep.subr.bf16.mxu0 0
    %1753 = vmatpush1.bf16.msra.mxu0 %v1593
    %1754 = vmatprep.mubr.bf16.mxu0 %v1138
    %1755 = vmatmul.mubr.bf16.gmra.mrb[0].mxu0 %v1137
    %v1756 = vpop.f32.mrb[0].mxu0
    %v1757 = vadd.f32 0.0, %v1756
    %v1758 = vpop.f32.mrb[0].mxu0
    %v1759 = vpop.f32.mrb[0].mxu0
    %v1760 = vpop.f32.mrb[0].mxu0
    %1761 = vdwg.mxu0
    %1762 = vmatprep.subr.bf16.mxu0 0
    %1763 = vmatpush1.bf16.msra.mxu0 %v1594
    %1764 = vmatprep.subr.bf16.mxu0 0
    %1765 = vmatpush1.bf16.msra.mxu0 %v1595
    %1766 = vmatprep.subr.bf16.mxu0 0
    %1767 = vmatpush1.bf16.msra.mxu0 %v1596
    %1768 = vmatprep.subr.bf16.mxu0 0
    %1769 = vmatpush1.bf16.msra.mxu0 %v1597
    %1770 = vmatprep.subr.bf16.mxu0 0
    %1771 = vmatpush1.bf16.msra.mxu0 %v1598
    %1772 = vmatprep.subr.bf16.mxu0 0
    %1773 = vmatpush1.bf16.msra.mxu0 %v1599
    %1774 = vmatprep.subr.bf16.mxu0 0
    %1775 = vmatpush1.bf16.msra.mxu0 %v1600
    %1776 = vmatprep.subr.bf16.mxu0 0
    %1777 = vmatpush1.bf16.msra.mxu0 %v1601
    %1778 = vmatprep.subr.bf16.mxu0 0
    %1779 = vmatpush1.bf16.msra.mxu0 %v1602
    %1780 = vmatprep.subr.bf16.mxu0 0
    %1781 = vmatpush1.bf16.msra.mxu0 %v1603
    %1782 = vmatprep.subr.bf16.mxu0 0
    %1783 = vmatpush1.bf16.msra.mxu0 %v1604
    %1784 = vmatprep.subr.bf16.mxu0 0
    %1785 = vmatpush1.bf16.msra.mxu0 %v1605
    %1786 = vmatprep.subr.bf16.mxu0 0
    %1787 = vmatpush1.bf16.msra.mxu0 %v1606
    %1788 = vmatprep.subr.bf16.mxu0 0
    %1789 = vmatpush1.bf16.msra.mxu0 %v1607
    %1790 = vmatprep.subr.bf16.mxu0 0
    %1791 = vmatpush1.bf16.msra.mxu0 %v1608
    %1792 = vmatprep.subr.bf16.mxu0 0
    %1793 = vmatpush1.bf16.msra.mxu0 %v1609
    %1794 = vmatprep.mubr.bf16.mxu0 %v1140
    %1795 = vmatmul.mubr.bf16.gmra.mrb[0].mxu0 %v1139
    %v1796 = vpop.f32.mrb[0].mxu0
    %v1797 = vadd.f32 %v1757, %v1796
    %v1798 = vpop.f32.mrb[0].mxu0
    %v1799 = vpop.f32.mrb[0].mxu0
    %v1800 = vpop.f32.mrb[0].mxu0
    %1801 = vdwg.mxu0
    %1802 = vmatprep.subr.bf16.mxu0 0
    %1803 = vmatpush1.bf16.msra.mxu0 %v1610
    %1804 = vmatprep.subr.bf16.mxu0 0
    %1805 = vmatpush1.bf16.msra.mxu0 %v1611
    %1806 = vmatprep.subr.bf16.mxu0 0
    %1807 = vmatpush1.bf16.msra.mxu0 %v1612
    %1808 = vmatprep.subr.bf16.mxu0 0
    %1809 = vmatpush1.bf16.msra.mxu0 %v1613
    %1810 = vmatprep.subr.bf16.mxu0 0
    %1811 = vmatpush1.bf16.msra.mxu0 %v1614
    %1812 = vmatprep.subr.bf16.mxu0 0
    %1813 = vmatpush1.bf16.msra.mxu0 %v1615
    %1814 = vmatprep.subr.bf16.mxu0 0
    %1815 = vmatpush1.bf16.msra.mxu0 %v1616
    %1816 = vmatprep.subr.bf16.mxu0 0
    %1817 = vmatpush1.bf16.msra.mxu0 %v1617
    %1818 = vmatprep.subr.bf16.mxu0 0
    %1819 = vmatpush1.bf16.msra.mxu0 %v1618
    %1820 = vmatprep.subr.bf16.mxu0 0
    %1821 = vmatpush1.bf16.msra.mxu0 %v1619
    %1822 = vmatprep.subr.bf16.mxu0 0
    %1823 = vmatpush1.bf16.msra.mxu0 %v1620
    %1824 = vmatprep.subr.bf16.mxu0 0
    %1825 = vmatpush1.bf16.msra.mxu0 %v1621
    %1826 = vmatprep.subr.bf16.mxu0 0
    %1827 = vmatpush1.bf16.msra.mxu0 %v1622
    %1828 = vmatprep.subr.bf16.mxu0 0
    %1829 = vmatpush1.bf16.msra.mxu0 %v1623
    %1830 = vmatprep.subr.bf16.mxu0 0
    %1831 = vmatpush1.bf16.msra.mxu0 %v1624
    %1832 = vmatprep.subr.bf16.mxu0 0
    %1833 = vmatpush1.bf16.msra.mxu0 %v1625
    %1834 = vmatprep.mubr.bf16.mxu0 %v1142
    %1835 = vmatmul.mubr.bf16.gmra.mrb[0].mxu0 %v1141
    %v1836 = vpop.f32.mrb[0].mxu0
    %v1837 = vadd.f32 %v1797, %v1836
    %v1838 = vpop.f32.mrb[0].mxu0
    %v1839 = vpop.f32.mrb[0].mxu0
    %v1840 = vpop.f32.mrb[0].mxu0
    %1841 = vdwg.mxu0
    %1842 = vmatprep.subr.bf16.mxu0 0
    %1843 = vmatpush1.bf16.msra.mxu0 %v1626
    %1844 = vmatprep.subr.bf16.mxu0 0
    %1845 = vmatpush1.bf16.msra.mxu0 %v1627
    %1846 = vmatprep.subr.bf16.mxu0 0
    %1847 = vmatpush1.bf16.msra.mxu0 %v1628
    %1848 = vmatprep.subr.bf16.mxu0 0
    %1849 = vmatpush1.bf16.msra.mxu0 %v1629
    %1850 = vmatprep.subr.bf16.mxu0 0
    %1851 = vmatpush1.bf16.msra.mxu0 %v1630
    %1852 = vmatprep.subr.bf16.mxu0 0
    %1853 = vmatpush1.bf16.msra.mxu0 %v1631
    %1854 = vmatprep.subr.bf16.mxu0 0
    %1855 = vmatpush1.bf16.msra.mxu0 %v1632
    %1856 = vmatprep.subr.bf16.mxu0 0
    %1857 = vmatpush1.bf16.msra.mxu0 %v1633
    %1858 = vmatprep.subr.bf16.mxu0 0
    %1859 = vmatpush1.bf16.msra.mxu0 %v1634
    %1860 = vmatprep.subr.bf16.mxu0 0
    %1861 = vmatpush1.bf16.msra.mxu0 %v1635
    %1862 = vmatprep.subr.bf16.mxu0 0
    %1863 = vmatpush1.bf16.msra.mxu0 %v1636
    %1864 = vmatprep.subr.bf16.mxu0 0
    %1865 = vmatpush1.bf16.msra.mxu0 %v1637
    %1866 = vmatprep.subr.bf16.mxu0 0
    %1867 = vmatpush1.bf16.msra.mxu0 %v1638
    %1868 = vmatprep.subr.bf16.mxu0 0
    %1869 = vmatpush1.bf16.msra.mxu0 %v1639
    %1870 = vmatprep.subr.bf16.mxu0 0
    %1871 = vmatpush1.bf16.msra.mxu0 %v1640
    %1872 = vmatprep.subr.bf16.mxu0 0
    %1873 = vmatpush1.bf16.msra.mxu0 %v1641
    %1874 = vmatprep.mubr.bf16.mxu0 %v1144
    %1875 = vmatmul.mubr.bf16.gmra.mrb[0].mxu0 %v1143
    %v1876 = vpop.f32.mrb[0].mxu0
    %v1877 = vadd.f32 %v1837, %v1876
    %v1878 = vpop.f32.mrb[0].mxu0
    %v1879 = vpop.f32.mrb[0].mxu0
    %v1880 = vpop.f32.mrb[0].mxu0
    %1881 = vdwg.mxu0
    %1882 = vmatprep.subr.bf16.mxu0 0
    %1883 = vmatpush1.bf16.msra.mxu0 %v1642
    %1884 = vmatprep.subr.bf16.mxu0 0
    %1885 = vmatpush1.bf16.msra.mxu0 %v1643
    %1886 = vmatprep.subr.bf16.mxu0 0
    %1887 = vmatpush1.bf16.msra.mxu0 %v1644
    %1888 = vmatprep.subr.bf16.mxu0 0
    %1889 = vmatpush1.bf16.msra.mxu0 %v1645
    %1890 = vmatprep.subr.bf16.mxu0 0
    %1891 = vmatpush1.bf16.msra.mxu0 %v1646
    %1892 = vmatprep.subr.bf16.mxu0 0
    %1893 = vmatpush1.bf16.msra.mxu0 %v1647
    %1894 = vmatprep.subr.bf16.mxu0 0
    %1895 = vmatpush1.bf16.msra.mxu0 %v1648
    %1896 = vmatprep.subr.bf16.mxu0 0
    %1897 = vmatpush1.bf16.msra.mxu0 %v1649
    %1898 = vmatprep.subr.bf16.mxu0 0
    %1899 = vmatpush1.bf16.msra.mxu0 0
    %1900 = vmatprep.subr.bf16.mxu0 0
    %1901 = vmatpush1.bf16.msra.mxu0 0
    %1902 = vmatprep.subr.bf16.mxu0 0
    %1903 = vmatpush1.bf16.msra.mxu0 0
    %1904 = vmatprep.subr.bf16.mxu0 0
    %1905 = vmatpush1.bf16.msra.mxu0 0
    %1906 = vmatprep.subr.bf16.mxu0 0
    %1907 = vmatpush1.bf16.msra.mxu0 0
    %1908 = vmatprep.subr.bf16.mxu0 0
    %1909 = vmatpush1.bf16.msra.mxu0 0
    %1910 = vmatprep.subr.bf16.mxu0 0
    %1911 = vmatpush1.bf16.msra.mxu0 0
    %1912 = vmatprep.subr.bf16.mxu0 0
    %1913 = vmatpush1.bf16.msra.mxu0 0
    %1914 = vmatprep.mubr.bf16.mxu0 0
    %1915 = vmatmul.mubr.bf16.gmra.mrb[0].mxu0 %v1145
    %v1916 = vpop.f32.mrb[0].mxu0
    %v1917 = vadd.f32 %v1877, %v1916
    %v1918 = vpop.f32.mrb[0].mxu0
    %v1919 = vpop.f32.mrb[0].mxu0
    %v1920 = vpop.f32.mrb[0].mxu0
    %1921 = vdwg.mxu0
    %1922 = vst [vmem:[#allocation8] sm:$0xff] %v1917
    // Predicated region
    $region26: #{tpu_custom_call.1} parent=1 // pred_check
      _
    $region27: #{tpu_custom_call.1} parent=1 // pred_check_branch
      %1924 = sbr.rel (0) target = $region29
    $region28: #{tpu_custom_call.1} parent=1 // pred_region
      %s1926 = ssub.s32 128, 128
      %1927 = vsyncadd [#allocation4], %s1926
      %s1929 = sshll.u32 [#allocation8], 4
      %s1930 = int_to_ptr.vmem [resolvable:$true] %s1929
      %1932 = dma.vmem_to_hbm [thread:$0]  %s1930, 128, %s3, [#allocation4]
    $region29: #{tpu_custom_call.1} parent=1 // pred_fallthru
      _
    // Predicated region
    $region30: #{tpu_custom_call.1} parent=1 // pred_check
      _
    $region31: #{tpu_custom_call.1} parent=1 // pred_check_branch
      %1934 = sbr.rel (0) target = $region33
    $region32: #{tpu_custom_call.1} parent=1 // pred_region
      %1935 = dma.done [#allocation4], 128
    $region33: #{tpu_custom_call.1} parent=1 // pred_fallthru
      _
    %1936 = vsyncpa [#allocation3], 1
    %1937 = vsyncpa [#allocation6], 1
    %1938 = vsyncpa [#allocation4], 1

// kernel: tpu_custom_call.1
$region0: #{tpu_custom_call.1}
  #allocation0 [shape = 'u32[]', space=smem, size = 0x4, offset = 0x4, fixed_abs, tag = 'smem constant byte address 0x4 - core index']
  #allocation1 [shape = 'u32[144,128]{1,0:T(1,128)}', space=vmem, size = 0x12000, scoped, tag = 'internal scratch']
  %s0 = inlined_call_operand.hbm [shape: f32[8,128], index: 0, kind: input, shape index: {}]
  %s1 = inlined_call_operand.hbm [shape: bf16[1152,128], index: 1, kind: input, shape index: {}]
  %s2 = inlined_call_operand.hbm [shape: bf16[1152,128], index: 2, kind: input, shape index: {}]
  %s3 = inlined_call_operand.hbm [shape: f32[8,128], index: 3, kind: output, shape index: {}]
  %s4 = sld [smem:[#allocation0]]
  $region34: #{tpu_custom_call.1} parent=0
    _
  %s6 = ssub.s32 1, %s4
  %s7 = scalar_select 0, %s6, %s4
  $region1: #{tpu_custom_call.1} parent=0
    #allocation2 [shape = 'u8[4096]{0}', space=vmem, size = 0x1000, scoped, tag = 'input window, operand 0, single buffered']
    #allocation3 [shape = 's32[1]{0}', space=sflag, size = 0x4, scoped, tag = 'scoped memory for tpu_custom_call.1']
    #allocation4 [shape = 's32[1]{0}', space=sflag, size = 0x4, scoped, tag = 'scoped memory for tpu_custom_call.1']
    #allocation5 [shape = 'u8[294912]{0}', space=vmem, size = 0x48000, scoped, tag = 'input window, operand 1, single buffered']
    #allocation6 [shape = 's32[1]{0}', space=sflag, size = 0x4, scoped, tag = 'scoped memory for tpu_custom_call.1']
    #allocation7 [shape = 'u8[294912]{0}', space=vmem, size = 0x48000, scoped, tag = 'input window, operand 2, single buffered']
    #allocation8 [shape = 'u8[4096]{0}', space=vmem, size = 0x1000, scoped, tag = 'output window, operand 0, single buffered']
    %8 = vsyncpa [#allocation3], 0
    %9 = vsyncpa [#allocation6], 0
    %10 = vsyncpa [#allocation4], 0
    // Predicated region
    $region2: #{tpu_custom_call.1} parent=1 // pred_check
      _
    $region3: #{tpu_custom_call.1} parent=1 // pred_check_branch
      %12 = sbr.rel (0) target = $region5
    $region4: #{tpu_custom_call.1} parent=1 // pred_region
      %s14 = ssub.s32 128, 128
      %15 = vsyncadd [#allocation3], %s14
      %s17 = sshll.u32 [#allocation2], 4
      %s18 = int_to_ptr.vmem [resolvable:$true] %s17
      %20 = dma.hbm_to_vmem [thread:$0]  %s0, 128, %s18, [#allocation3]
    $region5: #{tpu_custom_call.1} parent=1 // pred_fallthru
      _
    // Predicated region
    $region6: #{tpu_custom_call.1} parent=1 // pred_check
      _
    $region7: #{tpu_custom_call.1} parent=1 // pred_check_branch
      %22 = sbr.rel (0) target = $region9
    $region8: #{tpu_custom_call.1} parent=1 // pred_region
      %s24 = ssub.s32 9216, 9216
      %25 = vsyncadd [#allocation6], %s24
      %s26 = sshll.u32 [#allocation5], 4
      %s27 = int_to_ptr.vmem [resolvable:$true] %s26
      %32 = dma.hbm_to_vmem [thread:$0]  %s1, 9216, %s27, [#allocation6], 64, 64, 4
    $region9: #{tpu_custom_call.1} parent=1 // pred_fallthru
      _
    // Predicated region
    $region10: #{tpu_custom_call.1} parent=1 // pred_check
      _
    $region11: #{tpu_custom_call.1} parent=1 // pred_check_branch
      %34 = sbr.rel (0) target = $region13
    $region12: #{tpu_custom_call.1} parent=1 // pred_region
      %s36 = ssub.s32 9216, 9216
      %37 = vsyncadd [#allocation6], %s36
      %s38 = sshll.u32 [#allocation7], 4
      %s39 = int_to_ptr.vmem [resolvable:$true] %s38
      %44 = dma.hbm_to_vmem [thread:$0]  %s2, 9216, %s39, [#allocation6], 64, 64, 4
    $region13: #{tpu_custom_call.1} parent=1 // pred_fallthru
      _
    // Predicated region
    $region14: #{tpu_custom_call.1} parent=1 // pred_check
      _
    $region15: #{tpu_custom_call.1} parent=1 // pred_check_branch
      %46 = sbr.rel (0) target = $region17
    $region16: #{tpu_custom_call.1} parent=1 // pred_region
      %47 = dma.done [#allocation3], 128
    $region17: #{tpu_custom_call.1} parent=1 // pred_fallthru
      _
    // Predicated region
    $region18: #{tpu_custom_call.1} parent=1 // pred_check
      _
    $region19: #{tpu_custom_call.1} parent=1 // pred_check_branch
      %49 = sbr.rel (0) target = $region21
    $region20: #{tpu_custom_call.1} parent=1 // pred_region
      %50 = dma.done [#allocation6], 9216
    $region21: #{tpu_custom_call.1} parent=1 // pred_fallthru
      _
    // Predicated region
    $region22: #{tpu_custom_call.1} parent=1 // pred_check
      _
    $region23: #{tpu_custom_call.1} parent=1 // pred_check_branch
      %52 = sbr.rel (0) target = $region25
    $region24: #{tpu_custom_call.1} parent=1 // pred_region
      %53 = dma.done [#allocation6], 9216
    $region25: #{tpu_custom_call.1} parent=1 // pred_fallthru
      _
    %v55 = vld [vmem:[#allocation2] sm:$0xff]
    %v56 = vmul.f32 %v55, 2.5
    %v57 = vsub.f32 %v56, -5.5
    %v58 = vsub.f32 %v56, -4.5
    %v59 = vsub.f32 %v56, -3.5
    %v60 = vsub.f32 %v56, -2.5
    %v61 = vsub.f32 %v56, -1.5
    %v62 = vsub.f32 %v56, -0.5
    %v63 = vsub.f32 %v56, 0.5
    %v64 = vsub.f32 %v56, 1.5
    %v65 = vsub.f32 %v56, 2.5
    %v66 = vsub.f32 %v56, 3.5
    %v67 = vsub.f32 %v56, 4.5
    %v68 = vsub.f32 %v56, 5.5
    %vm69 = vcmp.ge.f32.partialorder %v57, 0.0
    %v70 = vsel %vm69, 1, 0
    %v71 = vcvt.s32.f32 %v70
    %vm72 = vcmp.ge.f32.partialorder %v58, 0.0
    %v73 = vsel %vm72, 1, 0
    %v74 = vcvt.s32.f32 %v73
    %vm75 = vcmp.ge.f32.partialorder %v59, 0.0
    %v76 = vsel %vm75, 1, 0
    %v77 = vcvt.s32.f32 %v76
    %vm78 = vcmp.ge.f32.partialorder %v60, 0.0
    %v79 = vsel %vm78, 1, 0
    %v80 = vcvt.s32.f32 %v79
    %vm81 = vcmp.ge.f32.partialorder %v61, 0.0
    %v82 = vsel %vm81, 1, 0
    %v83 = vcvt.s32.f32 %v82
    %vm84 = vcmp.ge.f32.partialorder %v62, 0.0
    %v85 = vsel %vm84, 1, 0
    %v86 = vcvt.s32.f32 %v85
    %vm87 = vcmp.ge.f32.partialorder %v63, 0.0
    %v88 = vsel %vm87, 1, 0
    %v89 = vcvt.s32.f32 %v88
    %vm90 = vcmp.ge.f32.partialorder %v64, 0.0
    %v91 = vsel %vm90, 1, 0
    %v92 = vcvt.s32.f32 %v91
    %vm93 = vcmp.ge.f32.partialorder %v65, 0.0
    %v94 = vsel %vm93, 1, 0
    %v95 = vcvt.s32.f32 %v94
    %vm96 = vcmp.ge.f32.partialorder %v66, 0.0
    %v97 = vsel %vm96, 1, 0
    %v98 = vcvt.s32.f32 %v97
    %vm99 = vcmp.ge.f32.partialorder %v67, 0.0
    %v100 = vsel %vm99, 1, 0
    %v101 = vcvt.s32.f32 %v100
    %vm102 = vcmp.ge.f32.partialorder %v68, 0.0
    %v103 = vsel %vm102, 1, 0
    %v104 = vcvt.s32.f32 %v103
    %v105 = vsub.f32 %v71, %v74
    %v106 = vsub.f32 %v74, %v77
    %v107 = vsub.f32 %v77, %v80
    %v108 = vsub.f32 %v80, %v83
    %v109 = vsub.f32 %v83, %v86
    %v110 = vsub.f32 %v86, %v89
    %v111 = vsub.f32 %v89, %v92
    %v112 = vsub.f32 %v92, %v95
    %v113 = vsub.f32 %v95, %v98
    %v114 = vsub.f32 %v98, %v101
    %v115 = vsub.f32 %v101, %v104
    %v116 = vmul.f32 %v57, %v105
    %v117 = vmul.f32 %v59, %v106
    %v118 = vsub.f32 %v116, %v117
    %v119 = vmul.f32 %v58, %v106
    %v120 = vmul.f32 %v60, %v107
    %v121 = vsub.f32 %v119, %v120
    %v122 = vmul.f32 %v59, %v107
    %v123 = vmul.f32 %v61, %v108
    %v124 = vsub.f32 %v122, %v123
    %v125 = vmul.f32 %v60, %v108
    %v126 = vmul.f32 %v62, %v109
    %v127 = vsub.f32 %v125, %v126
    %v128 = vmul.f32 %v61, %v109
    %v129 = vmul.f32 %v63, %v110
    %v130 = vsub.f32 %v128, %v129
    %v131 = vmul.f32 %v62, %v110
    %v132 = vmul.f32 %v64, %v111
    %v133 = vsub.f32 %v131, %v132
    %v134 = vmul.f32 %v63, %v111
    %v135 = vmul.f32 %v65, %v112
    %v136 = vsub.f32 %v134, %v135
    %v137 = vmul.f32 %v64, %v112
    %v138 = vmul.f32 %v66, %v113
    %v139 = vsub.f32 %v137, %v138
    %v140 = vmul.f32 %v65, %v113
    %v141 = vmul.f32 %v67, %v114
    %v142 = vsub.f32 %v140, %v141
    %v143 = vmul.f32 %v66, %v114
    %v144 = vmul.f32 %v68, %v115
    %v145 = vsub.f32 %v143, %v144
    %v146 = vmul.f32 %v57, %v118
    %v147 = vmul.f32 %v60, %v121
    %v148 = vsub.f32 %v146, %v147
    %v149 = vmul.f32 %v58, %v121
    %v150 = vmul.f32 %v61, %v124
    %v151 = vsub.f32 %v149, %v150
    %v152 = vmul.f32 %v59, %v124
    %v153 = vmul.f32 %v62, %v127
    %v154 = vsub.f32 %v152, %v153
    %v155 = vmul.f32 %v60, %v127
    %v156 = vmul.f32 %v63, %v130
    %v157 = vsub.f32 %v155, %v156
    %v158 = vmul.f32 %v61, %v130
    %v159 = vmul.f32 %v64, %v133
    %v160 = vsub.f32 %v158, %v159
    %v161 = vmul.f32 %v62, %v133
    %v162 = vmul.f32 %v65, %v136
    %v163 = vsub.f32 %v161, %v162
    %v164 = vmul.f32 %v63, %v136
    %v165 = vmul.f32 %v66, %v139
    %v166 = vsub.f32 %v164, %v165
    %v167 = vmul.f32 %v64, %v139
    %v168 = vmul.f32 %v67, %v142
    %v169 = vsub.f32 %v167, %v168
    %v170 = vmul.f32 %v65, %v142
    %v171 = vmul.f32 %v68, %v145
    %v172 = vsub.f32 %v170, %v171
    %v173 = vmul.f32 %v57, %v148
    %v174 = vmul.f32 %v61, %v151
    %v175 = vsub.f32 %v173, %v174
    %v176 = vmul.f32 %v58, %v151
    %v177 = vmul.f32 %v62, %v154
    %v178 = vsub.f32 %v176, %v177
    %v179 = vmul.f32 %v59, %v154
    %v180 = vmul.f32 %v63, %v157
    %v181 = vsub.f32 %v179, %v180
    %v182 = vmul.f32 %v60, %v157
    %v183 = vmul.f32 %v64, %v160
    %v184 = vsub.f32 %v182, %v183
    %v185 = vmul.f32 %v61, %v160
    %v186 = vmul.f32 %v65, %v163
    %v187 = vsub.f32 %v185, %v186
    %v188 = vmul.f32 %v62, %v163
    %v189 = vmul.f32 %v66, %v166
    %v190 = vsub.f32 %v188, %v189
    %v191 = vmul.f32 %v63, %v166
    %v192 = vmul.f32 %v67, %v169
    %v193 = vsub.f32 %v191, %v192
    %v194 = vmul.f32 %v64, %v169
    %v195 = vmul.f32 %v68, %v172
    %v196 = vsub.f32 %v194, %v195
    %v197 = vxor.u32 %v55, 2147483648
    %v198 = vmul.f32 %v197, 1.442695
    %v199 = vpow.pop %v198
    %v200 = vadd.f32 %v199, 1.0
    %v201 = vrcp.pop %v200
    %v202 = vmul.f32 1.0, %v201
    %v203 = vmul.f32 %v55, %v202
    %v204 = vpack.c.bf16 %v203, %v203
    %v205 = vpack.c.bf16 %v175, %v175
    %v206 = vpack.c.bf16 %v178, %v178
    %v207 = vpack.c.bf16 %v181, %v181
    %v208 = vpack.c.bf16 %v184, %v184
    %v209 = vpack.c.bf16 %v187, %v187
    %v210 = vpack.c.bf16 %v190, %v190
    %v211 = vpack.c.bf16 %v193, %v193
    %v212 = vpack.c.bf16 %v196, %v196
    %v213 = vld [vmem:[#allocation5] sm:$0xf]
    %v214 = vld [vmem:[#allocation5 + $0x4] sm:$0xf]
    %v215 = vld [vmem:[#allocation5 + $0x8] sm:$0xf]
    %v216 = vld [vmem:[#allocation5 + $0xc] sm:$0xf]
    %v217 = vld [vmem:[#allocation5 + $0x10] sm:$0xf]
    %v218 = vld [vmem:[#allocation5 + $0x14] sm:$0xf]
    %v219 = vld [vmem:[#allocation5 + $0x18] sm:$0xf]
    %v220 = vld [vmem:[#allocation5 + $0x1c] sm:$0xf]
    %v221 = vld [vmem:[#allocation5 + $0x20] sm:$0xf]
    %v222 = vld [vmem:[#allocation5 + $0x24] sm:$0xf]
    %v223 = vld [vmem:[#allocation5 + $0x28] sm:$0xf]
    %v224 = vld [vmem:[#allocation5 + $0x2c] sm:$0xf]
    %v225 = vld [vmem:[#allocation5 + $0x30] sm:$0xf]
    %v226 = vld [vmem:[#allocation5 + $0x34] sm:$0xf]
    %v227 = vld [vmem:[#allocation5 + $0x38] sm:$0xf]
    %v228 = vld [vmem:[#allocation5 + $0x3c] sm:$0xf]
    %v229 = vld [vmem:[#allocation5 + $0x40] sm:$0xf]
    %v230 = vld [vmem:[#allocation5 + $0x44] sm:$0xf]
    %v231 = vld [vmem:[#allocation5 + $0x48] sm:$0xf]
    %v232 = vld [vmem:[#allocation5 + $0x4c] sm:$0xf]
    %v233 = vld [vmem:[#allocation5 + $0x50] sm:$0xf]
    %v234 = vld [vmem:[#allocation5 + $0x54] sm:$0xf]
    %v235 = vld [vmem:[#allocation5 + $0x58] sm:$0xf]
    %v236 = vld [vmem:[#allocation5 + $0x5c] sm:$0xf]
    %v237 = vld [vmem:[#allocation5 + $0x60] sm:$0xf]
    %v238 = vld [vmem:[#allocation5 + $0x64] sm:$0xf]
    %v239 = vld [vmem:[#allocation5 + $0x68] sm:$0xf]
    %v240 = vld [vmem:[#allocation5 + $0x6c] sm:$0xf]
    %v241 = vld [vmem:[#allocation5 + $0x70] sm:$0xf]
    %v242 = vld [vmem:[#allocation5 + $0x74] sm:$0xf]
    %v243 = vld [vmem:[#allocation5 + $0x78] sm:$0xf]
    %v244 = vld [vmem:[#allocation5 + $0x7c] sm:$0xf]
    %v245 = vld [vmem:[#allocation5 + $0x80] sm:$0xf]
    %v246 = vld [vmem:[#allocation5 + $0x84] sm:$0xf]
    %v247 = vld [vmem:[#allocation5 + $0x88] sm:$0xf]
    %v248 = vld [vmem:[#allocation5 + $0x8c] sm:$0xf]
    %v249 = vld [vmem:[#allocation5 + $0x90] sm:$0xf]
    %v250 = vld [vmem:[#allocation5 + $0x94] sm:$0xf]
    %v251 = vld [vmem:[#allocation5 + $0x98] sm:$0xf]
    %v252 = vld [vmem:[#allocation5 + $0x9c] sm:$0xf]
    %v253 = vld [vmem:[#allocation5 + $0xa0] sm:$0xf]
    %v254 = vld [vmem:[#allocation5 + $0xa4] sm:$0xf]
    %v255 = vld [vmem:[#allocation5 + $0xa8] sm:$0xf]
    %v256 = vld [vmem:[#allocation5 + $0xac] sm:$0xf]
    %v257 = vld [vmem:[#allocation5 + $0xb0] sm:$0xf]
    %v258 = vld [vmem:[#allocation5 + $0xb4] sm:$0xf]
    %v259 = vld [vmem:[#allocation5 + $0xb8] sm:$0xf]
    %v260 = vld [vmem:[#allocation5 + $0xbc] sm:$0xf]
    %v261 = vld [vmem:[#allocation5 + $0xc0] sm:$0xf]
    %v262 = vld [vmem:[#allocation5 + $0xc4] sm:$0xf]
    %v263 = vld [vmem:[#allocation5 + $0xc8] sm:$0xf]
    %v264 = vld [vmem:[#allocation5 + $0xcc] sm:$0xf]
    %v265 = vld [vmem:[#allocation5 + $0xd0] sm:$0xf]
    %v266 = vld [vmem:[#allocation5 + $0xd4] sm:$0xf]
    %v267 = vld [vmem:[#allocation5 + $0xd8] sm:$0xf]
    %v268 = vld [vmem:[#allocation5 + $0xdc] sm:$0xf]
    %v269 = vld [vmem:[#allocation5 + $0xe0] sm:$0xf]
    %v270 = vld [vmem:[#allocation5 + $0xe4] sm:$0xf]
    %v271 = vld [vmem:[#allocation5 + $0xe8] sm:$0xf]
    %v272 = vld [vmem:[#allocation5 + $0xec] sm:$0xf]
    %v273 = vld [vmem:[#allocation5 + $0xf0] sm:$0xf]
    %v274 = vld [vmem:[#allocation5 + $0xf4] sm:$0xf]
    %v275 = vld [vmem:[#allocation5 + $0xf8] sm:$0xf]
    %v276 = vld [vmem:[#allocation5 + $0xfc] sm:$0xf]
    %v277 = vld [vmem:[#allocation5 + $0x100] sm:$0xf]
    %v278 = vld [vmem:[#allocation5 + $0x104] sm:$0xf]
    %v279 = vld [vmem:[#allocation5 + $0x108] sm:$0xf]
    %v280 = vld [vmem:[#allocation5 + $0x10c] sm:$0xf]
    %v281 = vld [vmem:[#allocation5 + $0x110] sm:$0xf]
    %v282 = vld [vmem:[#allocation5 + $0x114] sm:$0xf]
    %v283 = vld [vmem:[#allocation5 + $0x118] sm:$0xf]
    %v284 = vld [vmem:[#allocation5 + $0x11c] sm:$0xf]
    %v285 = vld [vmem:[#allocation5 + $0x120] sm:$0xf]
    %v286 = vld [vmem:[#allocation5 + $0x124] sm:$0xf]
    %v287 = vld [vmem:[#allocation5 + $0x128] sm:$0xf]
    %v288 = vld [vmem:[#allocation5 + $0x12c] sm:$0xf]
    %v289 = vld [vmem:[#allocation5 + $0x130] sm:$0xf]
    %v290 = vld [vmem:[#allocation5 + $0x134] sm:$0xf]
    %v291 = vld [vmem:[#allocation5 + $0x138] sm:$0xf]
    %v292 = vld [vmem:[#allocation5 + $0x13c] sm:$0xf]
    %v293 = vld [vmem:[#allocation5 + $0x140] sm:$0xf]
    %v294 = vld [vmem:[#allocation5 + $0x144] sm:$0xf]
    %v295 = vld [vmem:[#allocation5 + $0x148] sm:$0xf]
    %v296 = vld [vmem:[#allocation5 + $0x14c] sm:$0xf]
    %v297 = vld [vmem:[#allocation5 + $0x150] sm:$0xf]
    %v298 = vld [vmem:[#allocation5 + $0x154] sm:$0xf]
    %v299 = vld [vmem:[#allocation5 + $0x158] sm:$0xf]
    %v300 = vld [vmem:[#allocation5 + $0x15c] sm:$0xf]
    %v301 = vld [vmem:[#allocation5 + $0x160] sm:$0xf]
    %v302 = vld [vmem:[#allocation5 + $0x164] sm:$0xf]
    %v303 = vld [vmem:[#allocation5 + $0x168] sm:$0xf]
    %v304 = vld [vmem:[#allocation5 + $0x16c] sm:$0xf]
    %v305 = vld [vmem:[#allocation5 + $0x170] sm:$0xf]
    %v306 = vld [vmem:[#allocation5 + $0x174] sm:$0xf]
    %v307 = vld [vmem:[#allocation5 + $0x178] sm:$0xf]
    %v308 = vld [vmem:[#allocation5 + $0x17c] sm:$0xf]
    %v309 = vld [vmem:[#allocation5 + $0x180] sm:$0xf]
    %v310 = vld [vmem:[#allocation5 + $0x184] sm:$0xf]
    %v311 = vld [vmem:[#allocation5 + $0x188] sm:$0xf]
    %v312 = vld [vmem:[#allocation5 + $0x18c] sm:$0xf]
    %v313 = vld [vmem:[#allocation5 + $0x190] sm:$0xf]
    %v314 = vld [vmem:[#allocation5 + $0x194] sm:$0xf]
    %v315 = vld [vmem:[#allocation5 + $0x198] sm:$0xf]
    %v316 = vld [vmem:[#allocation5 + $0x19c] sm:$0xf]
    %v317 = vld [vmem:[#allocation5 + $0x1a0] sm:$0xf]
    %v318 = vld [vmem:[#allocation5 + $0x1a4] sm:$0xf]
    %v319 = vld [vmem:[#allocation5 + $0x1a8] sm:$0xf]
    %v320 = vld [vmem:[#allocation5 + $0x1ac] sm:$0xf]
    %v321 = vld [vmem:[#allocation5 + $0x1b0] sm:$0xf]
    %v322 = vld [vmem:[#allocation5 + $0x1b4] sm:$0xf]
    %v323 = vld [vmem:[#allocation5 + $0x1b8] sm:$0xf]
    %v324 = vld [vmem:[#allocation5 + $0x1bc] sm:$0xf]
    %v325 = vld [vmem:[#allocation5 + $0x1c0] sm:$0xf]
    %v326 = vld [vmem:[#allocation5 + $0x1c4] sm:$0xf]
    %v327 = vld [vmem:[#allocation5 + $0x1c8] sm:$0xf]
    %v328 = vld [vmem:[#allocation5 + $0x1cc] sm:$0xf]
    %v329 = vld [vmem:[#allocation5 + $0x1d0] sm:$0xf]
    %v330 = vld [vmem:[#allocation5 + $0x1d4] sm:$0xf]
    %v331 = vld [vmem:[#allocation5 + $0x1d8] sm:$0xf]
    %v332 = vld [vmem:[#allocation5 + $0x1dc] sm:$0xf]
    %v333 = vld [vmem:[#allocation5 + $0x1e0] sm:$0xf]
    %v334 = vld [vmem:[#allocation5 + $0x1e4] sm:$0xf]
    %v335 = vld [vmem:[#allocation5 + $0x1e8] sm:$0xf]
    %v336 = vld [vmem:[#allocation5 + $0x1ec] sm:$0xf]
    %v337 = vld [vmem:[#allocation5 + $0x1f0] sm:$0xf]
    %v338 = vld [vmem:[#allocation5 + $0x1f4] sm:$0xf]
    %v339 = vld [vmem:[#allocation5 + $0x1f8] sm:$0xf]
    %v340 = vld [vmem:[#allocation5 + $0x1fc] sm:$0xf]
    %v341 = vld [vmem:[#allocation5 + $0x200] sm:$0xf]
    %v342 = vld [vmem:[#allocation5 + $0x204] sm:$0xf]
    %v343 = vld [vmem:[#allocation5 + $0x208] sm:$0xf]
    %v344 = vld [vmem:[#allocation5 + $0x20c] sm:$0xf]
    %v345 = vld [vmem:[#allocation5 + $0x210] sm:$0xf]
    %v346 = vld [vmem:[#allocation5 + $0x214] sm:$0xf]
    %v347 = vld [vmem:[#allocation5 + $0x218] sm:$0xf]
    %v348 = vld [vmem:[#allocation5 + $0x21c] sm:$0xf]
    %v349 = vld [vmem:[#allocation5 + $0x220] sm:$0xf]
    %v350 = vld [vmem:[#allocation5 + $0x224] sm:$0xf]
    %v351 = vld [vmem:[#allocation5 + $0x228] sm:$0xf]
    %v352 = vld [vmem:[#allocation5 + $0x22c] sm:$0xf]
    %v353 = vld [vmem:[#allocation5 + $0x230] sm:$0xf]
    %v354 = vld [vmem:[#allocation5 + $0x234] sm:$0xf]
    %v355 = vld [vmem:[#allocation5 + $0x238] sm:$0xf]
    %v356 = vld [vmem:[#allocation5 + $0x23c] sm:$0xf]
    %v501 = vunpack.c.l.b16 %v213
    %v502 = vunpack.c.l.b16 %v214
    %v503 = vunpack.c.l.b16 %v215
    %v504 = vunpack.c.l.b16 %v216
    %v505 = vunpack.c.l.b16 %v217
    %v506 = vunpack.c.l.b16 %v218
    %v507 = vunpack.c.l.b16 %v219
    %v508 = vunpack.c.l.b16 %v220
    %v509 = vunpack.c.l.b16 %v221
    %v510 = vunpack.c.l.b16 %v222
    %v511 = vunpack.c.l.b16 %v223
    %v512 = vunpack.c.l.b16 %v224
    %v513 = vunpack.c.l.b16 %v225
    %v514 = vunpack.c.l.b16 %v226
    %v515 = vunpack.c.l.b16 %v227
    %v516 = vunpack.c.l.b16 %v228
    %v517 = vunpack.c.l.b16 %v229
    %v518 = vunpack.c.l.b16 %v230
    %v519 = vunpack.c.l.b16 %v231
    %v520 = vunpack.c.l.b16 %v232
    %v521 = vunpack.c.l.b16 %v233
    %v522 = vunpack.c.l.b16 %v234
    %v523 = vunpack.c.l.b16 %v235
    %v524 = vunpack.c.l.b16 %v236
    %v525 = vunpack.c.l.b16 %v237
    %v526 = vunpack.c.l.b16 %v238
    %v527 = vunpack.c.l.b16 %v239
    %v528 = vunpack.c.l.b16 %v240
    %v529 = vunpack.c.l.b16 %v241
    %v530 = vunpack.c.l.b16 %v242
    %v531 = vunpack.c.l.b16 %v243
    %v532 = vunpack.c.l.b16 %v244
    %v533 = vunpack.c.l.b16 %v245
    %v534 = vunpack.c.l.b16 %v246
    %v535 = vunpack.c.l.b16 %v247
    %v536 = vunpack.c.l.b16 %v248
    %v537 = vunpack.c.l.b16 %v249
    %v538 = vunpack.c.l.b16 %v250
    %v539 = vunpack.c.l.b16 %v251
    %v540 = vunpack.c.l.b16 %v252
    %v541 = vunpack.c.l.b16 %v253
    %v542 = vunpack.c.l.b16 %v254
    %v543 = vunpack.c.l.b16 %v255
    %v544 = vunpack.c.l.b16 %v256
    %v545 = vunpack.c.l.b16 %v257
    %v546 = vunpack.c.l.b16 %v258
    %v547 = vunpack.c.l.b16 %v259
    %v548 = vunpack.c.l.b16 %v260
    %v549 = vunpack.c.l.b16 %v261
    %v550 = vunpack.c.l.b16 %v262
    %v551 = vunpack.c.l.b16 %v263
    %v552 = vunpack.c.l.b16 %v264
    %v553 = vunpack.c.l.b16 %v265
    %v554 = vunpack.c.l.b16 %v266
    %v555 = vunpack.c.l.b16 %v267
    %v556 = vunpack.c.l.b16 %v268
    %v557 = vunpack.c.l.b16 %v269
    %v558 = vunpack.c.l.b16 %v270
    %v559 = vunpack.c.l.b16 %v271
    %v560 = vunpack.c.l.b16 %v272
    %v561 = vunpack.c.l.b16 %v273
    %v562 = vunpack.c.l.b16 %v274
    %v563 = vunpack.c.l.b16 %v275
    %v564 = vunpack.c.l.b16 %v276
    %v565 = vunpack.c.l.b16 %v277
    %v566 = vunpack.c.l.b16 %v278
    %v567 = vunpack.c.l.b16 %v279
    %v568 = vunpack.c.l.b16 %v280
    %v569 = vunpack.c.l.b16 %v281
    %v570 = vunpack.c.l.b16 %v282
    %v571 = vunpack.c.l.b16 %v283
    %v572 = vunpack.c.l.b16 %v284
    %v573 = vunpack.c.l.b16 %v285
    %v574 = vunpack.c.l.b16 %v286
    %v575 = vunpack.c.l.b16 %v287
    %v576 = vunpack.c.l.b16 %v288
    %v577 = vunpack.c.l.b16 %v289
    %v578 = vunpack.c.l.b16 %v290
    %v579 = vunpack.c.l.b16 %v291
    %v580 = vunpack.c.l.b16 %v292
    %v581 = vunpack.c.l.b16 %v293
    %v582 = vunpack.c.l.b16 %v294
    %v583 = vunpack.c.l.b16 %v295
    %v584 = vunpack.c.l.b16 %v296
    %v585 = vunpack.c.l.b16 %v297
    %v586 = vunpack.c.l.b16 %v298
    %v587 = vunpack.c.l.b16 %v299
    %v588 = vunpack.c.l.b16 %v300
    %v589 = vunpack.c.l.b16 %v301
    %v590 = vunpack.c.l.b16 %v302
    %v591 = vunpack.c.l.b16 %v303
    %v592 = vunpack.c.l.b16 %v304
    %v593 = vunpack.c.l.b16 %v305
    %v594 = vunpack.c.l.b16 %v306
    %v595 = vunpack.c.l.b16 %v307
    %v596 = vunpack.c.l.b16 %v308
    %v597 = vunpack.c.l.b16 %v309
    %v598 = vunpack.c.l.b16 %v310
    %v599 = vunpack.c.l.b16 %v311
    %v600 = vunpack.c.l.b16 %v312
    %v601 = vunpack.c.l.b16 %v313
    %v602 = vunpack.c.l.b16 %v314
    %v603 = vunpack.c.l.b16 %v315
    %v604 = vunpack.c.l.b16 %v316
    %v605 = vunpack.c.l.b16 %v317
    %v606 = vunpack.c.l.b16 %v318
    %v607 = vunpack.c.l.b16 %v319
    %v608 = vunpack.c.l.b16 %v320
    %v609 = vunpack.c.l.b16 %v321
    %v610 = vunpack.c.l.b16 %v322
    %v611 = vunpack.c.l.b16 %v323
    %v612 = vunpack.c.l.b16 %v324
    %v613 = vunpack.c.l.b16 %v325
    %v614 = vunpack.c.l.b16 %v326
    %v615 = vunpack.c.l.b16 %v327
    %v616 = vunpack.c.l.b16 %v328
    %v617 = vunpack.c.l.b16 %v329
    %v618 = vunpack.c.l.b16 %v330
    %v619 = vunpack.c.l.b16 %v331
    %v620 = vunpack.c.l.b16 %v332
    %v621 = vunpack.c.l.b16 %v333
    %v622 = vunpack.c.l.b16 %v334
    %v623 = vunpack.c.l.b16 %v335
    %v624 = vunpack.c.l.b16 %v336
    %v625 = vunpack.c.l.b16 %v337
    %v626 = vunpack.c.l.b16 %v338
    %v627 = vunpack.c.l.b16 %v339
    %v628 = vunpack.c.l.b16 %v340
    %v629 = vunpack.c.l.b16 %v341
    %v630 = vunpack.c.l.b16 %v342
    %v631 = vunpack.c.l.b16 %v343
    %v632 = vunpack.c.l.b16 %v344
    %v633 = vunpack.c.l.b16 %v345
    %v634 = vunpack.c.l.b16 %v346
    %v635 = vunpack.c.l.b16 %v347
    %v636 = vunpack.c.l.b16 %v348
    %v637 = vunpack.c.l.b16 %v349
    %v638 = vunpack.c.l.b16 %v350
    %v639 = vunpack.c.l.b16 %v351
    %v640 = vunpack.c.l.b16 %v352
    %v641 = vunpack.c.l.b16 %v353
    %v642 = vunpack.c.l.b16 %v354
    %v643 = vunpack.c.l.b16 %v355
    %v644 = vunpack.c.l.b16 %v356
    %v645 = vpack.c.b16 %v502, %v501
    %v646 = vpack.c.b16 %v504, %v503
    %v647 = vpack.c.b16 %v506, %v505
    %v648 = vpack.c.b16 %v508, %v507
    %v649 = vpack.c.b16 %v510, %v509
    %v650 = vpack.c.b16 %v512, %v511
    %v651 = vpack.c.b16 %v514, %v513
    %v652 = vpack.c.b16 %v516, %v515
    %v653 = vpack.c.b16 %v518, %v517
    %v654 = vpack.c.b16 %v520, %v519
    %v655 = vpack.c.b16 %v522, %v521
    %v656 = vpack.c.b16 %v524, %v523
    %v657 = vpack.c.b16 %v526, %v525
    %v658 = vpack.c.b16 %v528, %v527
    %v659 = vpack.c.b16 %v530, %v529
    %v660 = vpack.c.b16 %v532, %v531
    %v661 = vpack.c.b16 %v534, %v533
    %v662 = vpack.c.b16 %v536, %v535
    %v663 = vpack.c.b16 %v538, %v537
    %v664 = vpack.c.b16 %v540, %v539
    %v665 = vpack.c.b16 %v542, %v541
    %v666 = vpack.c.b16 %v544, %v543
    %v667 = vpack.c.b16 %v546, %v545
    %v668 = vpack.c.b16 %v548, %v547
    %v669 = vpack.c.b16 %v550, %v549
    %v670 = vpack.c.b16 %v552, %v551
    %v671 = vpack.c.b16 %v554, %v553
    %v672 = vpack.c.b16 %v556, %v555
    %v673 = vpack.c.b16 %v558, %v557
    %v674 = vpack.c.b16 %v560, %v559
    %v675 = vpack.c.b16 %v562, %v561
    %v676 = vpack.c.b16 %v564, %v563
    %v677 = vpack.c.b16 %v566, %v565
    %v678 = vpack.c.b16 %v568, %v567
    %v679 = vpack.c.b16 %v570, %v569
    %v680 = vpack.c.b16 %v572, %v571
    %v681 = vpack.c.b16 %v574, %v573
    %v682 = vpack.c.b16 %v576, %v575
    %v683 = vpack.c.b16 %v578, %v577
    %v684 = vpack.c.b16 %v580, %v579
    %v685 = vpack.c.b16 %v582, %v581
    %v686 = vpack.c.b16 %v584, %v583
    %v687 = vpack.c.b16 %v586, %v585
    %v688 = vpack.c.b16 %v588, %v587
    %v689 = vpack.c.b16 %v590, %v589
    %v690 = vpack.c.b16 %v592, %v591
    %v691 = vpack.c.b16 %v594, %v593
    %v692 = vpack.c.b16 %v596, %v595
    %v693 = vpack.c.b16 %v598, %v597
    %v694 = vpack.c.b16 %v600, %v599
    %v695 = vpack.c.b16 %v602, %v601
    %v696 = vpack.c.b16 %v604, %v603
    %v697 = vpack.c.b16 %v606, %v605
    %v698 = vpack.c.b16 %v608, %v607
    %v699 = vpack.c.b16 %v610, %v609
    %v700 = vpack.c.b16 %v612, %v611
    %v701 = vpack.c.b16 %v614, %v613
    %v702 = vpack.c.b16 %v616, %v615
    %v703 = vpack.c.b16 %v618, %v617
    %v704 = vpack.c.b16 %v620, %v619
    %v705 = vpack.c.b16 %v622, %v621
    %v706 = vpack.c.b16 %v624, %v623
    %v707 = vpack.c.b16 %v626, %v625
    %v708 = vpack.c.b16 %v628, %v627
    %v709 = vpack.c.b16 %v630, %v629
    %v710 = vpack.c.b16 %v632, %v631
    %v711 = vpack.c.b16 %v634, %v633
    %v712 = vpack.c.b16 %v636, %v635
    %v713 = vpack.c.b16 %v638, %v637
    %v714 = vpack.c.b16 %v640, %v639
    %v715 = vpack.c.b16 %v642, %v641
    %v716 = vpack.c.b16 %v644, %v643
    %789 = vmatprep.subr.bf16.mxu0 0
    %790 = vmatpush1.bf16.msra.mxu0 %v645
    %791 = vmatprep.subr.bf16.mxu0 0
    %792 = vmatpush1.bf16.msra.mxu0 %v646
    %793 = vmatprep.subr.bf16.mxu0 0
    %794 = vmatpush1.bf16.msra.mxu0 %v647
    %795 = vmatprep.subr.bf16.mxu0 0
    %796 = vmatpush1.bf16.msra.mxu0 %v648
    %797 = vmatprep.subr.bf16.mxu0 0
    %798 = vmatpush1.bf16.msra.mxu0 %v649
    %799 = vmatprep.subr.bf16.mxu0 0
    %800 = vmatpush1.bf16.msra.mxu0 %v650
    %801 = vmatprep.subr.bf16.mxu0 0
    %802 = vmatpush1.bf16.msra.mxu0 %v651
    %803 = vmatprep.subr.bf16.mxu0 0
    %804 = vmatpush1.bf16.msra.mxu0 %v652
    %805 = vmatprep.subr.bf16.mxu0 0
    %806 = vmatpush1.bf16.msra.mxu0 %v653
    %807 = vmatprep.subr.bf16.mxu0 0
    %808 = vmatpush1.bf16.msra.mxu0 %v654
    %809 = vmatprep.subr.bf16.mxu0 0
    %810 = vmatpush1.bf16.msra.mxu0 %v655
    %811 = vmatprep.subr.bf16.mxu0 0
    %812 = vmatpush1.bf16.msra.mxu0 %v656
    %813 = vmatprep.subr.bf16.mxu0 0
    %814 = vmatpush1.bf16.msra.mxu0 %v657
    %815 = vmatprep.subr.bf16.mxu0 0
    %816 = vmatpush1.bf16.msra.mxu0 %v658
    %817 = vmatprep.subr.bf16.mxu0 0
    %818 = vmatpush1.bf16.msra.mxu0 %v659
    %819 = vmatprep.subr.bf16.mxu0 0
    %820 = vmatpush1.bf16.msra.mxu0 %v660
    %821 = vmatprep.mubr.bf16.mxu0 %v205
    %822 = vmatmul.mubr.bf16.gmra.mrb[0].mxu0 %v204
    %v823 = vpop.f32.mrb[0].mxu0
    %v824 = vadd.f32 0.0, %v823
    %v825 = vpop.f32.mrb[0].mxu0
    %v826 = vpop.f32.mrb[0].mxu0
    %v827 = vpop.f32.mrb[0].mxu0
    %828 = vdwg.mxu0
    %829 = vmatprep.subr.bf16.mxu0 0
    %830 = vmatpush1.bf16.msra.mxu0 %v661
    %831 = vmatprep.subr.bf16.mxu0 0
    %832 = vmatpush1.bf16.msra.mxu0 %v662
    %833 = vmatprep.subr.bf16.mxu0 0
    %834 = vmatpush1.bf16.msra.mxu0 %v663
    %835 = vmatprep.subr.bf16.mxu0 0
    %836 = vmatpush1.bf16.msra.mxu0 %v664
    %837 = vmatprep.subr.bf16.mxu0 0
    %838 = vmatpush1.bf16.msra.mxu0 %v665
    %839 = vmatprep.subr.bf16.mxu0 0
    %840 = vmatpush1.bf16.msra.mxu0 %v666
    %841 = vmatprep.subr.bf16.mxu0 0
    %842 = vmatpush1.bf16.msra.mxu0 %v667
    %843 = vmatprep.subr.bf16.mxu0 0
    %844 = vmatpush1.bf16.msra.mxu0 %v668
    %845 = vmatprep.subr.bf16.mxu0 0
    %846 = vmatpush1.bf16.msra.mxu0 %v669
    %847 = vmatprep.subr.bf16.mxu0 0
    %848 = vmatpush1.bf16.msra.mxu0 %v670
    %849 = vmatprep.subr.bf16.mxu0 0
    %850 = vmatpush1.bf16.msra.mxu0 %v671
    %851 = vmatprep.subr.bf16.mxu0 0
    %852 = vmatpush1.bf16.msra.mxu0 %v672
    %853 = vmatprep.subr.bf16.mxu0 0
    %854 = vmatpush1.bf16.msra.mxu0 %v673
    %855 = vmatprep.subr.bf16.mxu0 0
    %856 = vmatpush1.bf16.msra.mxu0 %v674
    %857 = vmatprep.subr.bf16.mxu0 0
    %858 = vmatpush1.bf16.msra.mxu0 %v675
    %859 = vmatprep.subr.bf16.mxu0 0
    %860 = vmatpush1.bf16.msra.mxu0 %v676
    %861 = vmatprep.mubr.bf16.mxu0 %v207
    %862 = vmatmul.mubr.bf16.gmra.mrb[0].mxu0 %v206
    %v863 = vpop.f32.mrb[0].mxu0
    %v864 = vadd.f32 %v824, %v863
    %v865 = vpop.f32.mrb[0].mxu0
    %v866 = vpop.f32.mrb[0].mxu0
    %v867 = vpop.f32.mrb[0].mxu0
    %868 = vdwg.mxu0
    %869 = vmatprep.subr.bf16.mxu0 0
    %870 = vmatpush1.bf16.msra.mxu0 %v677
    %871 = vmatprep.subr.bf16.mxu0 0
    %872 = vmatpush1.bf16.msra.mxu0 %v678
    %873 = vmatprep.subr.bf16.mxu0 0
    %874 = vmatpush1.bf16.msra.mxu0 %v679
    %875 = vmatprep.subr.bf16.mxu0 0
    %876 = vmatpush1.bf16.msra.mxu0 %v680
    %877 = vmatprep.subr.bf16.mxu0 0
    %878 = vmatpush1.bf16.msra.mxu0 %v681
    %879 = vmatprep.subr.bf16.mxu0 0
    %880 = vmatpush1.bf16.msra.mxu0 %v682
    %881 = vmatprep.subr.bf16.mxu0 0
    %882 = vmatpush1.bf16.msra.mxu0 %v683
    %883 = vmatprep.subr.bf16.mxu0 0
    %884 = vmatpush1.bf16.msra.mxu0 %v684
    %885 = vmatprep.subr.bf16.mxu0 0
    %886 = vmatpush1.bf16.msra.mxu0 %v685
    %887 = vmatprep.subr.bf16.mxu0 0
    %888 = vmatpush1.bf16.msra.mxu0 %v686
    %889 = vmatprep.subr.bf16.mxu0 0
    %890 = vmatpush1.bf16.msra.mxu0 %v687
    %891 = vmatprep.subr.bf16.mxu0 0
    %892 = vmatpush1.bf16.msra.mxu0 %v688
    %893 = vmatprep.subr.bf16.mxu0 0
    %894 = vmatpush1.bf16.msra.mxu0 %v689
    %895 = vmatprep.subr.bf16.mxu0 0
    %896 = vmatpush1.bf16.msra.mxu0 %v690
    %897 = vmatprep.subr.bf16.mxu0 0
    %898 = vmatpush1.bf16.msra.mxu0 %v691
    %899 = vmatprep.subr.bf16.mxu0 0
    %900 = vmatpush1.bf16.msra.mxu0 %v692
    %901 = vmatprep.mubr.bf16.mxu0 %v209
    %902 = vmatmul.mubr.bf16.gmra.mrb[0].mxu0 %v208
    %v903 = vpop.f32.mrb[0].mxu0
    %v904 = vadd.f32 %v864, %v903
    %v905 = vpop.f32.mrb[0].mxu0
    %v906 = vpop.f32.mrb[0].mxu0
    %v907 = vpop.f32.mrb[0].mxu0
    %908 = vdwg.mxu0
    %909 = vmatprep.subr.bf16.mxu0 0
    %910 = vmatpush1.bf16.msra.mxu0 %v693
    %911 = vmatprep.subr.bf16.mxu0 0
    %912 = vmatpush1.bf16.msra.mxu0 %v694
    %913 = vmatprep.subr.bf16.mxu0 0
    %914 = vmatpush1.bf16.msra.mxu0 %v695
    %915 = vmatprep.subr.bf16.mxu0 0
    %916 = vmatpush1.bf16.msra.mxu0 %v696
    %917 = vmatprep.subr.bf16.mxu0 0
    %918 = vmatpush1.bf16.msra.mxu0 %v697
    %919 = vmatprep.subr.bf16.mxu0 0
    %920 = vmatpush1.bf16.msra.mxu0 %v698
    %921 = vmatprep.subr.bf16.mxu0 0
    %922 = vmatpush1.bf16.msra.mxu0 %v699
    %923 = vmatprep.subr.bf16.mxu0 0
    %924 = vmatpush1.bf16.msra.mxu0 %v700
    %925 = vmatprep.subr.bf16.mxu0 0
    %926 = vmatpush1.bf16.msra.mxu0 %v701
    %927 = vmatprep.subr.bf16.mxu0 0
    %928 = vmatpush1.bf16.msra.mxu0 %v702
    %929 = vmatprep.subr.bf16.mxu0 0
    %930 = vmatpush1.bf16.msra.mxu0 %v703
    %931 = vmatprep.subr.bf16.mxu0 0
    %932 = vmatpush1.bf16.msra.mxu0 %v704
    %933 = vmatprep.subr.bf16.mxu0 0
    %934 = vmatpush1.bf16.msra.mxu0 %v705
    %935 = vmatprep.subr.bf16.mxu0 0
    %936 = vmatpush1.bf16.msra.mxu0 %v706
    %937 = vmatprep.subr.bf16.mxu0 0
    %938 = vmatpush1.bf16.msra.mxu0 %v707
    %939 = vmatprep.subr.bf16.mxu0 0
    %940 = vmatpush1.bf16.msra.mxu0 %v708
    %941 = vmatprep.mubr.bf16.mxu0 %v211
    %942 = vmatmul.mubr.bf16.gmra.mrb[0].mxu0 %v210
    %v943 = vpop.f32.mrb[0].mxu0
    %v944 = vadd.f32 %v904, %v943
    %v945 = vpop.f32.mrb[0].mxu0
    %v946 = vpop.f32.mrb[0].mxu0
    %v947 = vpop.f32.mrb[0].mxu0
    %948 = vdwg.mxu0
    %949 = vmatprep.subr.bf16.mxu0 0
    %950 = vmatpush1.bf16.msra.mxu0 %v709
    %951 = vmatprep.subr.bf16.mxu0 0
    %952 = vmatpush1.bf16.msra.mxu0 %v710
    %953 = vmatprep.subr.bf16.mxu0 0
    %954 = vmatpush1.bf16.msra.mxu0 %v711
    %955 = vmatprep.subr.bf16.mxu0 0
    %956 = vmatpush1.bf16.msra.mxu0 %v712
    %957 = vmatprep.subr.bf16.mxu0 0
    %958 = vmatpush1.bf16.msra.mxu0 %v713
    %959 = vmatprep.subr.bf16.mxu0 0
    %960 = vmatpush1.bf16.msra.mxu0 %v714
    %961 = vmatprep.subr.bf16.mxu0 0
    %962 = vmatpush1.bf16.msra.mxu0 %v715
    %963 = vmatprep.subr.bf16.mxu0 0
    %964 = vmatpush1.bf16.msra.mxu0 %v716
    %965 = vmatprep.subr.bf16.mxu0 0
    %966 = vmatpush1.bf16.msra.mxu0 0
    %967 = vmatprep.subr.bf16.mxu0 0
    %968 = vmatpush1.bf16.msra.mxu0 0
    %969 = vmatprep.subr.bf16.mxu0 0
    %970 = vmatpush1.bf16.msra.mxu0 0
    %971 = vmatprep.subr.bf16.mxu0 0
    %972 = vmatpush1.bf16.msra.mxu0 0
    %973 = vmatprep.subr.bf16.mxu0 0
    %974 = vmatpush1.bf16.msra.mxu0 0
    %975 = vmatprep.subr.bf16.mxu0 0
    %976 = vmatpush1.bf16.msra.mxu0 0
    %977 = vmatprep.subr.bf16.mxu0 0
    %978 = vmatpush1.bf16.msra.mxu0 0
    %979 = vmatprep.subr.bf16.mxu0 0
    %980 = vmatpush1.bf16.msra.mxu0 0
    %981 = vmatprep.mubr.bf16.mxu0 0
    %982 = vmatmul.mubr.bf16.gmra.mrb[0].mxu0 %v212
    %v983 = vpop.f32.mrb[0].mxu0
    %v984 = vadd.f32 %v944, %v983
    %v985 = vpop.f32.mrb[0].mxu0
    %v986 = vpop.f32.mrb[0].mxu0
    %v987 = vpop.f32.mrb[0].mxu0
    %988 = vdwg.mxu0
    %v989 = vmul.f32 %v984, 2.5
    %v990 = vsub.f32 %v989, -5.5
    %v991 = vsub.f32 %v989, -4.5
    %v992 = vsub.f32 %v989, -3.5
    %v993 = vsub.f32 %v989, -2.5
    %v994 = vsub.f32 %v989, -1.5
    %v995 = vsub.f32 %v989, -0.5
    %v996 = vsub.f32 %v989, 0.5
    %v997 = vsub.f32 %v989, 1.5
    %v998 = vsub.f32 %v989, 2.5
    %v999 = vsub.f32 %v989, 3.5
    %v1000 = vsub.f32 %v989, 4.5
    %v1001 = vsub.f32 %v989, 5.5
    %vm1002 = vcmp.ge.f32.partialorder %v990, 0.0
    %v1003 = vsel %vm1002, 1, 0
    %v1004 = vcvt.s32.f32 %v1003
    %vm1005 = vcmp.ge.f32.partialorder %v991, 0.0
    %v1006 = vsel %vm1005, 1, 0
    %v1007 = vcvt.s32.f32 %v1006
    %vm1008 = vcmp.ge.f32.partialorder %v992, 0.0
    %v1009 = vsel %vm1008, 1, 0
    %v1010 = vcvt.s32.f32 %v1009
    %vm1011 = vcmp.ge.f32.partialorder %v993, 0.0
    %v1012 = vsel %vm1011, 1, 0
    %v1013 = vcvt.s32.f32 %v1012
    %vm1014 = vcmp.ge.f32.partialorder %v994, 0.0
    %v1015 = vsel %vm1014, 1, 0
    %v1016 = vcvt.s32.f32 %v1015
    %vm1017 = vcmp.ge.f32.partialorder %v995, 0.0
    %v1018 = vsel %vm1017, 1, 0
    %v1019 = vcvt.s32.f32 %v1018
    %vm1020 = vcmp.ge.f32.partialorder %v996, 0.0
    %v1021 = vsel %vm1020, 1, 0
    %v1022 = vcvt.s32.f32 %v1021
    %vm1023 = vcmp.ge.f32.partialorder %v997, 0.0
    %v1024 = vsel %vm1023, 1, 0
    %v1025 = vcvt.s32.f32 %v1024
    %vm1026 = vcmp.ge.f32.partialorder %v998, 0.0
    %v1027 = vsel %vm1026, 1, 0
    %v1028 = vcvt.s32.f32 %v1027
    %vm1029 = vcmp.ge.f32.partialorder %v999, 0.0
    %v1030 = vsel %vm1029, 1, 0
    %v1031 = vcvt.s32.f32 %v1030
    %vm1032 = vcmp.ge.f32.partialorder %v1000, 0.0
    %v1033 = vsel %vm1032, 1, 0
    %v1034 = vcvt.s32.f32 %v1033
    %vm1035 = vcmp.ge.f32.partialorder %v1001, 0.0
    %v1036 = vsel %vm1035, 1, 0
    %v1037 = vcvt.s32.f32 %v1036
    %v1038 = vsub.f32 %v1004, %v1007
    %v1039 = vsub.f32 %v1007, %v1010
    %v1040 = vsub.f32 %v1010, %v1013
    %v1041 = vsub.f32 %v1013, %v1016
    %v1042 = vsub.f32 %v1016, %v1019
    %v1043 = vsub.f32 %v1019, %v1022
    %v1044 = vsub.f32 %v1022, %v1025
    %v1045 = vsub.f32 %v1025, %v1028
    %v1046 = vsub.f32 %v1028, %v1031
    %v1047 = vsub.f32 %v1031, %v1034
    %v1048 = vsub.f32 %v1034, %v1037
    %v1049 = vmul.f32 %v990, %v1038
    %v1050 = vmul.f32 %v992, %v1039
    %v1051 = vsub.f32 %v1049, %v1050
    %v1052 = vmul.f32 %v991, %v1039
    %v1053 = vmul.f32 %v993, %v1040
    %v1054 = vsub.f32 %v1052, %v1053
    %v1055 = vmul.f32 %v992, %v1040
    %v1056 = vmul.f32 %v994, %v1041
    %v1057 = vsub.f32 %v1055, %v1056
    %v1058 = vmul.f32 %v993, %v1041
    %v1059 = vmul.f32 %v995, %v1042
    %v1060 = vsub.f32 %v1058, %v1059
    %v1061 = vmul.f32 %v994, %v1042
    %v1062 = vmul.f32 %v996, %v1043
    %v1063 = vsub.f32 %v1061, %v1062
    %v1064 = vmul.f32 %v995, %v1043
    %v1065 = vmul.f32 %v997, %v1044
    %v1066 = vsub.f32 %v1064, %v1065
    %v1067 = vmul.f32 %v996, %v1044
    %v1068 = vmul.f32 %v998, %v1045
    %v1069 = vsub.f32 %v1067, %v1068
    %v1070 = vmul.f32 %v997, %v1045
    %v1071 = vmul.f32 %v999, %v1046
    %v1072 = vsub.f32 %v1070, %v1071
    %v1073 = vmul.f32 %v998, %v1046
    %v1074 = vmul.f32 %v1000, %v1047
    %v1075 = vsub.f32 %v1073, %v1074
    %v1076 = vmul.f32 %v999, %v1047
    %v1077 = vmul.f32 %v1001, %v1048
    %v1078 = vsub.f32 %v1076, %v1077
    %v1079 = vmul.f32 %v990, %v1051
    %v1080 = vmul.f32 %v993, %v1054
    %v1081 = vsub.f32 %v1079, %v1080
    %v1082 = vmul.f32 %v991, %v1054
    %v1083 = vmul.f32 %v994, %v1057
    %v1084 = vsub.f32 %v1082, %v1083
    %v1085 = vmul.f32 %v992, %v1057
    %v1086 = vmul.f32 %v995, %v1060
    %v1087 = vsub.f32 %v1085, %v1086
    %v1088 = vmul.f32 %v993, %v1060
    %v1089 = vmul.f32 %v996, %v1063
    %v1090 = vsub.f32 %v1088, %v1089
    %v1091 = vmul.f32 %v994, %v1063
    %v1092 = vmul.f32 %v997, %v1066
    %v1093 = vsub.f32 %v1091, %v1092
    %v1094 = vmul.f32 %v995, %v1066
    %v1095 = vmul.f32 %v998, %v1069
    %v1096 = vsub.f32 %v1094, %v1095
    %v1097 = vmul.f32 %v996, %v1069
    %v1098 = vmul.f32 %v999, %v1072
    %v1099 = vsub.f32 %v1097, %v1098
    %v1100 = vmul.f32 %v997, %v1072
    %v1101 = vmul.f32 %v1000, %v1075
    %v1102 = vsub.f32 %v1100, %v1101
    %v1103 = vmul.f32 %v998, %v1075
    %v1104 = vmul.f32 %v1001, %v1078
    %v1105 = vsub.f32 %v1103, %v1104
    %v1106 = vmul.f32 %v990, %v1081
    %v1107 = vmul.f32 %v994, %v1084
    %v1108 = vsub.f32 %v1106, %v1107
    %v1109 = vmul.f32 %v991, %v1084
    %v1110 = vmul.f32 %v995, %v1087
    %v1111 = vsub.f32 %v1109, %v1110
    %v1112 = vmul.f32 %v992, %v1087
    %v1113 = vmul.f32 %v996, %v1090
    %v1114 = vsub.f32 %v1112, %v1113
    %v1115 = vmul.f32 %v993, %v1090
    %v1116 = vmul.f32 %v997, %v1093
    %v1117 = vsub.f32 %v1115, %v1116
    %v1118 = vmul.f32 %v994, %v1093
    %v1119 = vmul.f32 %v998, %v1096
    %v1120 = vsub.f32 %v1118, %v1119
    %v1121 = vmul.f32 %v995, %v1096
    %v1122 = vmul.f32 %v999, %v1099
    %v1123 = vsub.f32 %v1121, %v1122
    %v1124 = vmul.f32 %v996, %v1099
    %v1125 = vmul.f32 %v1000, %v1102
    %v1126 = vsub.f32 %v1124, %v1125
    %v1127 = vmul.f32 %v997, %v1102
    %v1128 = vmul.f32 %v1001, %v1105
    %v1129 = vsub.f32 %v1127, %v1128
    %v1130 = vxor.u32 %v984, 2147483648
    %v1131 = vmul.f32 %v1130, 1.442695
    %v1132 = vpow.pop %v1131
    %v1133 = vadd.f32 %v1132, 1.0
    %v1134 = vrcp.pop %v1133
    %v1135 = vmul.f32 1.0, %v1134
    %v1136 = vmul.f32 %v984, %v1135
    %v1137 = vpack.c.bf16 %v1136, %v1136
    %v1138 = vpack.c.bf16 %v1108, %v1108
    %v1139 = vpack.c.bf16 %v1111, %v1111
    %v1140 = vpack.c.bf16 %v1114, %v1114
    %v1141 = vpack.c.bf16 %v1117, %v1117
    %v1142 = vpack.c.bf16 %v1120, %v1120
    %v1143 = vpack.c.bf16 %v1123, %v1123
    %v1144 = vpack.c.bf16 %v1126, %v1126
    %v1145 = vpack.c.bf16 %v1129, %v1129
    %v1146 = vld [vmem:[#allocation7] sm:$0xf]
    %v1147 = vld [vmem:[#allocation7 + $0x4] sm:$0xf]
    %v1148 = vld [vmem:[#allocation7 + $0x8] sm:$0xf]
    %v1149 = vld [vmem:[#allocation7 + $0xc] sm:$0xf]
    %v1150 = vld [vmem:[#allocation7 + $0x10] sm:$0xf]
    %v1151 = vld [vmem:[#allocation7 + $0x14] sm:$0xf]
    %v1152 = vld [vmem:[#allocation7 + $0x18] sm:$0xf]
    %v1153 = vld [vmem:[#allocation7 + $0x1c] sm:$0xf]
    %v1154 = vld [vmem:[#allocation7 + $0x20] sm:$0xf]
    %v1155 = vld [vmem:[#allocation7 + $0x24] sm:$0xf]
    %v1156 = vld [vmem:[#allocation7 + $0x28] sm:$0xf]
    %v1157 = vld [vmem:[#allocation7 + $0x2c] sm:$0xf]
    %v1158 = vld [vmem:[#allocation7 + $0x30] sm:$0xf]
    %v1159 = vld [vmem:[#allocation7 + $0x34] sm:$0xf]
    %v1160 = vld [vmem:[#allocation7 + $0x38] sm:$0xf]
    %v1161 = vld [vmem:[#allocation7 + $0x3c] sm:$0xf]
    %v1162 = vld [vmem:[#allocation7 + $0x40] sm:$0xf]
    %v1163 = vld [vmem:[#allocation7 + $0x44] sm:$0xf]
    %v1164 = vld [vmem:[#allocation7 + $0x48] sm:$0xf]
    %v1165 = vld [vmem:[#allocation7 + $0x4c] sm:$0xf]
    %v1166 = vld [vmem:[#allocation7 + $0x50] sm:$0xf]
    %v1167 = vld [vmem:[#allocation7 + $0x54] sm:$0xf]
    %v1168 = vld [vmem:[#allocation7 + $0x58] sm:$0xf]
    %v1169 = vld [vmem:[#allocation7 + $0x5c] sm:$0xf]
    %v1170 = vld [vmem:[#allocation7 + $0x60] sm:$0xf]
    %v1171 = vld [vmem:[#allocation7 + $0x64] sm:$0xf]
    %v1172 = vld [vmem:[#allocation7 + $0x68] sm:$0xf]
    %v1173 = vld [vmem:[#allocation7 + $0x6c] sm:$0xf]
    %v1174 = vld [vmem:[#allocation7 + $0x70] sm:$0xf]
    %v1175 = vld [vmem:[#allocation7 + $0x74] sm:$0xf]
    %v1176 = vld [vmem:[#allocation7 + $0x78] sm:$0xf]
    %v1177 = vld [vmem:[#allocation7 + $0x7c] sm:$0xf]
    %v1178 = vld [vmem:[#allocation7 + $0x80] sm:$0xf]
    %v1179 = vld [vmem:[#allocation7 + $0x84] sm:$0xf]
    %v1180 = vld [vmem:[#allocation7 + $0x88] sm:$0xf]
    %v1181 = vld [vmem:[#allocation7 + $0x8c] sm:$0xf]
    %v1182 = vld [vmem:[#allocation7 + $0x90] sm:$0xf]
    %v1183 = vld [vmem:[#allocation7 + $0x94] sm:$0xf]
    %v1184 = vld [vmem:[#allocation7 + $0x98] sm:$0xf]
    %v1185 = vld [vmem:[#allocation7 + $0x9c] sm:$0xf]
    %v1186 = vld [vmem:[#allocation7 + $0xa0] sm:$0xf]
    %v1187 = vld [vmem:[#allocation7 + $0xa4] sm:$0xf]
    %v1188 = vld [vmem:[#allocation7 + $0xa8] sm:$0xf]
    %v1189 = vld [vmem:[#allocation7 + $0xac] sm:$0xf]
    %v1190 = vld [vmem:[#allocation7 + $0xb0] sm:$0xf]
    %v1191 = vld [vmem:[#allocation7 + $0xb4] sm:$0xf]
    %v1192 = vld [vmem:[#allocation7 + $0xb8] sm:$0xf]
    %v1193 = vld [vmem:[#allocation7 + $0xbc] sm:$0xf]
    %v1194 = vld [vmem:[#allocation7 + $0xc0] sm:$0xf]
    %v1195 = vld [vmem:[#allocation7 + $0xc4] sm:$0xf]
    %v1196 = vld [vmem:[#allocation7 + $0xc8] sm:$0xf]
    %v1197 = vld [vmem:[#allocation7 + $0xcc] sm:$0xf]
    %v1198 = vld [vmem:[#allocation7 + $0xd0] sm:$0xf]
    %v1199 = vld [vmem:[#allocation7 + $0xd4] sm:$0xf]
    %v1200 = vld [vmem:[#allocation7 + $0xd8] sm:$0xf]
    %v1201 = vld [vmem:[#allocation7 + $0xdc] sm:$0xf]
    %v1202 = vld [vmem:[#allocation7 + $0xe0] sm:$0xf]
    %v1203 = vld [vmem:[#allocation7 + $0xe4] sm:$0xf]
    %v1204 = vld [vmem:[#allocation7 + $0xe8] sm:$0xf]
    %v1205 = vld [vmem:[#allocation7 + $0xec] sm:$0xf]
    %v1206 = vld [vmem:[#allocation7 + $0xf0] sm:$0xf]
    %v1207 = vld [vmem:[#allocation7 + $0xf4] sm:$0xf]
    %v1208 = vld [vmem:[#allocation7 + $0xf8] sm:$0xf]
    %v1209 = vld [vmem:[#allocation7 + $0xfc] sm:$0xf]
    %v1210 = vld [vmem:[#allocation7 + $0x100] sm:$0xf]
    %v1211 = vld [vmem:[#allocation7 + $0x104] sm:$0xf]
    %v1212 = vld [vmem:[#allocation7 + $0x108] sm:$0xf]
    %v1213 = vld [vmem:[#allocation7 + $0x10c] sm:$0xf]
    %v1214 = vld [vmem:[#allocation7 + $0x110] sm:$0xf]
    %v1215 = vld [vmem:[#allocation7 + $0x114] sm:$0xf]
    %v1216 = vld [vmem:[#allocation7 + $0x118] sm:$0xf]
    %v1217 = vld [vmem:[#allocation7 + $0x11c] sm:$0xf]
    %v1218 = vld [vmem:[#allocation7 + $0x120] sm:$0xf]
    %v1219 = vld [vmem:[#allocation7 + $0x124] sm:$0xf]
    %v1220 = vld [vmem:[#allocation7 + $0x128] sm:$0xf]
    %v1221 = vld [vmem:[#allocation7 + $0x12c] sm:$0xf]
    %v1222 = vld [vmem:[#allocation7 + $0x130] sm:$0xf]
    %v1223 = vld [vmem:[#allocation7 + $0x134] sm:$0xf]
    %v1224 = vld [vmem:[#allocation7 + $0x138] sm:$0xf]
    %v1225 = vld [vmem:[#allocation7 + $0x13c] sm:$0xf]
    %v1226 = vld [vmem:[#allocation7 + $0x140] sm:$0xf]
    %v1227 = vld [vmem:[#allocation7 + $0x144] sm:$0xf]
    %v1228 = vld [vmem:[#allocation7 + $0x148] sm:$0xf]
    %v1229 = vld [vmem:[#allocation7 + $0x14c] sm:$0xf]
    %v1230 = vld [vmem:[#allocation7 + $0x150] sm:$0xf]
    %v1231 = vld [vmem:[#allocation7 + $0x154] sm:$0xf]
    %v1232 = vld [vmem:[#allocation7 + $0x158] sm:$0xf]
    %v1233 = vld [vmem:[#allocation7 + $0x15c] sm:$0xf]
    %v1234 = vld [vmem:[#allocation7 + $0x160] sm:$0xf]
    %v1235 = vld [vmem:[#allocation7 + $0x164] sm:$0xf]
    %v1236 = vld [vmem:[#allocation7 + $0x168] sm:$0xf]
    %v1237 = vld [vmem:[#allocation7 + $0x16c] sm:$0xf]
    %v1238 = vld [vmem:[#allocation7 + $0x170] sm:$0xf]
    %v1239 = vld [vmem:[#allocation7 + $0x174] sm:$0xf]
    %v1240 = vld [vmem:[#allocation7 + $0x178] sm:$0xf]
    %v1241 = vld [vmem:[#allocation7 + $0x17c] sm:$0xf]
    %v1242 = vld [vmem:[#allocation7 + $0x180] sm:$0xf]
    %v1243 = vld [vmem:[#allocation7 + $0x184] sm:$0xf]
    %v1244 = vld [vmem:[#allocation7 + $0x188] sm:$0xf]
    %v1245 = vld [vmem:[#allocation7 + $0x18c] sm:$0xf]
    %v1246 = vld [vmem:[#allocation7 + $0x190] sm:$0xf]
    %v1247 = vld [vmem:[#allocation7 + $0x194] sm:$0xf]
    %v1248 = vld [vmem:[#allocation7 + $0x198] sm:$0xf]
    %v1249 = vld [vmem:[#allocation7 + $0x19c] sm:$0xf]
    %v1250 = vld [vmem:[#allocation7 + $0x1a0] sm:$0xf]
    %v1251 = vld [vmem:[#allocation7 + $0x1a4] sm:$0xf]
    %v1252 = vld [vmem:[#allocation7 + $0x1a8] sm:$0xf]
    %v1253 = vld [vmem:[#allocation7 + $0x1ac] sm:$0xf]
    %v1254 = vld [vmem:[#allocation7 + $0x1b0] sm:$0xf]
    %v1255 = vld [vmem:[#allocation7 + $0x1b4] sm:$0xf]
    %v1256 = vld [vmem:[#allocation7 + $0x1b8] sm:$0xf]
    %v1257 = vld [vmem:[#allocation7 + $0x1bc] sm:$0xf]
    %v1258 = vld [vmem:[#allocation7 + $0x1c0] sm:$0xf]
    %v1259 = vld [vmem:[#allocation7 + $0x1c4] sm:$0xf]
    %v1260 = vld [vmem:[#allocation7 + $0x1c8] sm:$0xf]
    %v1261 = vld [vmem:[#allocation7 + $0x1cc] sm:$0xf]
    %v1262 = vld [vmem:[#allocation7 + $0x1d0] sm:$0xf]
    %v1263 = vld [vmem:[#allocation7 + $0x1d4] sm:$0xf]
    %v1264 = vld [vmem:[#allocation7 + $0x1d8] sm:$0xf]
    %v1265 = vld [vmem:[#allocation7 + $0x1dc] sm:$0xf]
    %v1266 = vld [vmem:[#allocation7 + $0x1e0] sm:$0xf]
    %v1267 = vld [vmem:[#allocation7 + $0x1e4] sm:$0xf]
    %v1268 = vld [vmem:[#allocation7 + $0x1e8] sm:$0xf]
    %v1269 = vld [vmem:[#allocation7 + $0x1ec] sm:$0xf]
    %v1270 = vld [vmem:[#allocation7 + $0x1f0] sm:$0xf]
    %v1271 = vld [vmem:[#allocation7 + $0x1f4] sm:$0xf]
    %v1272 = vld [vmem:[#allocation7 + $0x1f8] sm:$0xf]
    %v1273 = vld [vmem:[#allocation7 + $0x1fc] sm:$0xf]
    %v1274 = vld [vmem:[#allocation7 + $0x200] sm:$0xf]
    %v1275 = vld [vmem:[#allocation7 + $0x204] sm:$0xf]
    %v1276 = vld [vmem:[#allocation7 + $0x208] sm:$0xf]
    %v1277 = vld [vmem:[#allocation7 + $0x20c] sm:$0xf]
    %v1278 = vld [vmem:[#allocation7 + $0x210] sm:$0xf]
    %v1279 = vld [vmem:[#allocation7 + $0x214] sm:$0xf]
    %v1280 = vld [vmem:[#allocation7 + $0x218] sm:$0xf]
    %v1281 = vld [vmem:[#allocation7 + $0x21c] sm:$0xf]
    %v1282 = vld [vmem:[#allocation7 + $0x220] sm:$0xf]
    %v1283 = vld [vmem:[#allocation7 + $0x224] sm:$0xf]
    %v1284 = vld [vmem:[#allocation7 + $0x228] sm:$0xf]
    %v1285 = vld [vmem:[#allocation7 + $0x22c] sm:$0xf]
    %v1286 = vld [vmem:[#allocation7 + $0x230] sm:$0xf]
    %v1287 = vld [vmem:[#allocation7 + $0x234] sm:$0xf]
    %v1288 = vld [vmem:[#allocation7 + $0x238] sm:$0xf]
    %v1289 = vld [vmem:[#allocation7 + $0x23c] sm:$0xf]
    %v1434 = vunpack.c.l.b16 %v1146
    %v1435 = vunpack.c.l.b16 %v1147
    %v1436 = vunpack.c.l.b16 %v1148
    %v1437 = vunpack.c.l.b16 %v1149
    %v1438 = vunpack.c.l.b16 %v1150
    %v1439 = vunpack.c.l.b16 %v1151
    %v1440 = vunpack.c.l.b16 %v1152
    %v1441 = vunpack.c.l.b16 %v1153
    %v1442 = vunpack.c.l.b16 %v1154
    %v1443 = vunpack.c.l.b16 %v1155
    %v1444 = vunpack.c.l.b16 %v1156
    %v1445 = vunpack.c.l.b16 %v1157
    %v1446 = vunpack.c.l.b16 %v1158
    %v1447 = vunpack.c.l.b16 %v1159
    %v1448 = vunpack.c.l.b16 %v1160
    %v1449 = vunpack.c.l.b16 %v1161
    %v1450 = vunpack.c.l.b16 %v1162
    %v1451 = vunpack.c.l.b16 %v1163
    %v1452 = vunpack.c.l.b16 %v1164
    %v1453 = vunpack.c.l.b16 %v1165
    %v1454 = vunpack.c.l.b16 %v1166
    %v1455 = vunpack.c.l.b16 %v1167
    %v1456 = vunpack.c.l.b16 %v1168
    %v1457 = vunpack.c.l.b16 %v1169
    %v1458 = vunpack.c.l.b16 %v1170
    %v1459 = vunpack.c.l.b16 %v1171
    %v1460 = vunpack.c.l.b16 %v1172
    %v1461 = vunpack.c.l.b16 %v1173
    %v1462 = vunpack.c.l.b16 %v1174
    %v1463 = vunpack.c.l.b16 %v1175
    %v1464 = vunpack.c.l.b16 %v1176
    %v1465 = vunpack.c.l.b16 %v1177
    %v1466 = vunpack.c.l.b16 %v1178
    %v1467 = vunpack.c.l.b16 %v1179
    %v1468 = vunpack.c.l.b16 %v1180
    %v1469 = vunpack.c.l.b16 %v1181
    %v1470 = vunpack.c.l.b16 %v1182
    %v1471 = vunpack.c.l.b16 %v1183
    %v1472 = vunpack.c.l.b16 %v1184
    %v1473 = vunpack.c.l.b16 %v1185
    %v1474 = vunpack.c.l.b16 %v1186
    %v1475 = vunpack.c.l.b16 %v1187
    %v1476 = vunpack.c.l.b16 %v1188
    %v1477 = vunpack.c.l.b16 %v1189
    %v1478 = vunpack.c.l.b16 %v1190
    %v1479 = vunpack.c.l.b16 %v1191
    %v1480 = vunpack.c.l.b16 %v1192
    %v1481 = vunpack.c.l.b16 %v1193
    %v1482 = vunpack.c.l.b16 %v1194
    %v1483 = vunpack.c.l.b16 %v1195
    %v1484 = vunpack.c.l.b16 %v1196
    %v1485 = vunpack.c.l.b16 %v1197
    %v1486 = vunpack.c.l.b16 %v1198
    %v1487 = vunpack.c.l.b16 %v1199
    %v1488 = vunpack.c.l.b16 %v1200
    %v1489 = vunpack.c.l.b16 %v1201
    %v1490 = vunpack.c.l.b16 %v1202
    %v1491 = vunpack.c.l.b16 %v1203
    %v1492 = vunpack.c.l.b16 %v1204
    %v1493 = vunpack.c.l.b16 %v1205
    %v1494 = vunpack.c.l.b16 %v1206
    %v1495 = vunpack.c.l.b16 %v1207
    %v1496 = vunpack.c.l.b16 %v1208
    %v1497 = vunpack.c.l.b16 %v1209
    %v1498 = vunpack.c.l.b16 %v1210
    %v1499 = vunpack.c.l.b16 %v1211
    %v1500 = vunpack.c.l.b16 %v1212
    %v1501 = vunpack.c.l.b16 %v1213
    %v1502 = vunpack.c.l.b16 %v1214
    %v1503 = vunpack.c.l.b16 %v1215
    %v1504 = vunpack.c.l.b16 %v1216
    %v1505 = vunpack.c.l.b16 %v1217
    %v1506 = vunpack.c.l.b16 %v1218
    %v1507 = vunpack.c.l.b16 %v1219
    %v1508 = vunpack.c.l.b16 %v1220
    %v1509 = vunpack.c.l.b16 %v1221
    %v1510 = vunpack.c.l.b16 %v1222
    %v1511 = vunpack.c.l.b16 %v1223
    %v1512 = vunpack.c.l.b16 %v1224
    %v1513 = vunpack.c.l.b16 %v1225
    %v1514 = vunpack.c.l.b16 %v1226
    %v1515 = vunpack.c.l.b16 %v1227
    %v1516 = vunpack.c.l.b16 %v1228
    %v1517 = vunpack.c.l.b16 %v1229
    %v1518 = vunpack.c.l.b16 %v1230
    %v1519 = vunpack.c.l.b16 %v1231
    %v1520 = vunpack.c.l.b16 %v1232
    %v1521 = vunpack.c.l.b16 %v1233
    %v1522 = vunpack.c.l.b16 %v1234
    %v1523 = vunpack.c.l.b16 %v1235
    %v1524 = vunpack.c.l.b16 %v1236
    %v1525 = vunpack.c.l.b16 %v1237
    %v1526 = vunpack.c.l.b16 %v1238
    %v1527 = vunpack.c.l.b16 %v1239
    %v1528 = vunpack.c.l.b16 %v1240
    %v1529 = vunpack.c.l.b16 %v1241
    %v1530 = vunpack.c.l.b16 %v1242
    %v1531 = vunpack.c.l.b16 %v1243
    %v1532 = vunpack.c.l.b16 %v1244
    %v1533 = vunpack.c.l.b16 %v1245
    %v1534 = vunpack.c.l.b16 %v1246
    %v1535 = vunpack.c.l.b16 %v1247
    %v1536 = vunpack.c.l.b16 %v1248
    %v1537 = vunpack.c.l.b16 %v1249
    %v1538 = vunpack.c.l.b16 %v1250
    %v1539 = vunpack.c.l.b16 %v1251
    %v1540 = vunpack.c.l.b16 %v1252
    %v1541 = vunpack.c.l.b16 %v1253
    %v1542 = vunpack.c.l.b16 %v1254
    %v1543 = vunpack.c.l.b16 %v1255
    %v1544 = vunpack.c.l.b16 %v1256
    %v1545 = vunpack.c.l.b16 %v1257
    %v1546 = vunpack.c.l.b16 %v1258
    %v1547 = vunpack.c.l.b16 %v1259
    %v1548 = vunpack.c.l.b16 %v1260
    %v1549 = vunpack.c.l.b16 %v1261
    %v1550 = vunpack.c.l.b16 %v1262
    %v1551 = vunpack.c.l.b16 %v1263
    %v1552 = vunpack.c.l.b16 %v1264
    %v1553 = vunpack.c.l.b16 %v1265
    %v1554 = vunpack.c.l.b16 %v1266
    %v1555 = vunpack.c.l.b16 %v1267
    %v1556 = vunpack.c.l.b16 %v1268
    %v1557 = vunpack.c.l.b16 %v1269
    %v1558 = vunpack.c.l.b16 %v1270
    %v1559 = vunpack.c.l.b16 %v1271
    %v1560 = vunpack.c.l.b16 %v1272
    %v1561 = vunpack.c.l.b16 %v1273
    %v1562 = vunpack.c.l.b16 %v1274
    %v1563 = vunpack.c.l.b16 %v1275
    %v1564 = vunpack.c.l.b16 %v1276
    %v1565 = vunpack.c.l.b16 %v1277
    %v1566 = vunpack.c.l.b16 %v1278
    %v1567 = vunpack.c.l.b16 %v1279
    %v1568 = vunpack.c.l.b16 %v1280
    %v1569 = vunpack.c.l.b16 %v1281
    %v1570 = vunpack.c.l.b16 %v1282
    %v1571 = vunpack.c.l.b16 %v1283
    %v1572 = vunpack.c.l.b16 %v1284
    %v1573 = vunpack.c.l.b16 %v1285
    %v1574 = vunpack.c.l.b16 %v1286
    %v1575 = vunpack.c.l.b16 %v1287
    %v1576 = vunpack.c.l.b16 %v1288
    %v1577 = vunpack.c.l.b16 %v1289
    %v1578 = vpack.c.b16 %v1435, %v1434
    %v1579 = vpack.c.b16 %v1437, %v1436
    %v1580 = vpack.c.b16 %v1439, %v1438
    %v1581 = vpack.c.b16 %v1441, %v1440
    %v1582 = vpack.c.b16 %v1443, %v1442
    %v1583 = vpack.c.b16 %v1445, %v1444
    %v1584 = vpack.c.b16 %v1447, %v1446
    %v1585 = vpack.c.b16 %v1449, %v1448
    %v1586 = vpack.c.b16 %v1451, %v1450
    %v1587 = vpack.c.b16 %v1453, %v1452
    %v1588 = vpack.c.b16 %v1455, %v1454
    %v1589 = vpack.c.b16 %v1457, %v1456
    %v1590 = vpack.c.b16 %v1459, %v1458
    %v1591 = vpack.c.b16 %v1461, %v1460
    %v1592 = vpack.c.b16 %v1463, %v1462
    %v1593 = vpack.c.b16 %v1465, %v1464
    %v1594 = vpack.c.b16 %v1467, %v1466
    %v1595 = vpack.c.b16 %v1469, %v1468
    %v1596 = vpack.c.b16 %v1471, %v1470
    %v1597 = vpack.c.b16 %v1473, %v1472
    %v1598 = vpack.c.b16 %v1475, %v1474
    %v1599 = vpack.c.b16 %v1477, %v1476
    %v1600 = vpack.c.b16 %v1479, %v1478
    %v1601 = vpack.c.b16 %v1481, %v1480
    %v1602 = vpack.c.b16 %v1483, %v1482
    %v1603 = vpack.c.b16 %v1485, %v1484
    %v1604 = vpack.c.b16 %v1487, %v1486
    %v1605 = vpack.c.b16 %v1489, %v1488
    %v1606 = vpack.c.b16 %v1491, %v1490
    %v1607 = vpack.c.b16 %v1493, %v1492
    %v1608 = vpack.c.b16 %v1495, %v1494
    %v1609 = vpack.c.b16 %v1497, %v1496
    %v1610 = vpack.c.b16 %v1499, %v1498
    %v1611 = vpack.c.b16 %v1501, %v1500
    %v1612 = vpack.c.b16 %v1503, %v1502
    %v1613 = vpack.c.b16 %v1505, %v1504
    %v1614 = vpack.c.b16 %v1507, %v1506
    %v1615 = vpack.c.b16 %v1509, %v1508
    %v1616 = vpack.c.b16 %v1511, %v1510
    %v1617 = vpack.c.b16 %v1513, %v1512
    %v1618 = vpack.c.b16 %v1515, %v1514
    %v1619 = vpack.c.b16 %v1517, %v1516
    %v1620 = vpack.c.b16 %v1519, %v1518
    %v1621 = vpack.c.b16 %v1521, %v1520
    %v1622 = vpack.c.b16 %v1523, %v1522
    %v1623 = vpack.c.b16 %v1525, %v1524
    %v1624 = vpack.c.b16 %v1527, %v1526
    %v1625 = vpack.c.b16 %v1529, %v1528
    %v1626 = vpack.c.b16 %v1531, %v1530
    %v1627 = vpack.c.b16 %v1533, %v1532
    %v1628 = vpack.c.b16 %v1535, %v1534
    %v1629 = vpack.c.b16 %v1537, %v1536
    %v1630 = vpack.c.b16 %v1539, %v1538
    %v1631 = vpack.c.b16 %v1541, %v1540
    %v1632 = vpack.c.b16 %v1543, %v1542
    %v1633 = vpack.c.b16 %v1545, %v1544
    %v1634 = vpack.c.b16 %v1547, %v1546
    %v1635 = vpack.c.b16 %v1549, %v1548
    %v1636 = vpack.c.b16 %v1551, %v1550
    %v1637 = vpack.c.b16 %v1553, %v1552
    %v1638 = vpack.c.b16 %v1555, %v1554
    %v1639 = vpack.c.b16 %v1557, %v1556
    %v1640 = vpack.c.b16 %v1559, %v1558
    %v1641 = vpack.c.b16 %v1561, %v1560
    %v1642 = vpack.c.b16 %v1563, %v1562
    %v1643 = vpack.c.b16 %v1565, %v1564
    %v1644 = vpack.c.b16 %v1567, %v1566
    %v1645 = vpack.c.b16 %v1569, %v1568
    %v1646 = vpack.c.b16 %v1571, %v1570
    %v1647 = vpack.c.b16 %v1573, %v1572
    %v1648 = vpack.c.b16 %v1575, %v1574
    %v1649 = vpack.c.b16 %v1577, %v1576
    %1722 = vmatprep.subr.bf16.mxu0 0
    %1723 = vmatpush1.bf16.msra.mxu0 %v1578
    %1724 = vmatprep.subr.bf16.mxu0 0
    %1725 = vmatpush1.bf16.msra.mxu0 %v1579
    %1726 = vmatprep.subr.bf16.mxu0 0
    %1727 = vmatpush1.bf16.msra.mxu0 %v1580
    %1728 = vmatprep.subr.bf16.mxu0 0
    %1729 = vmatpush1.bf16.msra.mxu0 %v1581
    %1730 = vmatprep.subr.bf16.mxu0 0
    %1731 = vmatpush1.bf16.msra.mxu0 %v1582
    %1732 = vmatprep.subr.bf16.mxu0 0
    %1733 = vmatpush1.bf16.msra.mxu0 %v1583
    %1734 = vmatprep.subr.bf16.mxu0 0
    %1735 = vmatpush1.bf16.msra.mxu0 %v1584
    %1736 = vmatprep.subr.bf16.mxu0 0
    %1737 = vmatpush1.bf16.msra.mxu0 %v1585
    %1738 = vmatprep.subr.bf16.mxu0 0
    %1739 = vmatpush1.bf16.msra.mxu0 %v1586
    %1740 = vmatprep.subr.bf16.mxu0 0
    %1741 = vmatpush1.bf16.msra.mxu0 %v1587
    %1742 = vmatprep.subr.bf16.mxu0 0
    %1743 = vmatpush1.bf16.msra.mxu0 %v1588
    %1744 = vmatprep.subr.bf16.mxu0 0
    %1745 = vmatpush1.bf16.msra.mxu0 %v1589
    %1746 = vmatprep.subr.bf16.mxu0 0
    %1747 = vmatpush1.bf16.msra.mxu0 %v1590
    %1748 = vmatprep.subr.bf16.mxu0 0
    %1749 = vmatpush1.bf16.msra.mxu0 %v1591
    %1750 = vmatprep.subr.bf16.mxu0 0
    %1751 = vmatpush1.bf16.msra.mxu0 %v1592
    %1752 = vmatprep.subr.bf16.mxu0 0
    %1753 = vmatpush1.bf16.msra.mxu0 %v1593
    %1754 = vmatprep.mubr.bf16.mxu0 %v1138
    %1755 = vmatmul.mubr.bf16.gmra.mrb[0].mxu0 %v1137
    %v1756 = vpop.f32.mrb[0].mxu0
    %v1757 = vadd.f32 0.0, %v1756
    %v1758 = vpop.f32.mrb[0].mxu0
    %v1759 = vpop.f32.mrb[0].mxu0
    %v1760 = vpop.f32.mrb[0].mxu0
    %1761 = vdwg.mxu0
    %1762 = vmatprep.subr.bf16.mxu0 0
    %1763 = vmatpush1.bf16.msra.mxu0 %v1594
    %1764 = vmatprep.subr.bf16.mxu0 0
    %1765 = vmatpush1.bf16.msra.mxu0 %v1595
    %1766 = vmatprep.subr.bf16.mxu0 0
    %1767 = vmatpush1.bf16.msra.mxu0 %v1596
    %1768 = vmatprep.subr.bf16.mxu0 0
    %1769 = vmatpush1.bf16.msra.mxu0 %v1597
    %1770 = vmatprep.subr.bf16.mxu0 0
    %1771 = vmatpush1.bf16.msra.mxu0 %v1598
    %1772 = vmatprep.subr.bf16.mxu0 0
    %1773 = vmatpush1.bf16.msra.mxu0 %v1599
    %1774 = vmatprep.subr.bf16.mxu0 0
    %1775 = vmatpush1.bf16.msra.mxu0 %v1600
    %1776 = vmatprep.subr.bf16.mxu0 0
    %1777 = vmatpush1.bf16.msra.mxu0 %v1601
    %1778 = vmatprep.subr.bf16.mxu0 0
    %1779 = vmatpush1.bf16.msra.mxu0 %v1602
    %1780 = vmatprep.subr.bf16.mxu0 0
    %1781 = vmatpush1.bf16.msra.mxu0 %v1603
    %1782 = vmatprep.subr.bf16.mxu0 0
    %1783 = vmatpush1.bf16.msra.mxu0 %v1604
    %1784 = vmatprep.subr.bf16.mxu0 0
    %1785 = vmatpush1.bf16.msra.mxu0 %v1605
    %1786 = vmatprep.subr.bf16.mxu0 0
    %1787 = vmatpush1.bf16.msra.mxu0 %v1606
    %1788 = vmatprep.subr.bf16.mxu0 0
    %1789 = vmatpush1.bf16.msra.mxu0 %v1607
    %1790 = vmatprep.subr.bf16.mxu0 0
    %1791 = vmatpush1.bf16.msra.mxu0 %v1608
    %1792 = vmatprep.subr.bf16.mxu0 0
    %1793 = vmatpush1.bf16.msra.mxu0 %v1609
    %1794 = vmatprep.mubr.bf16.mxu0 %v1140
    %1795 = vmatmul.mubr.bf16.gmra.mrb[0].mxu0 %v1139
    %v1796 = vpop.f32.mrb[0].mxu0
    %v1797 = vadd.f32 %v1757, %v1796
    %v1798 = vpop.f32.mrb[0].mxu0
    %v1799 = vpop.f32.mrb[0].mxu0
    %v1800 = vpop.f32.mrb[0].mxu0
    %1801 = vdwg.mxu0
    %1802 = vmatprep.subr.bf16.mxu0 0
    %1803 = vmatpush1.bf16.msra.mxu0 %v1610
    %1804 = vmatprep.subr.bf16.mxu0 0
    %1805 = vmatpush1.bf16.msra.mxu0 %v1611
    %1806 = vmatprep.subr.bf16.mxu0 0
    %1807 = vmatpush1.bf16.msra.mxu0 %v1612
    %1808 = vmatprep.subr.bf16.mxu0 0
    %1809 = vmatpush1.bf16.msra.mxu0 %v1613
    %1810 = vmatprep.subr.bf16.mxu0 0
    %1811 = vmatpush1.bf16.msra.mxu0 %v1614
    %1812 = vmatprep.subr.bf16.mxu0 0
    %1813 = vmatpush1.bf16.msra.mxu0 %v1615
    %1814 = vmatprep.subr.bf16.mxu0 0
    %1815 = vmatpush1.bf16.msra.mxu0 %v1616
    %1816 = vmatprep.subr.bf16.mxu0 0
    %1817 = vmatpush1.bf16.msra.mxu0 %v1617
    %1818 = vmatprep.subr.bf16.mxu0 0
    %1819 = vmatpush1.bf16.msra.mxu0 %v1618
    %1820 = vmatprep.subr.bf16.mxu0 0
    %1821 = vmatpush1.bf16.msra.mxu0 %v1619
    %1822 = vmatprep.subr.bf16.mxu0 0
    %1823 = vmatpush1.bf16.msra.mxu0 %v1620
    %1824 = vmatprep.subr.bf16.mxu0 0
    %1825 = vmatpush1.bf16.msra.mxu0 %v1621
    %1826 = vmatprep.subr.bf16.mxu0 0
    %1827 = vmatpush1.bf16.msra.mxu0 %v1622
    %1828 = vmatprep.subr.bf16.mxu0 0
    %1829 = vmatpush1.bf16.msra.mxu0 %v1623
    %1830 = vmatprep.subr.bf16.mxu0 0
    %1831 = vmatpush1.bf16.msra.mxu0 %v1624
    %1832 = vmatprep.subr.bf16.mxu0 0
    %1833 = vmatpush1.bf16.msra.mxu0 %v1625
    %1834 = vmatprep.mubr.bf16.mxu0 %v1142
    %1835 = vmatmul.mubr.bf16.gmra.mrb[0].mxu0 %v1141
    %v1836 = vpop.f32.mrb[0].mxu0
    %v1837 = vadd.f32 %v1797, %v1836
    %v1838 = vpop.f32.mrb[0].mxu0
    %v1839 = vpop.f32.mrb[0].mxu0
    %v1840 = vpop.f32.mrb[0].mxu0
    %1841 = vdwg.mxu0
    %1842 = vmatprep.subr.bf16.mxu0 0
    %1843 = vmatpush1.bf16.msra.mxu0 %v1626
    %1844 = vmatprep.subr.bf16.mxu0 0
    %1845 = vmatpush1.bf16.msra.mxu0 %v1627
    %1846 = vmatprep.subr.bf16.mxu0 0
    %1847 = vmatpush1.bf16.msra.mxu0 %v1628
    %1848 = vmatprep.subr.bf16.mxu0 0
    %1849 = vmatpush1.bf16.msra.mxu0 %v1629
    %1850 = vmatprep.subr.bf16.mxu0 0
    %1851 = vmatpush1.bf16.msra.mxu0 %v1630
    %1852 = vmatprep.subr.bf16.mxu0 0
    %1853 = vmatpush1.bf16.msra.mxu0 %v1631
    %1854 = vmatprep.subr.bf16.mxu0 0
    %1855 = vmatpush1.bf16.msra.mxu0 %v1632
    %1856 = vmatprep.subr.bf16.mxu0 0
    %1857 = vmatpush1.bf16.msra.mxu0 %v1633
    %1858 = vmatprep.subr.bf16.mxu0 0
    %1859 = vmatpush1.bf16.msra.mxu0 %v1634
    %1860 = vmatprep.subr.bf16.mxu0 0
    %1861 = vmatpush1.bf16.msra.mxu0 %v1635
    %1862 = vmatprep.subr.bf16.mxu0 0
    %1863 = vmatpush1.bf16.msra.mxu0 %v1636
    %1864 = vmatprep.subr.bf16.mxu0 0
    %1865 = vmatpush1.bf16.msra.mxu0 %v1637
    %1866 = vmatprep.subr.bf16.mxu0 0
    %1867 = vmatpush1.bf16.msra.mxu0 %v1638
    %1868 = vmatprep.subr.bf16.mxu0 0
    %1869 = vmatpush1.bf16.msra.mxu0 %v1639
    %1870 = vmatprep.subr.bf16.mxu0 0
    %1871 = vmatpush1.bf16.msra.mxu0 %v1640
    %1872 = vmatprep.subr.bf16.mxu0 0
    %1873 = vmatpush1.bf16.msra.mxu0 %v1641
    %1874 = vmatprep.mubr.bf16.mxu0 %v1144
    %1875 = vmatmul.mubr.bf16.gmra.mrb[0].mxu0 %v1143
    %v1876 = vpop.f32.mrb[0].mxu0
    %v1877 = vadd.f32 %v1837, %v1876
    %v1878 = vpop.f32.mrb[0].mxu0
    %v1879 = vpop.f32.mrb[0].mxu0
    %v1880 = vpop.f32.mrb[0].mxu0
    %1881 = vdwg.mxu0
    %1882 = vmatprep.subr.bf16.mxu0 0
    %1883 = vmatpush1.bf16.msra.mxu0 %v1642
    %1884 = vmatprep.subr.bf16.mxu0 0
    %1885 = vmatpush1.bf16.msra.mxu0 %v1643
    %1886 = vmatprep.subr.bf16.mxu0 0
    %1887 = vmatpush1.bf16.msra.mxu0 %v1644
    %1888 = vmatprep.subr.bf16.mxu0 0
    %1889 = vmatpush1.bf16.msra.mxu0 %v1645
    %1890 = vmatprep.subr.bf16.mxu0 0
    %1891 = vmatpush1.bf16.msra.mxu0 %v1646
    %1892 = vmatprep.subr.bf16.mxu0 0
    %1893 = vmatpush1.bf16.msra.mxu0 %v1647
    %1894 = vmatprep.subr.bf16.mxu0 0
    %1895 = vmatpush1.bf16.msra.mxu0 %v1648
    %1896 = vmatprep.subr.bf16.mxu0 0
    %1897 = vmatpush1.bf16.msra.mxu0 %v1649
    %1898 = vmatprep.subr.bf16.mxu0 0
    %1899 = vmatpush1.bf16.msra.mxu0 0
    %1900 = vmatprep.subr.bf16.mxu0 0
    %1901 = vmatpush1.bf16.msra.mxu0 0
    %1902 = vmatprep.subr.bf16.mxu0 0
    %1903 = vmatpush1.bf16.msra.mxu0 0
    %1904 = vmatprep.subr.bf16.mxu0 0
    %1905 = vmatpush1.bf16.msra.mxu0 0
    %1906 = vmatprep.subr.bf16.mxu0 0
    %1907 = vmatpush1.bf16.msra.mxu0 0
    %1908 = vmatprep.subr.bf16.mxu0 0
    %1909 = vmatpush1.bf16.msra.mxu0 0
    %1910 = vmatprep.subr.bf16.mxu0 0
    %1911 = vmatpush1.bf16.msra.mxu0 0
    %1912 = vmatprep.subr.bf16.mxu0 0
    %1913 = vmatpush1.bf16.msra.mxu0 0
    %1914 = vmatprep.mubr.bf16.mxu0 0
    %1915 = vmatmul.mubr.bf16.gmra.mrb[0].mxu0 %v1145
    %v1916 = vpop.f32.mrb[0].mxu0
    %v1917 = vadd.f32 %v1877, %v1916
    %v1918 = vpop.f32.mrb[0].mxu0
    %v1919 = vpop.f32.mrb[0].mxu0
    %v1920 = vpop.f32.mrb[0].mxu0
    %1921 = vdwg.mxu0
    %1922 = vst [vmem:[#allocation8] sm:$0xff] %v1917
    // Predicated region
    $region26: #{tpu_custom_call.1} parent=1 // pred_check
      _
    $region27: #{tpu_custom_call.1} parent=1 // pred_check_branch
      %1924 = sbr.rel (0) target = $region29
    $region28: #{tpu_custom_call.1} parent=1 // pred_region
      %s1926 = ssub.s32 128, 128
      %1927 = vsyncadd [#allocation4], %s1926
      %s1929 = sshll.u32 [#allocation8], 4
      %s1930 = int_to_ptr.vmem [resolvable:$true] %s1929
      %1932 = dma.vmem_to_hbm [thread:$0]  %s1930, 128, %s3, [#allocation4]
    $region29: #{tpu_custom_call.1} parent=1 // pred_fallthru
      _
    // Predicated region
    $region30: #{tpu_custom_call.1} parent=1 // pred_check
      _
    $region31: #{tpu_custom_call.1} parent=1 // pred_check_branch
      %1934 = sbr.rel (0) target = $region33
    $region32: #{tpu_custom_call.1} parent=1 // pred_region
      %1935 = dma.done [#allocation4], 128
    $region33: #{tpu_custom_call.1} parent=1 // pred_fallthru
      _
    %1936 = vsyncpa [#allocation3], 1
    %1937 = vsyncpa [#allocation6], 1
    %1938 = vsyncpa [#allocation4], 1

</llo_original>
